<compile_context>
chip_gen: v7x
topology: tpu7x:2x2x1
jax: 0.10.0
libtpu: 0.0.40
codegen_flags: <defaults>
</compile_context>

<pallas_src>
import numpy as np
import jax
import jax.numpy as jnp
from jax import lax
from jax.experimental import pallas as pl
from jax.experimental.pallas import tpu as pltpu

BN_EPS = 1e-5


# ----------------------------- Pallas head kernel -----------------------------

def _head_kernel(x_mid_ref, x_top_ref, x_bot_ref,
                 p_mid_ref, p_top_ref, p_bot_ref,
                 w3_ref, scale_ref, shift_ref, w1_ref, b1_ref,
                 o_ref, band_ref, col_ref):
    """Fused 3x3 conv (im2col, one matmul) + BN + ReLU + final 1x1 conv for one
    (batch, row-band) tile."""
    i = pl.program_id(1)
    n_bands = pl.num_programs(1)

    tile_h = x_mid_ref.shape[1]
    W = x_mid_ref.shape[2]
    C = x_mid_ref.shape[3]
    G = 2 * C                    # per-tap feature width: [x group | pyramid group]
    M = tile_h * W               # matmul rows (output pixels of this band)
    cdt = band_ref.dtype

    # Halo rows loaded via clamped BlockSpecs are zeroed at the image boundary
    # (3x3 conv 'SAME' zero padding in H).
    top_m = jnp.where(i == 0, 0.0, 1.0).astype(cdt)
    bot_m = jnp.where(i == n_bands - 1, 0.0, 1.0).astype(cdt)

    # ---- Stage the row band (+ 1-row halo) as a flat (rows*W, 2C) strip. ----
    # band_ref[f + 1, :] holds padded-band flat position f; rows 0 and -1 are
    # guard rows that absorb the w=-1 / w=W reads of the corner taps.
    zrow = jnp.zeros((1, G), cdt)
    band_ref[0:1, :] = zrow
    band_ref[(tile_h + 2) * W + 1:(tile_h + 2) * W + 2, :] = zrow

    band_ref[1:W + 1, 0:C] = x_top_ref[...].reshape(W, C) * top_m
    band_ref[1:W + 1, C:G] = p_top_ref[...].reshape(W, C) * top_m
    band_ref[W + 1:(tile_h + 1) * W + 1, 0:C] = x_mid_ref[...].reshape(M, C)
    band_ref[W + 1:(tile_h + 1) * W + 1, C:G] = p_mid_ref[...].reshape(M, C)
    band_ref[(tile_h + 1) * W + 1:(tile_h + 2) * W + 1, 0:C] = (
        x_bot_ref[...].reshape(W, C) * bot_m)
    band_ref[(tile_h + 1) * W + 1:(tile_h + 2) * W + 1, C:G] = (
        p_bot_ref[...].reshape(W, C) * bot_m)

    # Left/right conv zero-padding masks along W (columns w==0 / w==W-1).
    w_idx = lax.broadcasted_iota(jnp.int32, (M, 1), 0) % W
    mask_l = (w_idx != 0).astype(cdt)
    mask_r = (w_idx != W - 1).astype(cdt)

    # ---- im2col: each 3x3 tap is a contiguous slice of the flat strip. ------
    for dy in range(3):
        for dx in range(3):
            t = dy * 3 + dx
            patch = band_ref[dy * W + dx: dy * W + dx + M, :]
            if dx == 0:
                patch = patch * mask_l
            elif dx == 2:
                patch = patch * mask_r
            col_ref[:, t * G:(t + 1) * G] = patch

    # ---- One MXU matmul for the whole 3x3 conv (K = 9*2C), f32 accumulation.
    conv = jnp.dot(col_ref[...], w3_ref[...], preferred_element_type=jnp.float32)

    # Folded BN + ReLU epilogue in f32 (v5e has no bf16 VPU).
    y = jnp.maximum(conv * scale_ref[...] + shift_ref[...], 0.0)

    # Final 1x1 conv (+bias). Classes kept unpadded -> minimal HBM writeback.
    out = jnp.dot(y.astype(w1_ref.dtype), w1_ref[...],
                  preferred_element_type=jnp.float32) + b1_ref[...]
    o_ref[...] = out.reshape(1, tile_h, W, -1).astype(o_ref.dtype)


# ------------------------------ JAX glue --------------------------------------

def adaptive_pool_matrix(in_size, out_size):
    # Exact PyTorch AdaptiveAvgPool2d binning: start=floor(i*L/s), end=ceil((i+1)*L/s)
    P = np.zeros((out_size, in_size), dtype=np.float32)
    for i in range(out_size):
        start = (i * in_size) // out_size
        end = int(np.ceil((i + 1) * in_size / out_size))
        P[i, start:end] = 1.0 / (end - start)
    return jnp.asarray(P)


def bilinear_matrix(out_size, in_size):
    # F.interpolate(mode='bilinear', align_corners=True) as a dense (out, in) matrix.
    U = np.zeros((out_size, in_size), dtype=np.float32)
    if in_size == 1 or out_size == 1:
        U[:, 0] = 1.0
        return jnp.asarray(U)
    for o in range(out_size):
        src = o * (in_size - 1) / (out_size - 1)
        i0 = min(int(np.floor(src)), in_size - 2)
        frac = src - i0
        U[o, i0] += 1.0 - frac
        U[o, i0 + 1] += frac
    return jnp.asarray(U)


def fold_bn(gamma, beta, mean, var, eps=BN_EPS):
    scale = gamma / jnp.sqrt(var + eps)
    shift = beta - mean * scale
    return scale, shift


def _pyramid_features(x, params):
    """4 pyramid branches in plain JAX (tiny matrices; XLA fuses them).
    Returns (N, H, W, C_in) = concat of the 4 upsampled branch outputs."""
    N, H, W, C_in = x.shape
    ups = []
    for s, (w, scale, shift) in zip((1, 2, 3, 6), params["branches"]):
        Ph = adaptive_pool_matrix(H, s)
        Pw = adaptive_pool_matrix(W, s)
        pooled = jnp.einsum("ah,bw,nhwc->nabc", Ph, Pw, x)          # adaptive avg pool
        y = jnp.maximum(jnp.einsum("nabc,cd->nabd", pooled, w) * scale + shift, 0.0)
        Uh = bilinear_matrix(H, s)
        Uw = bilinear_matrix(W, s)
        ups.append(jnp.einsum("ha,wb,nabc->nhwc", Uh, Uw, y))       # bilinear upsample
    return jnp.concatenate(ups, axis=-1)


def psp_head_forward(x_nchw, params, *, tile_h=None, compute_dtype=jnp.float32):
    """PSPHead forward. x_nchw: (N, C_in, H, W) -> (N, num_classes, H, W).

    compute_dtype=jnp.bfloat16 halves MXU time / weight VMEM / HBM traffic on
    v6e/v7x (accumulation and BN/ReLU epilogue stay f32); the demo uses f32 to
    keep a tight tolerance against the f32 reference.
    """
    x = jnp.transpose(x_nchw, (0, 2, 3, 1))                         # NHWC
    N, H, W, C_in = x.shape
    num_classes = params["w1"].shape[1]
    Cm = params["w3"].shape[3]

    # Pyramid features (NOT concatenated with x -- the head kernel takes x and
    # the pyramid group separately, so the (N,H,W,2*C_in) concat never hits HBM).
    pyr = _pyramid_features(x, params)

    # Row-band height: aim for tile_h*W >= 256 rows of MXU work per grid step.
    if tile_h is None:
        tile_h = max(8, -(-256 // W))
    tile_h = max(1, min(tile_h, H))
    while H % tile_h:
        tile_h -= 1
    # TODO(synk): for awkward H use pl.cdiv + a masked remainder band instead of
    # the divisor fallback (perf cliff for prime-ish H, not a correctness issue).
    n_bands = H // tile_h

    # 3x3 weights reshaped for the im2col matmul: K order = (dy, dx, cin) with
    # cin = [x channels | pyramid channels] (matches torch.cat((x, f1..f4))).
    w3r = params["w3"].reshape(9 * 2 * C_in, Cm).astype(compute_dtype)
    w1 = params["w1"].astype(compute_dtype)

    xc = x.astype(compute_dtype)
    pc = pyr.astype(compute_dtype)

    # BlockSpecs: main row-band block + single-row halo blocks (clamped at the
    # image boundary; the kernel zero-masks them there).
    def mid_spec():
        return pl.BlockSpec((1, tile_h, W, C_in), lambda n, i: (n, i, 0, 0))

    def top_spec():
        return pl.BlockSpec((1, 1, W, C_in),
                            lambda n, i: (n, jnp.maximum(i * tile_h - 1, 0), 0, 0))

    def bot_spec():
        return pl.BlockSpec((1, 1, W, C_in),
                            lambda n, i: (n, jnp.minimum((i + 1) * tile_h, H - 1), 0, 0))

    # TODO(synk): at production channel counts add an inner "arbitrary" K grid
    # axis (stream w3r in C-chunks into a f32 VMEM accumulator) and single-buffer
    # the grid-invariant weight specs (pl.Buffered(1)) for v7x's 64 MiB VMEM.
    out = pl.pallas_call(
        _head_kernel,
        out_shape=jax.ShapeDtypeStruct((N, H, W, num_classes), jnp.float32),
        grid=(N, n_bands),
        in_specs=[
            mid_spec(), top_spec(), bot_spec(),          # x group
            mid_spec(), top_spec(), bot_spec(),          # pyramid group
            pl.BlockSpec((9 * 2 * C_in, Cm), lambda n, i: (0, 0)),   # w3 (im2col)
            pl.BlockSpec((1, Cm), lambda n, i: (0, 0)),              # BN scale
            pl.BlockSpec((1, Cm), lambda n, i: (0, 0)),              # BN shift
            pl.BlockSpec((Cm, num_classes), lambda n, i: (0, 0)),    # w1
            pl.BlockSpec((1, num_classes), lambda n, i: (0, 0)),     # b1
        ],
        out_specs=pl.BlockSpec((1, tile_h, W, num_classes),
                               lambda n, i: (n, i, 0, 0)),
        scratch_shapes=[
            # Flat band strip (+2 guard rows) holding both channel groups.
            pltpu.VMEM(((tile_h + 2) * W + 2, 2 * C_in), compute_dtype),
            # im2col buffer: (pixels, 9 taps * 2C features).
            pltpu.VMEM((tile_h * W, 9 * 2 * C_in), compute_dtype),
        ],
        compiler_params=pltpu.CompilerParams(
            dimension_semantics=("parallel", "parallel"),
            vmem_limit_bytes=48 * 1024 * 1024),
    )(xc, xc, xc, pc, pc, pc, w3r,
      params["scale3"], params["shift3"], w1, params["b1"])

    # TODO(synk): Dropout2d(0.1) is identity in eval mode; training-mode channel
    # dropout not implemented.
    return jnp.transpose(out, (0, 3, 1, 2))                          # back to NCHW


def psp_head_reference(x_nchw, params):
    """Pure-JAX reference (no Pallas) for correctness check."""
    x = jnp.transpose(x_nchw, (0, 2, 3, 1))
    x_cat = jnp.concatenate([x, _pyramid_features(x, params)], axis=-1)
    conv3 = lax.conv_general_dilated(x_cat, params["w3"], (1, 1), "SAME",
                                     dimension_numbers=("NHWC", "HWIO", "NHWC"))
    y = jnp.maximum(conv3 * params["scale3"] + params["shift3"], 0.0)
    out = jnp.einsum("nhwc,cd->nhwd", y, params["w1"]) + params["b1"]
    return jnp.transpose(out, (0, 3, 1, 2))


def make_params(key, C_in, num_classes):
    C4 = C_in // 4            # pyramid branch output channels
    inter = C_in // 4         # inter_channels of PSPHead
    C2 = 2 * C_in             # channels after concat
    ks = list(jax.random.split(key, 32))
    ki = iter(ks)

    branches = []
    for _ in range(4):
        w = 0.2 * jax.random.normal(next(ki), (C_in, C4), jnp.float32)
        gamma = 1.0 + 0.1 * jax.random.normal(next(ki), (C4,), jnp.float32)
        beta = 0.1 * jax.random.normal(next(ki), (C4,), jnp.float32)
        mean = 0.1 * jax.random.normal(next(ki), (C4,), jnp.float32)
        var = 0.5 + jax.random.uniform(next(ki), (C4,), jnp.float32)
        scale, shift = fold_bn(gamma, beta, mean, var)
        branches.append((w, scale.reshape(1, C4), shift.reshape(1, C4)))

    w3 = 0.1 * jax.random.normal(next(ki), (3, 3, C2, inter), jnp.float32)
    gamma = 1.0 + 0.1 * jax.random.normal(next(ki), (inter,), jnp.float32)
    beta = 0.1 * jax.random.normal(next(ki), (inter,), jnp.float32)
    mean = 0.1 * jax.random.normal(next(ki), (inter,), jnp.float32)
    var = 0.5 + jax.random.uniform(next(ki), (inter,), jnp.float32)
    scale3, shift3 = fold_bn(gamma, beta, mean, var)

    w1 = 0.2 * jax.random.normal(next(ki), (inter, num_classes), jnp.float32)
    b1 = 0.05 * jax.random.normal(next(ki), (num_classes,), jnp.float32)

    return dict(branches=branches, w3=w3,
                scale3=scale3.reshape(1, inter), shift3=shift3.reshape(1, inter),
                w1=w1, b1=b1.reshape(1, num_classes))


if __name__ == "__main__":
    key = jax.random.PRNGKey(0)
    kx, kp = jax.random.split(key)

    N, C_in, H, W = 2, 16, 16, 16
    num_classes = 8

    x = jax.random.normal(kx, (N, C_in, H, W), jnp.float32)   # PyTorch NCHW input
    params = make_params(kp, C_in, num_classes)

    out = jax.block_until_ready(jax.jit(psp_head_forward)(x, params))
    assert out.shape == (N, num_classes, H, W), out.shape
    assert out.dtype == jnp.float32

    ref = jax.block_until_ready(psp_head_reference(x, params))
    np.testing.assert_allclose(np.asarray(out), np.asarray(ref), rtol=5e-3, atol=5e-3)

    print("KERNEL_OK")
</pallas_src>

<mosaic_0001>
module attributes {stable_mosaic.version = 11 : i64} {
  func.func @_head_kernel(%arg0: i32, %arg1: i32, %arg2: memref<1x16x16x16xf32, #tpu.memory_space<vmem>>, %arg3: memref<1x1x16x16xf32, #tpu.memory_space<vmem>>, %arg4: memref<1x1x16x16xf32, #tpu.memory_space<vmem>>, %arg5: memref<1x16x16x16xf32, #tpu.memory_space<vmem>>, %arg6: memref<1x1x16x16xf32, #tpu.memory_space<vmem>>, %arg7: memref<1x1x16x16xf32, #tpu.memory_space<vmem>>, %arg8: memref<288x4xf32, #tpu.memory_space<vmem>>, %arg9: memref<1x4xf32, #tpu.memory_space<vmem>>, %arg10: memref<1x4xf32, #tpu.memory_space<vmem>>, %arg11: memref<4x8xf32, #tpu.memory_space<vmem>>, %arg12: memref<1x8xf32, #tpu.memory_space<vmem>>, %arg13: memref<1x16x16x8xf32, #tpu.memory_space<vmem>>, %arg14: memref<290x32xf32, #tpu.memory_space<vmem>>, %arg15: memref<256x288xf32, #tpu.memory_space<vmem>>) attributes {dimension_semantics = [#tpu.dimension_semantics<parallel>, #tpu.dimension_semantics<parallel>], iteration_bounds = array<i64: 2, 1>, scalar_prefetch = 0 : i64, scratch_operands = 2 : i64, tpu.core_type = #tpu.core_type<tc>, window_params = [{transform_indices = @transform_0, window_bounds = array<i64: 1, 16, 16, 16>}, {transform_indices = @transform_1, window_bounds = array<i64: 1, 1, 16, 16>}, {transform_indices = @transform_2, window_bounds = array<i64: 1, 1, 16, 16>}, {transform_indices = @transform_3, window_bounds = array<i64: 1, 16, 16, 16>}, {transform_indices = @transform_4, window_bounds = array<i64: 1, 1, 16, 16>}, {transform_indices = @transform_5, window_bounds = array<i64: 1, 1, 16, 16>}, {pipeline_mode = #tpu.pipeline_mode<synchronous>, transform_indices = @transform_6, window_bounds = array<i64: 288, 4>}, {pipeline_mode = #tpu.pipeline_mode<synchronous>, transform_indices = @transform_7, window_bounds = array<i64: 1, 4>}, {pipeline_mode = #tpu.pipeline_mode<synchronous>, transform_indices = @transform_8, window_bounds = array<i64: 1, 4>}, {pipeline_mode = #tpu.pipeline_mode<synchronous>, transform_indices = @transform_9, window_bounds = array<i64: 4, 8>}, {pipeline_mode = #tpu.pipeline_mode<synchronous>, transform_indices = @transform_10, window_bounds = array<i64: 1, 8>}, {transform_indices = @transform_11, window_bounds = array<i64: 1, 16, 16, 8>}]} {
    %c0_i32 = arith.constant 0 : i32
    %0 = arith.cmpi eq, %arg1, %c0_i32 : i32
    %cst = arith.constant 0.000000e+00 : f32
    %cst_0 = arith.constant 1.000000e+00 : f32
    %1 = arith.select %0, %cst, %cst_0 : f32
    %c0_i32_1 = arith.constant 0 : i32
    %2 = arith.cmpi eq, %arg1, %c0_i32_1 : i32
    %cst_2 = arith.constant 0.000000e+00 : f32
    %cst_3 = arith.constant 1.000000e+00 : f32
    %3 = arith.select %2, %cst_2, %cst_3 : f32
    %cst_4 = arith.constant 0.000000e+00 : f32
    %4 = vector.broadcast %cst_4 : f32 to vector<1x32xf32>
    %c0 = arith.constant 0 : index
    %c0_5 = arith.constant 0 : index
    %5 = vector.load %arg14[%c0, %c0_5] : memref<290x32xf32, #tpu.memory_space<vmem>>, vector<1x32xf32>
    tpu.vector_store %arg14[%c0, %c0_5], %4 {strides = array<i32>} : memref<290x32xf32, #tpu.memory_space<vmem>>, vector<1x32xf32>,
    %c289 = arith.constant 289 : index
    %c0_6 = arith.constant 0 : index
    %6 = vector.load %arg14[%c289, %c0_6] : memref<290x32xf32, #tpu.memory_space<vmem>>, vector<1x32xf32>
    tpu.vector_store %arg14[%c289, %c0_6], %4 {strides = array<i32>} : memref<290x32xf32, #tpu.memory_space<vmem>>, vector<1x32xf32>,
    %c0_7 = arith.constant 0 : index
    %c0_8 = arith.constant 0 : index
    %c0_9 = arith.constant 0 : index
    %c0_10 = arith.constant 0 : index
    %7 = vector.load %arg3[%c0_7, %c0_8, %c0_9, %c0_10] : memref<1x1x16x16xf32, #tpu.memory_space<vmem>>, vector<1x1x16x16xf32>
    %8 = vector.shape_cast %7 : vector<1x1x16x16xf32> to vector<16x16xf32>
    %9 = vector.broadcast %1 : f32 to vector<16x16xf32>
    %10 = arith.mulf %8, %9 : vector<16x16xf32>
    %c1 = arith.constant 1 : index
    %c0_11 = arith.constant 0 : index
    %11 = vector.load %arg14[%c1, %c0_11] : memref<290x32xf32, #tpu.memory_space<vmem>>, vector<16x16xf32>
    tpu.vector_store %arg14[%c1, %c0_11], %10 {strides = array<i32>} : memref<290x32xf32, #tpu.memory_space<vmem>>, vector<16x16xf32>,
    %c0_12 = arith.constant 0 : index
    %c0_13 = arith.constant 0 : index
    %c0_14 = arith.constant 0 : index
    %c0_15 = arith.constant 0 : index
    %12 = vector.load %arg6[%c0_12, %c0_13, %c0_14, %c0_15] : memref<1x1x16x16xf32, #tpu.memory_space<vmem>>, vector<1x1x16x16xf32>
    %13 = vector.shape_cast %12 : vector<1x1x16x16xf32> to vector<16x16xf32>
    %14 = vector.broadcast %1 : f32 to vector<16x16xf32>
    %15 = arith.mulf %13, %14 : vector<16x16xf32>
    %c1_16 = arith.constant 1 : index
    %c16 = arith.constant 16 : index
    %16 = vector.load %arg14[%c1_16, %c16] : memref<290x32xf32, #tpu.memory_space<vmem>>, vector<16x16xf32>
    tpu.vector_store %arg14[%c1_16, %c16], %15 {strides = array<i32>} : memref<290x32xf32, #tpu.memory_space<vmem>>, vector<16x16xf32>,
    %c0_17 = arith.constant 0 : index
    %c0_18 = arith.constant 0 : index
    %c0_19 = arith.constant 0 : index
    %c0_20 = arith.constant 0 : index
    %17 = vector.load %arg2[%c0_17, %c0_18, %c0_19, %c0_20] : memref<1x16x16x16xf32, #tpu.memory_space<vmem>>, vector<1x16x16x16xf32>
    %18 = vector.shape_cast %17 : vector<1x16x16x16xf32> to vector<256x16xf32>
    %c17 = arith.constant 17 : index
    %c0_21 = arith.constant 0 : index
    %19 = vector.load %arg14[%c17, %c0_21] : memref<290x32xf32, #tpu.memory_space<vmem>>, vector<256x16xf32>
    tpu.vector_store %arg14[%c17, %c0_21], %18 {strides = array<i32>} : memref<290x32xf32, #tpu.memory_space<vmem>>, vector<256x16xf32>,
    %c0_22 = arith.constant 0 : index
    %c0_23 = arith.constant 0 : index
    %c0_24 = arith.constant 0 : index
    %c0_25 = arith.constant 0 : index
    %20 = vector.load %arg5[%c0_22, %c0_23, %c0_24, %c0_25] : memref<1x16x16x16xf32, #tpu.memory_space<vmem>>, vector<1x16x16x16xf32>
    %21 = vector.shape_cast %20 : vector<1x16x16x16xf32> to vector<256x16xf32>
    %c17_26 = arith.constant 17 : index
    %c16_27 = arith.constant 16 : index
    %22 = vector.load %arg14[%c17_26, %c16_27] : memref<290x32xf32, #tpu.memory_space<vmem>>, vector<256x16xf32>
    tpu.vector_store %arg14[%c17_26, %c16_27], %21 {strides = array<i32>} : memref<290x32xf32, #tpu.memory_space<vmem>>, vector<256x16xf32>,
    %c0_28 = arith.constant 0 : index
    %c0_29 = arith.constant 0 : index
    %c0_30 = arith.constant 0 : index
    %c0_31 = arith.constant 0 : index
    %23 = vector.load %arg4[%c0_28, %c0_29, %c0_30, %c0_31] : memref<1x1x16x16xf32, #tpu.memory_space<vmem>>, vector<1x1x16x16xf32>
    %24 = vector.shape_cast %23 : vector<1x1x16x16xf32> to vector<16x16xf32>
    %25 = vector.broadcast %3 : f32 to vector<16x16xf32>
    %26 = arith.mulf %24, %25 : vector<16x16xf32>
    %c273 = arith.constant 273 : index
    %c0_32 = arith.constant 0 : index
    %27 = vector.load %arg14[%c273, %c0_32] : memref<290x32xf32, #tpu.memory_space<vmem>>, vector<16x16xf32>
    tpu.vector_store %arg14[%c273, %c0_32], %26 {strides = array<i32>} : memref<290x32xf32, #tpu.memory_space<vmem>>, vector<16x16xf32>,
    %c0_33 = arith.constant 0 : index
    %c0_34 = arith.constant 0 : index
    %c0_35 = arith.constant 0 : index
    %c0_36 = arith.constant 0 : index
    %28 = vector.load %arg7[%c0_33, %c0_34, %c0_35, %c0_36] : memref<1x1x16x16xf32, #tpu.memory_space<vmem>>, vector<1x1x16x16xf32>
    %29 = vector.shape_cast %28 : vector<1x1x16x16xf32> to vector<16x16xf32>
    %30 = vector.broadcast %3 : f32 to vector<16x16xf32>
    %31 = arith.mulf %29, %30 : vector<16x16xf32>
    %c273_37 = arith.constant 273 : index
    %c16_38 = arith.constant 16 : index
    %32 = vector.load %arg14[%c273_37, %c16_38] : memref<290x32xf32, #tpu.memory_space<vmem>>, vector<16x16xf32>
    tpu.vector_store %arg14[%c273_37, %c16_38], %31 {strides = array<i32>} : memref<290x32xf32, #tpu.memory_space<vmem>>, vector<16x16xf32>,
    %33 = tpu.iota {dimensions = array<i32: 0>} : vector<256x1xi32>
    %c16_i32 = arith.constant 16 : i32
    %c0_i32_39 = arith.constant 0 : i32
    %34 = arith.cmpi eq, %c16_i32, %c0_i32_39 : i32
    %c1_i32 = arith.constant 1 : i32
    %35 = arith.select %34, %c1_i32, %c16_i32 : i32
    %36 = vector.broadcast %35 : i32 to vector<256x1xi32>
    %37 = arith.remsi %33, %36 : vector<256x1xi32>
    %c0_i32_40 = arith.constant 0 : i32
    %38 = vector.broadcast %c0_i32_40 : i32 to vector<256x1xi32>
    %39 = arith.cmpi ne, %37, %38 : vector<256x1xi32>
    %c0_i32_41 = arith.constant 0 : i32
    %40 = vector.broadcast %c0_i32_41 : i32 to vector<256x1xi32>
    %41 = arith.cmpi slt, %37, %40 : vector<256x1xi32>
    %c0_i32_42 = arith.constant 0 : i32
    %42 = arith.cmpi slt, %35, %c0_i32_42 : i32
    %43 = vector.broadcast %42 : i1 to vector<256x1xi1>
    %44 = vector.broadcast %43 : vector<256x1xi1> to vector<256x1xi1>
    %45 = arith.xori %41, %44 : vector<256x1xi1>
    %46 = arith.andi %45, %39 : vector<256x1xi1>
    %47 = vector.broadcast %35 : i32 to vector<256x1xi32>
    %48 = arith.addi %37, %47 : vector<256x1xi32>
    %49 = arith.select %46, %48, %37 : vector<256x1xi1>, vector<256x1xi32>
    %c0_i32_43 = arith.constant 0 : i32
    %50 = vector.broadcast %c0_i32_43 : i32 to vector<256x1xi32>
    %51 = arith.cmpi ne, %49, %50 : vector<256x1xi32>
    %52 = arith.extui %51 : vector<256x1xi1> to vector<256x1xi32>
    %53 = arith.sitofp %52 : vector<256x1xi32> to vector<256x1xf32>
    %c15_i32 = arith.constant 15 : i32
    %54 = vector.broadcast %c15_i32 : i32 to vector<256x1xi32>
    %55 = arith.cmpi ne, %49, %54 : vector<256x1xi32>
    %56 = arith.extui %55 : vector<256x1xi1> to vector<256x1xi32>
    %57 = arith.sitofp %56 : vector<256x1xi32> to vector<256x1xf32>
    %c0_44 = arith.constant 0 : index
    %c0_45 = arith.constant 0 : index
    %58 = vector.load %arg14[%c0_44, %c0_45] : memref<290x32xf32, #tpu.memory_space<vmem>>, vector<256x32xf32>
    %59 = vector.broadcast %53 : vector<256x1xf32> to vector<256x32xf32>
    %60 = arith.mulf %58, %59 : vector<256x32xf32>
    %c0_46 = arith.constant 0 : index
    %c0_47 = arith.constant 0 : index
    %61 = vector.load %arg15[%c0_46, %c0_47] : memref<256x288xf32, #tpu.memory_space<vmem>>, vector<256x32xf32>
    tpu.vector_store %arg15[%c0_46, %c0_47], %60 {strides = array<i32>} : memref<256x288xf32, #tpu.memory_space<vmem>>, vector<256x32xf32>,
    %c1_48 = arith.constant 1 : index
    %c0_49 = arith.constant 0 : index
    %62 = vector.load %arg14[%c1_48, %c0_49] : memref<290x32xf32, #tpu.memory_space<vmem>>, vector<256x32xf32>
    %c0_50 = arith.constant 0 : index
    %c32 = arith.constant 32 : index
    %63 = vector.load %arg15[%c0_50, %c32] : memref<256x288xf32, #tpu.memory_space<vmem>>, vector<256x32xf32>
    tpu.vector_store %arg15[%c0_50, %c32], %62 {strides = array<i32>} : memref<256x288xf32, #tpu.memory_space<vmem>>, vector<256x32xf32>,
    %c2 = arith.constant 2 : index
    %c0_51 = arith.constant 0 : index
    %64 = vector.load %arg14[%c2, %c0_51] : memref<290x32xf32, #tpu.memory_space<vmem>>, vector<256x32xf32>
    %65 = vector.broadcast %57 : vector<256x1xf32> to vector<256x32xf32>
    %66 = arith.mulf %64, %65 : vector<256x32xf32>
    %c0_52 = arith.constant 0 : index
    %c64 = arith.constant 64 : index
    %67 = vector.load %arg15[%c0_52, %c64] : memref<256x288xf32, #tpu.memory_space<vmem>>, vector<256x32xf32>
    tpu.vector_store %arg15[%c0_52, %c64], %66 {strides = array<i32>} : memref<256x288xf32, #tpu.memory_space<vmem>>, vector<256x32xf32>,
    %c16_53 = arith.constant 16 : index
    %c0_54 = arith.constant 0 : index
    %68 = vector.load %arg14[%c16_53, %c0_54] : memref<290x32xf32, #tpu.memory_space<vmem>>, vector<256x32xf32>
    %69 = vector.broadcast %53 : vector<256x1xf32> to vector<256x32xf32>
    %70 = arith.mulf %68, %69 : vector<256x32xf32>
    %c0_55 = arith.constant 0 : index
    %c96 = arith.constant 96 : index
    %71 = vector.load %arg15[%c0_55, %c96] : memref<256x288xf32, #tpu.memory_space<vmem>>, vector<256x32xf32>
    tpu.vector_store %arg15[%c0_55, %c96], %70 {strides = array<i32>} : memref<256x288xf32, #tpu.memory_space<vmem>>, vector<256x32xf32>,
    %c17_56 = arith.constant 17 : index
    %c0_57 = arith.constant 0 : index
    %72 = vector.load %arg14[%c17_56, %c0_57] : memref<290x32xf32, #tpu.memory_space<vmem>>, vector<256x32xf32>
    %c0_58 = arith.constant 0 : index
    %c128 = arith.constant 128 : index
    %73 = vector.load %arg15[%c0_58, %c128] : memref<256x288xf32, #tpu.memory_space<vmem>>, vector<256x32xf32>
    tpu.vector_store %arg15[%c0_58, %c128], %72 {strides = array<i32>} : memref<256x288xf32, #tpu.memory_space<vmem>>, vector<256x32xf32>,
    %c18 = arith.constant 18 : index
    %c0_59 = arith.constant 0 : index
    %74 = vector.load %arg14[%c18, %c0_59] : memref<290x32xf32, #tpu.memory_space<vmem>>, vector<256x32xf32>
    %75 = vector.broadcast %57 : vector<256x1xf32> to vector<256x32xf32>
    %76 = arith.mulf %74, %75 : vector<256x32xf32>
    %c0_60 = arith.constant 0 : index
    %c160 = arith.constant 160 : index
    %77 = vector.load %arg15[%c0_60, %c160] : memref<256x288xf32, #tpu.memory_space<vmem>>, vector<256x32xf32>
    tpu.vector_store %arg15[%c0_60, %c160], %76 {strides = array<i32>} : memref<256x288xf32, #tpu.memory_space<vmem>>, vector<256x32xf32>,
    %c32_61 = arith.constant 32 : index
    %c0_62 = arith.constant 0 : index
    %78 = vector.load %arg14[%c32_61, %c0_62] : memref<290x32xf32, #tpu.memory_space<vmem>>, vector<256x32xf32>
    %79 = vector.broadcast %53 : vector<256x1xf32> to vector<256x32xf32>
    %80 = arith.mulf %78, %79 : vector<256x32xf32>
    %c0_63 = arith.constant 0 : index
    %c192 = arith.constant 192 : index
    %81 = vector.load %arg15[%c0_63, %c192] : memref<256x288xf32, #tpu.memory_space<vmem>>, vector<256x32xf32>
    tpu.vector_store %arg15[%c0_63, %c192], %80 {strides = array<i32>} : memref<256x288xf32, #tpu.memory_space<vmem>>, vector<256x32xf32>,
    %c33 = arith.constant 33 : index
    %c0_64 = arith.constant 0 : index
    %82 = vector.load %arg14[%c33, %c0_64] : memref<290x32xf32, #tpu.memory_space<vmem>>, vector<256x32xf32>
    %c0_65 = arith.constant 0 : index
    %c224 = arith.constant 224 : index
    %83 = vector.load %arg15[%c0_65, %c224] : memref<256x288xf32, #tpu.memory_space<vmem>>, vector<256x32xf32>
    tpu.vector_store %arg15[%c0_65, %c224], %82 {strides = array<i32>} : memref<256x288xf32, #tpu.memory_space<vmem>>, vector<256x32xf32>,
    %c34 = arith.constant 34 : index
    %c0_66 = arith.constant 0 : index
    %84 = vector.load %arg14[%c34, %c0_66] : memref<290x32xf32, #tpu.memory_space<vmem>>, vector<256x32xf32>
    %85 = vector.broadcast %57 : vector<256x1xf32> to vector<256x32xf32>
    %86 = arith.mulf %84, %85 : vector<256x32xf32>
    %c0_67 = arith.constant 0 : index
    %c256 = arith.constant 256 : index
    %87 = vector.load %arg15[%c0_67, %c256] : memref<256x288xf32, #tpu.memory_space<vmem>>, vector<256x32xf32>
    tpu.vector_store %arg15[%c0_67, %c256], %86 {strides = array<i32>} : memref<256x288xf32, #tpu.memory_space<vmem>>, vector<256x32xf32>,
    %c0_68 = arith.constant 0 : index
    %c0_69 = arith.constant 0 : index
    %88 = vector.load %arg15[%c0_68, %c0_69] : memref<256x288xf32, #tpu.memory_space<vmem>>, vector<256x288xf32>
    %c0_70 = arith.constant 0 : index
    %c0_71 = arith.constant 0 : index
    %89 = vector.load %arg8[%c0_70, %c0_71] : memref<288x4xf32, #tpu.memory_space<vmem>>, vector<288x4xf32>
    %cst_72 = arith.constant dense<0.000000e+00> : vector<256x4xf32>
    %90 = tpu.matmul %88, %89, %cst_72 {dimension_numbers = #tpu.dot_dimension_numbers<[1], [0], [0], [1], [0, 0, 1, 1], [], []>} : vector<256x288xf32>, vector<288x4xf32>, vector<256x4xf32> -> vector<256x4xf32>
    %c0_73 = arith.constant 0 : index
    %c0_74 = arith.constant 0 : index
    %91 = vector.load %arg9[%c0_73, %c0_74] : memref<1x4xf32, #tpu.memory_space<vmem>>, vector<1x4xf32>
    %92 = vector.broadcast %91 : vector<1x4xf32> to vector<256x4xf32>
    %93 = arith.mulf %90, %92 : vector<256x4xf32>
    %c0_75 = arith.constant 0 : index
    %c0_76 = arith.constant 0 : index
    %94 = vector.load %arg10[%c0_75, %c0_76] : memref<1x4xf32, #tpu.memory_space<vmem>>, vector<1x4xf32>
    %95 = vector.broadcast %94 : vector<1x4xf32> to vector<256x4xf32>
    %96 = arith.addf %93, %95 : vector<256x4xf32>
    %cst_77 = arith.constant 0.000000e+00 : f32
    %97 = vector.broadcast %cst_77 : f32 to vector<256x4xf32>
    %98 = arith.maximumf %96, %97 : vector<256x4xf32>
    %c0_78 = arith.constant 0 : index
    %c0_79 = arith.constant 0 : index
    %99 = vector.load %arg11[%c0_78, %c0_79] : memref<4x8xf32, #tpu.memory_space<vmem>>, vector<4x8xf32>
    %cst_80 = arith.constant dense<0.000000e+00> : vector<256x8xf32>
    %100 = tpu.matmul %98, %99, %cst_80 {dimension_numbers = #tpu.dot_dimension_numbers<[1], [0], [0], [1], [0, 0, 1, 1], [], []>} : vector<256x4xf32>, vector<4x8xf32>, vector<256x8xf32> -> vector<256x8xf32>
    %c0_81 = arith.constant 0 : index
    %c0_82 = arith.constant 0 : index
    %101 = vector.load %arg12[%c0_81, %c0_82] : memref<1x8xf32, #tpu.memory_space<vmem>>, vector<1x8xf32>
    %102 = vector.broadcast %101 : vector<1x8xf32> to vector<256x8xf32>
    %103 = arith.addf %100, %102 : vector<256x8xf32>
    %104 = vector.shape_cast %103 : vector<256x8xf32> to vector<1x16x16x8xf32>
    %c0_83 = arith.constant 0 : index
    %c0_84 = arith.constant 0 : index
    %c0_85 = arith.constant 0 : index
    %c0_86 = arith.constant 0 : index
    %105 = vector.load %arg13[%c0_83, %c0_84, %c0_85, %c0_86] : memref<1x16x16x8xf32, #tpu.memory_space<vmem>>, vector<1x16x16x8xf32>
    tpu.vector_store %arg13[%c0_83, %c0_84, %c0_85, %c0_86], %104 {strides = array<i32>} : memref<1x16x16x8xf32, #tpu.memory_space<vmem>>, vector<1x16x16x8xf32>,
    return
  }
  func.func @transform_0(%arg0: i32, %arg1: i32) -> (i32, i32, i32, i32) {
    %c0_i32 = arith.constant 0 : i32
    %c0_i32_0 = arith.constant 0 : i32
    %c0_i32_1 = arith.constant 0 : i32
    return %arg0, %arg1, %c0_i32, %c0_i32_0 : i32, i32, i32, i32
  }
  func.func @transform_1(%arg0: i32, %arg1: i32) -> (i32, i32, i32, i32) {
    %c16_i32 = arith.constant 16 : i32
    %0 = arith.muli %arg1, %c16_i32 : i32
    %c1_i32 = arith.constant 1 : i32
    %1 = arith.subi %0, %c1_i32 : i32
    %c0_i32 = arith.constant 0 : i32
    %2 = arith.maxsi %1, %c0_i32 : i32
    %c0_i32_0 = arith.constant 0 : i32
    %c0_i32_1 = arith.constant 0 : i32
    %c0_i32_2 = arith.constant 0 : i32
    return %arg0, %2, %c0_i32_0, %c0_i32_1 : i32, i32, i32, i32
  }
  func.func @transform_2(%arg0: i32, %arg1: i32) -> (i32, i32, i32, i32) {
    %c1_i32 = arith.constant 1 : i32
    %0 = arith.addi %arg1, %c1_i32 : i32
    %c16_i32 = arith.constant 16 : i32
    %1 = arith.muli %0, %c16_i32 : i32
    %c15_i32 = arith.constant 15 : i32
    %2 = arith.minsi %1, %c15_i32 : i32
    %c0_i32 = arith.constant 0 : i32
    %c0_i32_0 = arith.constant 0 : i32
    %c0_i32_1 = arith.constant 0 : i32
    return %arg0, %2, %c0_i32, %c0_i32_0 : i32, i32, i32, i32
  }
  func.func @transform_3(%arg0: i32, %arg1: i32) -> (i32, i32, i32, i32) {
    %c0_i32 = arith.constant 0 : i32
    %c0_i32_0 = arith.constant 0 : i32
    %c0_i32_1 = arith.constant 0 : i32
    return %arg0, %arg1, %c0_i32, %c0_i32_0 : i32, i32, i32, i32
  }
  func.func @transform_4(%arg0: i32, %arg1: i32) -> (i32, i32, i32, i32) {
    %c16_i32 = arith.constant 16 : i32
    %0 = arith.muli %arg1, %c16_i32 : i32
    %c1_i32 = arith.constant 1 : i32
    %1 = arith.subi %0, %c1_i32 : i32
    %c0_i32 = arith.constant 0 : i32
    %2 = arith.maxsi %1, %c0_i32 : i32
    %c0_i32_0 = arith.constant 0 : i32
    %c0_i32_1 = arith.constant 0 : i32
    %c0_i32_2 = arith.constant 0 : i32
    return %arg0, %2, %c0_i32_0, %c0_i32_1 : i32, i32, i32, i32
  }
  func.func @transform_5(%arg0: i32, %arg1: i32) -> (i32, i32, i32, i32) {
    %c1_i32 = arith.constant 1 : i32
    %0 = arith.addi %arg1, %c1_i32 : i32
    %c16_i32 = arith.constant 16 : i32
    %1 = arith.muli %0, %c16_i32 : i32
    %c15_i32 = arith.constant 15 : i32
    %2 = arith.minsi %1, %c15_i32 : i32
    %c0_i32 = arith.constant 0 : i32
    %c0_i32_0 = arith.constant 0 : i32
    %c0_i32_1 = arith.constant 0 : i32
    return %arg0, %2, %c0_i32, %c0_i32_0 : i32, i32, i32, i32
  }
  func.func @transform_6(%arg0: i32, %arg1: i32) -> (i32, i32) {
    %c0_i32 = arith.constant 0 : i32
    %c0_i32_0 = arith.constant 0 : i32
    %c0_i32_1 = arith.constant 0 : i32
    return %c0_i32, %c0_i32_0 : i32, i32
  }
  func.func @transform_7(%arg0: i32, %arg1: i32) -> (i32, i32) {
    %c0_i32 = arith.constant 0 : i32
    %c0_i32_0 = arith.constant 0 : i32
    %c0_i32_1 = arith.constant 0 : i32
    return %c0_i32, %c0_i32_0 : i32, i32
  }
  func.func @transform_8(%arg0: i32, %arg1: i32) -> (i32, i32) {
    %c0_i32 = arith.constant 0 : i32
    %c0_i32_0 = arith.constant 0 : i32
    %c0_i32_1 = arith.constant 0 : i32
    return %c0_i32, %c0_i32_0 : i32, i32
  }
  func.func @transform_9(%arg0: i32, %arg1: i32) -> (i32, i32) {
    %c0_i32 = arith.constant 0 : i32
    %c0_i32_0 = arith.constant 0 : i32
    %c0_i32_1 = arith.constant 0 : i32
    return %c0_i32, %c0_i32_0 : i32, i32
  }
  func.func @transform_10(%arg0: i32, %arg1: i32) -> (i32, i32) {
    %c0_i32 = arith.constant 0 : i32
    %c0_i32_0 = arith.constant 0 : i32
    %c0_i32_1 = arith.constant 0 : i32
    return %c0_i32, %c0_i32_0 : i32, i32
  }
  func.func @transform_11(%arg0: i32, %arg1: i32) -> (i32, i32, i32, i32) {
    %c0_i32 = arith.constant 0 : i32
    %c0_i32_0 = arith.constant 0 : i32
    %c0_i32_1 = arith.constant 0 : i32
    return %arg0, %arg1, %c0_i32, %c0_i32_0 : i32, i32, i32, i32
  }
}

</mosaic_0001>

<llo_original>
// kernel: psp_head_forward.1
$region0: #{psp_head_forward.1}
  #allocation0 [shape = 'u32[]', space=smem, size = 0x4, offset = 0x4, fixed_abs, tag = 'smem constant byte address 0x4 - core index']
  #allocation1 [shape = 'u32[144,128]{1,0:T(1,128)}', space=vmem, size = 0x12000, scoped, tag = 'internal scratch']
  #allocation2 [shape = 'f32[290,32]{1,0:T(8,128)}', space=vmem, size = 0x25000, scoped, tag = 'scratch operand']
  #allocation3 [shape = 'f32[256,288]{1,0:T(8,128)}', space=vmem, size = 0x60000, scoped, tag = 'scratch operand']
  %s0 = inlined_call_operand.vmem [shape: f32[2,16,16,16], index: 0, kind: input, shape index: {}, may-alias: {0,1,2}]
  %s1 = inlined_call_operand.vmem [shape: f32[2,16,16,16], index: 1, kind: input, shape index: {}, may-alias: {0,1,2}]
  %s2 = inlined_call_operand.vmem [shape: f32[2,16,16,16], index: 2, kind: input, shape index: {}, may-alias: {0,1,2}]
  %s3 = inlined_call_operand.vmem [shape: f32[2,16,16,16], index: 3, kind: input, shape index: {}, may-alias: {3,4,5}]
  %s4 = inlined_call_operand.vmem [shape: f32[2,16,16,16], index: 4, kind: input, shape index: {}, may-alias: {3,4,5}]
  %s5 = inlined_call_operand.vmem [shape: f32[2,16,16,16], index: 5, kind: input, shape index: {}, may-alias: {3,4,5}]
  %s6 = inlined_call_operand.vmem [shape: f32[288,4], index: 6, kind: input, shape index: {}]
  %s7 = inlined_call_operand.vmem [shape: f32[1,4], index: 7, kind: input, shape index: {}]
  %s8 = inlined_call_operand.vmem [shape: f32[1,4], index: 8, kind: input, shape index: {}]
  %s9 = inlined_call_operand.vmem [shape: f32[4,8], index: 9, kind: input, shape index: {}]
  %s10 = inlined_call_operand.vmem [shape: f32[1,8], index: 10, kind: input, shape index: {}]
  %s11 = inlined_call_operand.vmem [shape: f32[2,16,16,8], index: 11, kind: output, shape index: {}]
  %s12 = sld [smem:[#allocation0]]
  $region77: #{psp_head_forward.1} parent=0
    _
  %s14 = ssub.s32 1, %s12
  %s15 = scalar_select 0, %s14, %s12
  loop: start=0, step=1, limit=4
  $region2: #{psp_head_forward.1} parent=0 // loop_pre_header
    _
  $region3: #{psp_head_forward.1} parent=0 // loop_header
    %s17 = sphi 0, %s21
    %p18 = scmp.ge.s32.totalorder %s17, 4
    %s24 = sphi 0, %s36
    %s25 = sphi 0, %s32
    %s26 = sphi 0, %s24
    %s27 = sphi 0, %s25
    %s28 = sphi 0, %s26
    %s29 = sphi 0, %s27
    %s41 = sphi 0, %s43
    %s44 = sphi 0, %s41
    %s45 = sphi 0, %s44
    %s61 = sphi 0, %s45
    %s77 = sphi 0, %s79
    %s80 = sphi 0, %s77
    %s81 = sphi 0, %s80
    %s97 = sphi 0, %s81
    %s113 = sphi 0, %s115
    %s116 = sphi 0, %s113
    %s117 = sphi 0, %s116
    %s133 = sphi 0, %s117
    %s141 = sphi 0, %s143
    %s144 = sphi 0, %s141
    %s145 = sphi 0, %s144
    %s161 = sphi 0, %s145
    %s177 = sphi 0, %s179
    %s180 = sphi 0, %s177
    %s181 = sphi 0, %s180
    %s197 = sphi 0, %s181
    %s213 = sphi 0, %s215
    %s216 = sphi 0, %s213
    %s217 = sphi 0, %s216
    %s233 = sphi 0, %s217
    %s237 = sphi 0, %s237
    %s239 = sphi 0, %s237
    %s240 = sphi 0, %s239
    %s254 = sphi 0, %s240
    %s258 = sphi 0, %s258
    %s260 = sphi 0, %s258
    %s261 = sphi 0, %s260
    %s275 = sphi 0, %s261
    %s279 = sphi 0, %s279
    %s281 = sphi 0, %s279
    %s282 = sphi 0, %s281
    %s296 = sphi 0, %s282
    %s300 = sphi 0, %s300
    %s302 = sphi 0, %s300
    %s303 = sphi 0, %s302
    %s317 = sphi 0, %s303
    %s321 = sphi 0, %s321
    %s323 = sphi 0, %s321
    %s324 = sphi 0, %s323
    %s338 = sphi 0, %s324
    %s346 = sphi 0, %s348
    %s349 = sphi 0, %s346
    %s350 = sphi 0, %s349
    %s366 = sphi 0, %s350
  $region4: #{psp_head_forward.1} parent=0 // loop_header_branch
    %20 = sbr.rel (%p18) target = $region8
  $region5: #{psp_head_forward.1} parent=0 // loop_body
    %s22 = ssub.s32 %s17, 1
    %s23 = ssub.s32 %s17, 2
    %s30 = sadd.s32 1, %s25
    %p31 = scmp.ge.s32.totalorder %s30, 1
    %s32 = scalar_select %p31, 0, %s30
    %s33 = sadd.s32 1, %s24
    %s34 = scalar_select %p31, %s33, %s24
    %p35 = scmp.ge.s32.totalorder %s34, 2
    %s36 = scalar_select %p35, 0, %s34
    %s37 = ssub.s32 %s24, %s36
    %s38 = ssub.s32 %s25, %s32
    %s39 = sor.u32 %s37, %s38
    %p40 = scmp.eq.s32.totalorder %s39, 0
    %s42 = sadd.s32 %s41, 1
    %s43 = scalar_select %p40, %s41, %s42
    %p46 = pneg %p40
    %p47 = scmp.eq.s32.totalorder %s17, 1
    %p48 = por %p46, %p47
    %p49 = scmp.ne.s32.totalorder %s41, %s44
    %p50 = scmp.eq.s32.totalorder %s17, 0
    %p51 = por %p49, %p50
    %p52 = scmp.ne.s32.totalorder %s41, %s44
    %p53 = scmp.eq.s32.totalorder %s22, 1
    %p54 = por %p52, %p53
    %p55 = scmp.ne.s32.totalorder %s44, %s45
    %p56 = scmp.eq.s32.totalorder %s22, 0
    %p57 = por %p55, %p56
    %p58 = scmp.ne.s32.totalorder %s44, %s45
    %p59 = scmp.eq.s32.totalorder %s23, 1
    %p60 = por %p58, %p59
    %p62 = scmp.ne.s32.totalorder %s45, %s61
    %p63 = scmp.eq.s32.totalorder %s23, 0
    %p64 = por %p62, %p63
    %s65 = smul.u32 %s25, 16
    %s66 = ssub.s32 %s65, 1
    %p67 = scmp.gt.s32.totalorder %s66, 0
    %s68 = scalar_select %p67, %s66, 0
    %s69 = smul.u32 %s32, 16
    %s70 = ssub.s32 %s69, 1
    %p71 = scmp.gt.s32.totalorder %s70, 0
    %s72 = scalar_select %p71, %s70, 0
    %s73 = ssub.s32 %s24, %s36
    %s74 = ssub.s32 %s68, %s72
    %s75 = sor.u32 %s73, %s74
    %p76 = scmp.eq.s32.totalorder %s75, 0
    %s78 = sadd.s32 %s77, 1
    %s79 = scalar_select %p76, %s77, %s78
    %p82 = pneg %p76
    %p83 = scmp.eq.s32.totalorder %s17, 1
    %p84 = por %p82, %p83
    %p85 = scmp.ne.s32.totalorder %s77, %s80
    %p86 = scmp.eq.s32.totalorder %s17, 0
    %p87 = por %p85, %p86
    %p88 = scmp.ne.s32.totalorder %s77, %s80
    %p89 = scmp.eq.s32.totalorder %s22, 1
    %p90 = por %p88, %p89
    %p91 = scmp.ne.s32.totalorder %s80, %s81
    %p92 = scmp.eq.s32.totalorder %s22, 0
    %p93 = por %p91, %p92
    %p94 = scmp.ne.s32.totalorder %s80, %s81
    %p95 = scmp.eq.s32.totalorder %s23, 1
    %p96 = por %p94, %p95
    %p98 = scmp.ne.s32.totalorder %s81, %s97
    %p99 = scmp.eq.s32.totalorder %s23, 0
    %p100 = por %p98, %p99
    %s101 = sadd.s32 %s25, 1
    %s102 = smul.u32 %s101, 16
    %p103 = scmp.lt.s32.totalorder %s102, 15
    %s104 = scalar_select %p103, %s102, 15
    %s105 = sadd.s32 %s32, 1
    %s106 = smul.u32 %s105, 16
    %p107 = scmp.lt.s32.totalorder %s106, 15
    %s108 = scalar_select %p107, %s106, 15
    %s109 = ssub.s32 %s24, %s36
    %s110 = ssub.s32 %s104, %s108
    %s111 = sor.u32 %s109, %s110
    %p112 = scmp.eq.s32.totalorder %s111, 0
    %s114 = sadd.s32 %s113, 1
    %s115 = scalar_select %p112, %s113, %s114
    %p118 = pneg %p112
    %p119 = scmp.eq.s32.totalorder %s17, 1
    %p120 = por %p118, %p119
    %p121 = scmp.ne.s32.totalorder %s113, %s116
    %p122 = scmp.eq.s32.totalorder %s17, 0
    %p123 = por %p121, %p122
    %p124 = scmp.ne.s32.totalorder %s113, %s116
    %p125 = scmp.eq.s32.totalorder %s22, 1
    %p126 = por %p124, %p125
    %p127 = scmp.ne.s32.totalorder %s116, %s117
    %p128 = scmp.eq.s32.totalorder %s22, 0
    %p129 = por %p127, %p128
    %p130 = scmp.ne.s32.totalorder %s116, %s117
    %p131 = scmp.eq.s32.totalorder %s23, 1
    %p132 = por %p130, %p131
    %p134 = scmp.ne.s32.totalorder %s117, %s133
    %p135 = scmp.eq.s32.totalorder %s23, 0
    %p136 = por %p134, %p135
    %s137 = ssub.s32 %s24, %s36
    %s138 = ssub.s32 %s25, %s32
    %s139 = sor.u32 %s137, %s138
    %p140 = scmp.eq.s32.totalorder %s139, 0
    %s142 = sadd.s32 %s141, 1
    %s143 = scalar_select %p140, %s141, %s142
    %p146 = pneg %p140
    %p147 = scmp.eq.s32.totalorder %s17, 1
    %p148 = por %p146, %p147
    %p149 = scmp.ne.s32.totalorder %s141, %s144
    %p150 = scmp.eq.s32.totalorder %s17, 0
    %p151 = por %p149, %p150
    %p152 = scmp.ne.s32.totalorder %s141, %s144
    %p153 = scmp.eq.s32.totalorder %s22, 1
    %p154 = por %p152, %p153
    %p155 = scmp.ne.s32.totalorder %s144, %s145
    %p156 = scmp.eq.s32.totalorder %s22, 0
    %p157 = por %p155, %p156
    %p158 = scmp.ne.s32.totalorder %s144, %s145
    %p159 = scmp.eq.s32.totalorder %s23, 1
    %p160 = por %p158, %p159
    %p162 = scmp.ne.s32.totalorder %s145, %s161
    %p163 = scmp.eq.s32.totalorder %s23, 0
    %p164 = por %p162, %p163
    %s165 = smul.u32 %s25, 16
    %s166 = ssub.s32 %s165, 1
    %p167 = scmp.gt.s32.totalorder %s166, 0
    %s168 = scalar_select %p167, %s166, 0
    %s169 = smul.u32 %s32, 16
    %s170 = ssub.s32 %s169, 1
    %p171 = scmp.gt.s32.totalorder %s170, 0
    %s172 = scalar_select %p171, %s170, 0
    %s173 = ssub.s32 %s24, %s36
    %s174 = ssub.s32 %s168, %s172
    %s175 = sor.u32 %s173, %s174
    %p176 = scmp.eq.s32.totalorder %s175, 0
    %s178 = sadd.s32 %s177, 1
    %s179 = scalar_select %p176, %s177, %s178
    %p182 = pneg %p176
    %p183 = scmp.eq.s32.totalorder %s17, 1
    %p184 = por %p182, %p183
    %p185 = scmp.ne.s32.totalorder %s177, %s180
    %p186 = scmp.eq.s32.totalorder %s17, 0
    %p187 = por %p185, %p186
    %p188 = scmp.ne.s32.totalorder %s177, %s180
    %p189 = scmp.eq.s32.totalorder %s22, 1
    %p190 = por %p188, %p189
    %p191 = scmp.ne.s32.totalorder %s180, %s181
    %p192 = scmp.eq.s32.totalorder %s22, 0
    %p193 = por %p191, %p192
    %p194 = scmp.ne.s32.totalorder %s180, %s181
    %p195 = scmp.eq.s32.totalorder %s23, 1
    %p196 = por %p194, %p195
    %p198 = scmp.ne.s32.totalorder %s181, %s197
    %p199 = scmp.eq.s32.totalorder %s23, 0
    %p200 = por %p198, %p199
    %s201 = sadd.s32 %s25, 1
    %s202 = smul.u32 %s201, 16
    %p203 = scmp.lt.s32.totalorder %s202, 15
    %s204 = scalar_select %p203, %s202, 15
    %s205 = sadd.s32 %s32, 1
    %s206 = smul.u32 %s205, 16
    %p207 = scmp.lt.s32.totalorder %s206, 15
    %s208 = scalar_select %p207, %s206, 15
    %s209 = ssub.s32 %s24, %s36
    %s210 = ssub.s32 %s204, %s208
    %s211 = sor.u32 %s209, %s210
    %p212 = scmp.eq.s32.totalorder %s211, 0
    %s214 = sadd.s32 %s213, 1
    %s215 = scalar_select %p212, %s213, %s214
    %p218 = pneg %p212
    %p219 = scmp.eq.s32.totalorder %s17, 1
    %p220 = por %p218, %p219
    %p221 = scmp.ne.s32.totalorder %s213, %s216
    %p222 = scmp.eq.s32.totalorder %s17, 0
    %p223 = por %p221, %p222
    %p224 = scmp.ne.s32.totalorder %s213, %s216
    %p225 = scmp.eq.s32.totalorder %s22, 1
    %p226 = por %p224, %p225
    %p227 = scmp.ne.s32.totalorder %s216, %s217
    %p228 = scmp.eq.s32.totalorder %s22, 0
    %p229 = por %p227, %p228
    %p230 = scmp.ne.s32.totalorder %s216, %s217
    %p231 = scmp.eq.s32.totalorder %s23, 1
    %p232 = por %p230, %p231
    %p234 = scmp.ne.s32.totalorder %s217, %s233
    %p235 = scmp.eq.s32.totalorder %s23, 0
    %p236 = por %p234, %p235
    %s238 = sadd.s32 %s237, 1
    %p241 = scmp.eq.s32.totalorder %s17, 1
    %p242 = scmp.ne.s32.totalorder %s237, %s239
    %p243 = scmp.eq.s32.totalorder %s17, 0
    %p244 = por %p242, %p243
    %p245 = scmp.ne.s32.totalorder %s237, %s239
    %p246 = scmp.eq.s32.totalorder %s22, 1
    %p247 = por %p245, %p246
    %p248 = scmp.ne.s32.totalorder %s239, %s240
    %p249 = scmp.eq.s32.totalorder %s22, 0
    %p250 = por %p248, %p249
    %p251 = scmp.ne.s32.totalorder %s239, %s240
    %p252 = scmp.eq.s32.totalorder %s23, 1
    %p253 = por %p251, %p252
    %p255 = scmp.ne.s32.totalorder %s240, %s254
    %p256 = scmp.eq.s32.totalorder %s23, 0
    %p257 = por %p255, %p256
    %s259 = sadd.s32 %s258, 1
    %p262 = scmp.eq.s32.totalorder %s17, 1
    %p263 = scmp.ne.s32.totalorder %s258, %s260
    %p264 = scmp.eq.s32.totalorder %s17, 0
    %p265 = por %p263, %p264
    %p266 = scmp.ne.s32.totalorder %s258, %s260
    %p267 = scmp.eq.s32.totalorder %s22, 1
    %p268 = por %p266, %p267
    %p269 = scmp.ne.s32.totalorder %s260, %s261
    %p270 = scmp.eq.s32.totalorder %s22, 0
    %p271 = por %p269, %p270
    %p272 = scmp.ne.s32.totalorder %s260, %s261
    %p273 = scmp.eq.s32.totalorder %s23, 1
    %p274 = por %p272, %p273
    %p276 = scmp.ne.s32.totalorder %s261, %s275
    %p277 = scmp.eq.s32.totalorder %s23, 0
    %p278 = por %p276, %p277
    %s280 = sadd.s32 %s279, 1
    %p283 = scmp.eq.s32.totalorder %s17, 1
    %p284 = scmp.ne.s32.totalorder %s279, %s281
    %p285 = scmp.eq.s32.totalorder %s17, 0
    %p286 = por %p284, %p285
    %p287 = scmp.ne.s32.totalorder %s279, %s281
    %p288 = scmp.eq.s32.totalorder %s22, 1
    %p289 = por %p287, %p288
    %p290 = scmp.ne.s32.totalorder %s281, %s282
    %p291 = scmp.eq.s32.totalorder %s22, 0
    %p292 = por %p290, %p291
    %p293 = scmp.ne.s32.totalorder %s281, %s282
    %p294 = scmp.eq.s32.totalorder %s23, 1
    %p295 = por %p293, %p294
    %p297 = scmp.ne.s32.totalorder %s282, %s296
    %p298 = scmp.eq.s32.totalorder %s23, 0
    %p299 = por %p297, %p298
    %s301 = sadd.s32 %s300, 1
    %p304 = scmp.eq.s32.totalorder %s17, 1
    %p305 = scmp.ne.s32.totalorder %s300, %s302
    %p306 = scmp.eq.s32.totalorder %s17, 0
    %p307 = por %p305, %p306
    %p308 = scmp.ne.s32.totalorder %s300, %s302
    %p309 = scmp.eq.s32.totalorder %s22, 1
    %p310 = por %p308, %p309
    %p311 = scmp.ne.s32.totalorder %s302, %s303
    %p312 = scmp.eq.s32.totalorder %s22, 0
    %p313 = por %p311, %p312
    %p314 = scmp.ne.s32.totalorder %s302, %s303
    %p315 = scmp.eq.s32.totalorder %s23, 1
    %p316 = por %p314, %p315
    %p318 = scmp.ne.s32.totalorder %s303, %s317
    %p319 = scmp.eq.s32.totalorder %s23, 0
    %p320 = por %p318, %p319
    %s322 = sadd.s32 %s321, 1
    %p325 = scmp.eq.s32.totalorder %s17, 1
    %p326 = scmp.ne.s32.totalorder %s321, %s323
    %p327 = scmp.eq.s32.totalorder %s17, 0
    %p328 = por %p326, %p327
    %p329 = scmp.ne.s32.totalorder %s321, %s323
    %p330 = scmp.eq.s32.totalorder %s22, 1
    %p331 = por %p329, %p330
    %p332 = scmp.ne.s32.totalorder %s323, %s324
    %p333 = scmp.eq.s32.totalorder %s22, 0
    %p334 = por %p332, %p333
    %p335 = scmp.ne.s32.totalorder %s323, %s324
    %p336 = scmp.eq.s32.totalorder %s23, 1
    %p337 = por %p335, %p336
    %p339 = scmp.ne.s32.totalorder %s324, %s338
    %p340 = scmp.eq.s32.totalorder %s23, 0
    %p341 = por %p339, %p340
    %s342 = ssub.s32 %s24, %s36
    %s343 = ssub.s32 %s25, %s32
    %s344 = sor.u32 %s342, %s343
    %p345 = scmp.eq.s32.totalorder %s344, 0
    %s347 = sadd.s32 %s346, 1
    %s348 = scalar_select %p345, %s346, %s347
    %p351 = pneg %p345
    %p352 = scmp.eq.s32.totalorder %s17, 1
    %p353 = por %p351, %p352
    %p354 = scmp.ne.s32.totalorder %s346, %s349
    %p355 = scmp.eq.s32.totalorder %s17, 0
    %p356 = por %p354, %p355
    %p357 = scmp.ne.s32.totalorder %s346, %s349
    %p358 = scmp.eq.s32.totalorder %s22, 1
    %p359 = por %p357, %p358
    %p360 = scmp.ne.s32.totalorder %s349, %s350
    %p361 = scmp.eq.s32.totalorder %s22, 0
    %p362 = por %p360, %p361
    %p363 = scmp.ne.s32.totalorder %s349, %s350
    %p364 = scmp.eq.s32.totalorder %s23, 1
    %p365 = por %p363, %p364
    %p367 = scmp.ne.s32.totalorder %s350, %s366
    %p368 = scmp.eq.s32.totalorder %s23, 0
    %p369 = por %p367, %p368
    %p370 = scmp.le.s32.totalorder 1, %s17
    %p371 = scmp.lt.s32.totalorder %s17, 3
    %p372 = pnand %p370, %p371
    %p373 = pneg %p372
    // Predicated region
    $region9: #{psp_head_forward.1} parent=5 // pred_check
      _
    $region10: #{psp_head_forward.1} parent=5 // pred_check_branch
      %375 = sbr.rel (%p372) target = $region12
    $region11: #{psp_head_forward.1} parent=5 // pred_region
      %s376 = ssub.s32 %s17, 1
      // Predicated region
      $region13: #{psp_head_forward.1} parent=11 // pred_check
        %p377 = pneg %p250
      $region14: #{psp_head_forward.1} parent=11 // pred_check_branch
        %379 = sbr.rel (%p377) target = $region16
      $region15: #{psp_head_forward.1} parent=11 // pred_region
        _
      $region16: #{psp_head_forward.1} parent=11 // pred_fallthru
        _
      // Predicated region
      $region17: #{psp_head_forward.1} parent=11 // pred_check
        %p380 = pneg %p271
      $region18: #{psp_head_forward.1} parent=11 // pred_check_branch
        %382 = sbr.rel (%p380) target = $region20
      $region19: #{psp_head_forward.1} parent=11 // pred_region
        _
      $region20: #{psp_head_forward.1} parent=11 // pred_fallthru
        _
      // Predicated region
      $region21: #{psp_head_forward.1} parent=11 // pred_check
        %p383 = pneg %p292
      $region22: #{psp_head_forward.1} parent=11 // pred_check_branch
        %385 = sbr.rel (%p383) target = $region24
      $region23: #{psp_head_forward.1} parent=11 // pred_region
        _
      $region24: #{psp_head_forward.1} parent=11 // pred_fallthru
        _
      // Predicated region
      $region25: #{psp_head_forward.1} parent=11 // pred_check
        %p386 = pneg %p313
      $region26: #{psp_head_forward.1} parent=11 // pred_check_branch
        %388 = sbr.rel (%p386) target = $region28
      $region27: #{psp_head_forward.1} parent=11 // pred_region
        _
      $region28: #{psp_head_forward.1} parent=11 // pred_fallthru
        _
      // Predicated region
      $region29: #{psp_head_forward.1} parent=11 // pred_check
        %p389 = pneg %p334
      $region30: #{psp_head_forward.1} parent=11 // pred_check_branch
        %391 = sbr.rel (%p389) target = $region32
      $region31: #{psp_head_forward.1} parent=11 // pred_region
        _
      $region32: #{psp_head_forward.1} parent=11 // pred_fallthru
        _
    $region12: #{psp_head_forward.1} parent=5 // pred_fallthru
      _
    %p392 = scmp.lt.s32.totalorder %s17, 2
    // Predicated region
    $region33: #{psp_head_forward.1} parent=5 // pred_check
      %p393 = pneg %p392
    $region34: #{psp_head_forward.1} parent=5 // pred_check_branch
      %395 = sbr.rel (%p393) target = $region36
    $region35: #{psp_head_forward.1} parent=5 // pred_region
      // Predicated region
      $region37: #{psp_head_forward.1} parent=35 // pred_check
        %p396 = pneg %p51
      $region38: #{psp_head_forward.1} parent=35 // pred_check_branch
        %398 = sbr.rel (%p396) target = $region40
      $region39: #{psp_head_forward.1} parent=35 // pred_region
        %s399 = smul.u32 16, %s25
        %p400 = scmp.lt.s32.totalorder %s24, 1
        %s401 = scalar_select %p400, %s24, 1
        %p402 = scmp.lt.s32.totalorder %s399, 15
        %s403 = scalar_select %p402, %s399, 15
        %s404 = smul.addr %s403, 2
        %s405 = smul.addr %s401, 32
        %s406 = sadd.s32 %s404, %s405
        %s407 = smul.addr %s406, 8
        %s408 = scalar_lea.vmem %s0, %s407
        %s409 = smul.u32 16, %s25
      $region40: #{psp_head_forward.1} parent=35 // pred_fallthru
        _
      // Predicated region
      $region41: #{psp_head_forward.1} parent=35 // pred_check
        %p410 = pneg %p87
      $region42: #{psp_head_forward.1} parent=35 // pred_check_branch
        %412 = sbr.rel (%p410) target = $region44
      $region43: #{psp_head_forward.1} parent=35 // pred_region
        %s413 = smul.u32 %s25, 16
        %s414 = ssub.s32 %s413, 1
        %p415 = scmp.gt.s32.totalorder %s414, 0
        %s416 = scalar_select %p415, %s414, 0
        %p417 = scmp.lt.s32.totalorder %s24, 1
        %s418 = scalar_select %p417, %s24, 1
        %p419 = scmp.lt.s32.totalorder %s416, 15
        %s420 = scalar_select %p419, %s416, 15
        %s421 = smul.addr %s420, 2
        %s422 = smul.addr %s418, 32
        %s423 = sadd.s32 %s421, %s422
        %s424 = smul.addr %s423, 8
        %s425 = scalar_lea.vmem %s1, %s424
        %s426 = smul.u32 %s25, 16
        %s427 = ssub.s32 %s426, 1
        %p428 = scmp.gt.s32.totalorder %s427, 0
        %s429 = scalar_select %p428, %s427, 0
      $region44: #{psp_head_forward.1} parent=35 // pred_fallthru
        _
      // Predicated region
      $region45: #{psp_head_forward.1} parent=35 // pred_check
        %p430 = pneg %p123
      $region46: #{psp_head_forward.1} parent=35 // pred_check_branch
        %432 = sbr.rel (%p430) target = $region48
      $region47: #{psp_head_forward.1} parent=35 // pred_region
        %s433 = sadd.s32 %s25, 1
        %s434 = smul.u32 %s433, 16
        %p435 = scmp.lt.s32.totalorder %s434, 15
        %s436 = scalar_select %p435, %s434, 15
        %p437 = scmp.lt.s32.totalorder %s24, 1
        %s438 = scalar_select %p437, %s24, 1
        %p439 = scmp.lt.s32.totalorder %s436, 15
        %s440 = scalar_select %p439, %s436, 15
        %s441 = smul.addr %s440, 2
        %s442 = smul.addr %s438, 32
        %s443 = sadd.s32 %s441, %s442
        %s444 = smul.addr %s443, 8
        %s445 = scalar_lea.vmem %s2, %s444
        %s446 = sadd.s32 %s25, 1
        %s447 = smul.u32 %s446, 16
        %p448 = scmp.lt.s32.totalorder %s447, 15
        %s449 = scalar_select %p448, %s447, 15
      $region48: #{psp_head_forward.1} parent=35 // pred_fallthru
        _
      // Predicated region
      $region49: #{psp_head_forward.1} parent=35 // pred_check
        %p450 = pneg %p151
      $region50: #{psp_head_forward.1} parent=35 // pred_check_branch
        %452 = sbr.rel (%p450) target = $region52
      $region51: #{psp_head_forward.1} parent=35 // pred_region
        %s453 = smul.u32 16, %s25
        %p454 = scmp.lt.s32.totalorder %s24, 1
        %s455 = scalar_select %p454, %s24, 1
        %p456 = scmp.lt.s32.totalorder %s453, 15
        %s457 = scalar_select %p456, %s453, 15
        %s458 = smul.addr %s457, 2
        %s459 = smul.addr %s455, 32
        %s460 = sadd.s32 %s458, %s459
        %s461 = smul.addr %s460, 8
        %s462 = scalar_lea.vmem %s3, %s461
        %s463 = smul.u32 16, %s25
      $region52: #{psp_head_forward.1} parent=35 // pred_fallthru
        _
      // Predicated region
      $region53: #{psp_head_forward.1} parent=35 // pred_check
        %p464 = pneg %p187
      $region54: #{psp_head_forward.1} parent=35 // pred_check_branch
        %466 = sbr.rel (%p464) target = $region56
      $region55: #{psp_head_forward.1} parent=35 // pred_region
        %s467 = smul.u32 %s25, 16
        %s468 = ssub.s32 %s467, 1
        %p469 = scmp.gt.s32.totalorder %s468, 0
        %s470 = scalar_select %p469, %s468, 0
        %p471 = scmp.lt.s32.totalorder %s24, 1
        %s472 = scalar_select %p471, %s24, 1
        %p473 = scmp.lt.s32.totalorder %s470, 15
        %s474 = scalar_select %p473, %s470, 15
        %s475 = smul.addr %s474, 2
        %s476 = smul.addr %s472, 32
        %s477 = sadd.s32 %s475, %s476
        %s478 = smul.addr %s477, 8
        %s479 = scalar_lea.vmem %s4, %s478
        %s480 = smul.u32 %s25, 16
        %s481 = ssub.s32 %s480, 1
        %p482 = scmp.gt.s32.totalorder %s481, 0
        %s483 = scalar_select %p482, %s481, 0
      $region56: #{psp_head_forward.1} parent=35 // pred_fallthru
        _
      // Predicated region
      $region57: #{psp_head_forward.1} parent=35 // pred_check
        %p484 = pneg %p223
      $region58: #{psp_head_forward.1} parent=35 // pred_check_branch
        %486 = sbr.rel (%p484) target = $region60
      $region59: #{psp_head_forward.1} parent=35 // pred_region
        %s487 = sadd.s32 %s25, 1
        %s488 = smul.u32 %s487, 16
        %p489 = scmp.lt.s32.totalorder %s488, 15
        %s490 = scalar_select %p489, %s488, 15
        %p491 = scmp.lt.s32.totalorder %s24, 1
        %s492 = scalar_select %p491, %s24, 1
        %p493 = scmp.lt.s32.totalorder %s490, 15
        %s494 = scalar_select %p493, %s490, 15
        %s495 = smul.addr %s494, 2
        %s496 = smul.addr %s492, 32
        %s497 = sadd.s32 %s495, %s496
        %s498 = smul.addr %s497, 8
        %s499 = scalar_lea.vmem %s5, %s498
        %s500 = sadd.s32 %s25, 1
        %s501 = smul.u32 %s500, 16
        %p502 = scmp.lt.s32.totalorder %s501, 15
        %s503 = scalar_select %p502, %s501, 15
      $region60: #{psp_head_forward.1} parent=35 // pred_fallthru
        _
    $region36: #{psp_head_forward.1} parent=5 // pred_fallthru
      _
    %p504 = scmp.le.s32.totalorder 1, %s17
    %p505 = scmp.lt.s32.totalorder %s17, 3
    %p506 = pnand %p504, %p505
    %p507 = pneg %p506
    // Predicated region
    $region61: #{psp_head_forward.1} parent=5 // pred_check
      _
    $region62: #{psp_head_forward.1} parent=5 // pred_check_branch
      %509 = sbr.rel (%p506) target = $region64
    $region63: #{psp_head_forward.1} parent=5 // pred_region
      %s510 = ssub.s32 %s17, 1
      %s511 = smul.u32 16, %s27
      %p512 = scmp.lt.s32.totalorder %s26, 1
      %s513 = scalar_select %p512, %s26, 1
      %p514 = scmp.lt.s32.totalorder %s511, 15
      %s515 = scalar_select %p514, %s511, 15
      %s516 = smul.addr %s515, 2
      %s517 = smul.addr %s513, 32
      %s518 = sadd.s32 %s516, %s517
      %s519 = smul.addr %s518, 8
      %s520 = scalar_lea.vmem %s0, %s519
      %p521 = pneg %p57
      %p522 = pneg %p54
      %s523 = smul.u32 %s27, 16
      %s524 = ssub.s32 %s523, 1
      %p525 = scmp.gt.s32.totalorder %s524, 0
      %s526 = scalar_select %p525, %s524, 0
      %p527 = scmp.lt.s32.totalorder %s26, 1
      %s528 = scalar_select %p527, %s26, 1
      %p529 = scmp.lt.s32.totalorder %s526, 15
      %s530 = scalar_select %p529, %s526, 15
      %s531 = smul.addr %s530, 2
      %s532 = smul.addr %s528, 32
      %s533 = sadd.s32 %s531, %s532
      %s534 = smul.addr %s533, 8
      %s535 = scalar_lea.vmem %s1, %s534
      %p536 = pneg %p93
      %p537 = pneg %p90
      %s538 = sadd.s32 %s27, 1
      %s539 = smul.u32 %s538, 16
      %p540 = scmp.lt.s32.totalorder %s539, 15
      %s541 = scalar_select %p540, %s539, 15
      %p542 = scmp.lt.s32.totalorder %s26, 1
      %s543 = scalar_select %p542, %s26, 1
      %p544 = scmp.lt.s32.totalorder %s541, 15
      %s545 = scalar_select %p544, %s541, 15
      %s546 = smul.addr %s545, 2
      %s547 = smul.addr %s543, 32
      %s548 = sadd.s32 %s546, %s547
      %s549 = smul.addr %s548, 8
      %s550 = scalar_lea.vmem %s2, %s549
      %p551 = pneg %p129
      %p552 = pneg %p126
      %s553 = smul.u32 16, %s27
      %p554 = scmp.lt.s32.totalorder %s26, 1
      %s555 = scalar_select %p554, %s26, 1
      %p556 = scmp.lt.s32.totalorder %s553, 15
      %s557 = scalar_select %p556, %s553, 15
      %s558 = smul.addr %s557, 2
      %s559 = smul.addr %s555, 32
      %s560 = sadd.s32 %s558, %s559
      %s561 = smul.addr %s560, 8
      %s562 = scalar_lea.vmem %s3, %s561
      %p563 = pneg %p157
      %p564 = pneg %p154
      %s565 = smul.u32 %s27, 16
      %s566 = ssub.s32 %s565, 1
      %p567 = scmp.gt.s32.totalorder %s566, 0
      %s568 = scalar_select %p567, %s566, 0
      %p569 = scmp.lt.s32.totalorder %s26, 1
      %s570 = scalar_select %p569, %s26, 1
      %p571 = scmp.lt.s32.totalorder %s568, 15
      %s572 = scalar_select %p571, %s568, 15
      %s573 = smul.addr %s572, 2
      %s574 = smul.addr %s570, 32
      %s575 = sadd.s32 %s573, %s574
      %s576 = smul.addr %s575, 8
      %s577 = scalar_lea.vmem %s4, %s576
      %p578 = pneg %p193
      %p579 = pneg %p190
      %s580 = sadd.s32 %s27, 1
      %s581 = smul.u32 %s580, 16
      %p582 = scmp.lt.s32.totalorder %s581, 15
      %s583 = scalar_select %p582, %s581, 15
      %p584 = scmp.lt.s32.totalorder %s26, 1
      %s585 = scalar_select %p584, %s26, 1
      %p586 = scmp.lt.s32.totalorder %s583, 15
      %s587 = scalar_select %p586, %s583, 15
      %s588 = smul.addr %s587, 2
      %s589 = smul.addr %s585, 32
      %s590 = sadd.s32 %s588, %s589
      %s591 = smul.addr %s590, 8
      %s592 = scalar_lea.vmem %s5, %s591
      %p593 = pneg %p229
      %p594 = pneg %p226
      %p595 = pneg %p250
      %p596 = pneg %p247
      %p597 = pneg %p271
      %p598 = pneg %p268
      %p599 = pneg %p292
      %p600 = pneg %p289
      %p601 = pneg %p313
      %p602 = pneg %p310
      %p603 = pneg %p334
      %p604 = pneg %p331
      %p605 = pneg %p362
      %p606 = pneg %p359
      %s607 = smul.u32 16, %s27
      %p608 = scmp.lt.s32.totalorder %s26, 1
      %s609 = scalar_select %p608, %s26, 1
      %p610 = scmp.lt.s32.totalorder %s607, 15
      %s611 = scalar_select %p610, %s607, 15
      %s612 = smul.addr %s611, 2
      %s613 = smul.addr %s609, 32
      %s614 = sadd.s32 %s612, %s613
      %s615 = smul.addr %s614, 8
      %s616 = scalar_lea.vmem %s11, %s615
      %s617 = smul.u32 16, %s27
      %p618 = scmp.lt.s32.totalorder %s26, 1
      %s619 = scalar_select %p618, %s26, 1
      %p620 = scmp.lt.s32.totalorder %s617, 15
      %s621 = scalar_select %p620, %s617, 15
      %s622 = smul.addr %s621, 2
      %s623 = smul.addr %s619, 32
      %s624 = sadd.s32 %s622, %s623
      %s625 = smul.addr %s624, 8
      %s626 = scalar_lea.vmem %s0, %s625
      %s627 = smul.u32 16, %s27
      %s628 = smul.u32 %s27, 16
      %s629 = ssub.s32 %s628, 1
      %p630 = scmp.gt.s32.totalorder %s629, 0
      %s631 = scalar_select %p630, %s629, 0
      %p632 = scmp.lt.s32.totalorder %s26, 1
      %s633 = scalar_select %p632, %s26, 1
      %p634 = scmp.lt.s32.totalorder %s631, 15
      %s635 = scalar_select %p634, %s631, 15
      %s636 = smul.addr %s635, 2
      %s637 = smul.addr %s633, 32
      %s638 = sadd.s32 %s636, %s637
      %s639 = smul.addr %s638, 8
      %s640 = scalar_lea.vmem %s1, %s639
      %s641 = smul.u32 %s27, 16
      %s642 = ssub.s32 %s641, 1
      %p643 = scmp.gt.s32.totalorder %s642, 0
      %s644 = scalar_select %p643, %s642, 0
      %s645 = sadd.s32 %s27, 1
      %s646 = smul.u32 %s645, 16
      %p647 = scmp.lt.s32.totalorder %s646, 15
      %s648 = scalar_select %p647, %s646, 15
      %p649 = scmp.lt.s32.totalorder %s26, 1
      %s650 = scalar_select %p649, %s26, 1
      %p651 = scmp.lt.s32.totalorder %s648, 15
      %s652 = scalar_select %p651, %s648, 15
      %s653 = smul.addr %s652, 2
      %s654 = smul.addr %s650, 32
      %s655 = sadd.s32 %s653, %s654
      %s656 = smul.addr %s655, 8
      %s657 = scalar_lea.vmem %s2, %s656
      %s658 = sadd.s32 %s27, 1
      %s659 = smul.u32 %s658, 16
      %p660 = scmp.lt.s32.totalorder %s659, 15
      %s661 = scalar_select %p660, %s659, 15
      %s662 = smul.u32 16, %s27
      %p663 = scmp.lt.s32.totalorder %s26, 1
      %s664 = scalar_select %p663, %s26, 1
      %p665 = scmp.lt.s32.totalorder %s662, 15
      %s666 = scalar_select %p665, %s662, 15
      %s667 = smul.addr %s666, 2
      %s668 = smul.addr %s664, 32
      %s669 = sadd.s32 %s667, %s668
      %s670 = smul.addr %s669, 8
      %s671 = scalar_lea.vmem %s3, %s670
      %s672 = smul.u32 16, %s27
      %s673 = smul.u32 %s27, 16
      %s674 = ssub.s32 %s673, 1
      %p675 = scmp.gt.s32.totalorder %s674, 0
      %s676 = scalar_select %p675, %s674, 0
      %p677 = scmp.lt.s32.totalorder %s26, 1
      %s678 = scalar_select %p677, %s26, 1
      %p679 = scmp.lt.s32.totalorder %s676, 15
      %s680 = scalar_select %p679, %s676, 15
      %s681 = smul.addr %s680, 2
      %s682 = smul.addr %s678, 32
      %s683 = sadd.s32 %s681, %s682
      %s684 = smul.addr %s683, 8
      %s685 = scalar_lea.vmem %s4, %s684
      %s686 = smul.u32 %s27, 16
      %s687 = ssub.s32 %s686, 1
      %p688 = scmp.gt.s32.totalorder %s687, 0
      %s689 = scalar_select %p688, %s687, 0
      %s690 = sadd.s32 %s27, 1
      %s691 = smul.u32 %s690, 16
      %p692 = scmp.lt.s32.totalorder %s691, 15
      %s693 = scalar_select %p692, %s691, 15
      %p694 = scmp.lt.s32.totalorder %s26, 1
      %s695 = scalar_select %p694, %s26, 1
      %p696 = scmp.lt.s32.totalorder %s693, 15
      %s697 = scalar_select %p696, %s693, 15
      %s698 = smul.addr %s697, 2
      %s699 = smul.addr %s695, 32
      %s700 = sadd.s32 %s698, %s699
      %s701 = smul.addr %s700, 8
      %s702 = scalar_lea.vmem %s5, %s701
      %s703 = sadd.s32 %s27, 1
      %s704 = smul.u32 %s703, 16
      %p705 = scmp.lt.s32.totalorder %s704, 15
      %s706 = scalar_select %p705, %s704, 15
      %s707 = smul.u32 16, %s27
      %p708 = scmp.lt.s32.totalorder %s26, 1
      %s709 = scalar_select %p708, %s26, 1
      %p710 = scmp.lt.s32.totalorder %s707, 15
      %s711 = scalar_select %p710, %s707, 15
      %s712 = smul.addr %s711, 2
      %s713 = smul.addr %s709, 32
      %s714 = sadd.s32 %s712, %s713
      %s715 = smul.addr %s714, 8
      %s716 = scalar_lea.vmem %s11, %s715
      %s717 = smul.u32 16, %s27
      %p718 = scmp.eq.s32.totalorder %s27, 0
      %s719 = scalar_select %p718, 0.0, 1.0
      %vm720 = vcmask 253952
      %721 = vst.msk [vmem:[#allocation2] sm:$0x1] %vm720, 0.0
      %722 = vst.msk [vmem:[#allocation2 + $0x121] sm:$0x1] %vm720, 0.0
      %v723 = vld [vmem:[%s640] sm:$0xff]
      %v724 = vld [vmem:[%s640 + $0x8] sm:$0xff]
      %v725 = vstv %s719
      %v726 = vmul.f32 %v723, %v725
      %v727 = vmul.f32 %v724, %v725
      %vm728 = vcmask 130048
      %729 = vst.msk [vmem:[#allocation2 + $0x1] sm:$0xff] %vm728, %v726
      %730 = vst.msk [vmem:[#allocation2 + $0x9] sm:$0xff] %vm728, %v727
      %v731 = vld [vmem:[%s685] sm:$0xff]
      %v732 = vld [vmem:[%s685 + $0x8] sm:$0xff]
      %v733 = vmul.f32 %v731, %v725
      %v734 = vmul.f32 %v732, %v725
      %737 = vrot.lane.b32.xlu0 %v733, 16
      %v738 = vpop.permute.xlu0 %737
      %739 = vrot.lane.b32.xlu0 %v734, 16
      %v740 = vpop.permute.xlu0 %739
      %vm743 = vcmask 261248
      %744 = vst.msk [vmem:[#allocation2 + $0x1] sm:$0xff] %vm743, %v738
      %745 = vst.msk [vmem:[#allocation2 + $0x9] sm:$0xff] %vm743, %v740
      %v746 = vld [vmem:[%s626] sm:$0xff]
      %v747 = vld [vmem:[%s626 + $0x8] sm:$0xff]
      %v748 = vld [vmem:[%s626 + $0x10] sm:$0xff]
      %v749 = vld [vmem:[%s626 + $0x18] sm:$0xff]
      %v750 = vld [vmem:[%s626 + $0x20] sm:$0xff]
      %v751 = vld [vmem:[%s626 + $0x28] sm:$0xff]
      %v752 = vld [vmem:[%s626 + $0x30] sm:$0xff]
      %v753 = vld [vmem:[%s626 + $0x38] sm:$0xff]
      %v754 = vld [vmem:[%s626 + $0x40] sm:$0xff]
      %v755 = vld [vmem:[%s626 + $0x48] sm:$0xff]
      %v756 = vld [vmem:[%s626 + $0x50] sm:$0xff]
      %v757 = vld [vmem:[%s626 + $0x58] sm:$0xff]
      %v758 = vld [vmem:[%s626 + $0x60] sm:$0xff]
      %v759 = vld [vmem:[%s626 + $0x68] sm:$0xff]
      %v760 = vld [vmem:[%s626 + $0x70] sm:$0xff]
      %v761 = vld [vmem:[%s626 + $0x78] sm:$0xff]
      %v762 = vld [vmem:[%s626 + $0x80] sm:$0xff]
      %v763 = vld [vmem:[%s626 + $0x88] sm:$0xff]
      %v764 = vld [vmem:[%s626 + $0x90] sm:$0xff]
      %v765 = vld [vmem:[%s626 + $0x98] sm:$0xff]
      %v766 = vld [vmem:[%s626 + $0xa0] sm:$0xff]
      %v767 = vld [vmem:[%s626 + $0xa8] sm:$0xff]
      %v768 = vld [vmem:[%s626 + $0xb0] sm:$0xff]
      %v769 = vld [vmem:[%s626 + $0xb8] sm:$0xff]
      %v770 = vld [vmem:[%s626 + $0xc0] sm:$0xff]
      %v771 = vld [vmem:[%s626 + $0xc8] sm:$0xff]
      %v772 = vld [vmem:[%s626 + $0xd0] sm:$0xff]
      %v773 = vld [vmem:[%s626 + $0xd8] sm:$0xff]
      %v774 = vld [vmem:[%s626 + $0xe0] sm:$0xff]
      %v775 = vld [vmem:[%s626 + $0xe8] sm:$0xff]
      %v776 = vld [vmem:[%s626 + $0xf0] sm:$0xff]
      %v777 = vld [vmem:[%s626 + $0xf8] sm:$0xff]
      %778 = vst.msk [vmem:[#allocation2 + $0x11] sm:$0xff] %vm728, %v746
      %779 = vst.msk [vmem:[#allocation2 + $0x19] sm:$0xff] %vm728, %v747
      %780 = vst.msk [vmem:[#allocation2 + $0x21] sm:$0xff] %vm728, %v748
      %781 = vst.msk [vmem:[#allocation2 + $0x29] sm:$0xff] %vm728, %v749
      %782 = vst.msk [vmem:[#allocation2 + $0x31] sm:$0xff] %vm728, %v750
      %783 = vst.msk [vmem:[#allocation2 + $0x39] sm:$0xff] %vm728, %v751
      %784 = vst.msk [vmem:[#allocation2 + $0x41] sm:$0xff] %vm728, %v752
      %785 = vst.msk [vmem:[#allocation2 + $0x49] sm:$0xff] %vm728, %v753
      %786 = vst.msk [vmem:[#allocation2 + $0x51] sm:$0xff] %vm728, %v754
      %787 = vst.msk [vmem:[#allocation2 + $0x59] sm:$0xff] %vm728, %v755
      %788 = vst.msk [vmem:[#allocation2 + $0x61] sm:$0xff] %vm728, %v756
      %789 = vst.msk [vmem:[#allocation2 + $0x69] sm:$0xff] %vm728, %v757
      %790 = vst.msk [vmem:[#allocation2 + $0x71] sm:$0xff] %vm728, %v758
      %791 = vst.msk [vmem:[#allocation2 + $0x79] sm:$0xff] %vm728, %v759
      %792 = vst.msk [vmem:[#allocation2 + $0x81] sm:$0xff] %vm728, %v760
      %793 = vst.msk [vmem:[#allocation2 + $0x89] sm:$0xff] %vm728, %v761
      %794 = vst.msk [vmem:[#allocation2 + $0x91] sm:$0xff] %vm728, %v762
      %795 = vst.msk [vmem:[#allocation2 + $0x99] sm:$0xff] %vm728, %v763
      %796 = vst.msk [vmem:[#allocation2 + $0xa1] sm:$0xff] %vm728, %v764
      %797 = vst.msk [vmem:[#allocation2 + $0xa9] sm:$0xff] %vm728, %v765
      %798 = vst.msk [vmem:[#allocation2 + $0xb1] sm:$0xff] %vm728, %v766
      %799 = vst.msk [vmem:[#allocation2 + $0xb9] sm:$0xff] %vm728, %v767
      %800 = vst.msk [vmem:[#allocation2 + $0xc1] sm:$0xff] %vm728, %v768
      %801 = vst.msk [vmem:[#allocation2 + $0xc9] sm:$0xff] %vm728, %v769
      %802 = vst.msk [vmem:[#allocation2 + $0xd1] sm:$0xff] %vm728, %v770
      %803 = vst.msk [vmem:[#allocation2 + $0xd9] sm:$0xff] %vm728, %v771
      %804 = vst.msk [vmem:[#allocation2 + $0xe1] sm:$0xff] %vm728, %v772
      %805 = vst.msk [vmem:[#allocation2 + $0xe9] sm:$0xff] %vm728, %v773
      %806 = vst.msk [vmem:[#allocation2 + $0xf1] sm:$0xff] %vm728, %v774
      %807 = vst.msk [vmem:[#allocation2 + $0xf9] sm:$0xff] %vm728, %v775
      %808 = vst.msk [vmem:[#allocation2 + $0x101] sm:$0xff] %vm728, %v776
      %809 = vst.msk [vmem:[#allocation2 + $0x109] sm:$0xff] %vm728, %v777
      %v810 = vld [vmem:[%s671] sm:$0xff]
      %v811 = vld [vmem:[%s671 + $0x8] sm:$0xff]
      %v812 = vld [vmem:[%s671 + $0x10] sm:$0xff]
      %v813 = vld [vmem:[%s671 + $0x18] sm:$0xff]
      %v814 = vld [vmem:[%s671 + $0x20] sm:$0xff]
      %v815 = vld [vmem:[%s671 + $0x28] sm:$0xff]
      %v816 = vld [vmem:[%s671 + $0x30] sm:$0xff]
      %v817 = vld [vmem:[%s671 + $0x38] sm:$0xff]
      %v818 = vld [vmem:[%s671 + $0x40] sm:$0xff]
      %v819 = vld [vmem:[%s671 + $0x48] sm:$0xff]
      %v820 = vld [vmem:[%s671 + $0x50] sm:$0xff]
      %v821 = vld [vmem:[%s671 + $0x58] sm:$0xff]
      %v822 = vld [vmem:[%s671 + $0x60] sm:$0xff]
      %v823 = vld [vmem:[%s671 + $0x68] sm:$0xff]
      %v824 = vld [vmem:[%s671 + $0x70] sm:$0xff]
      %v825 = vld [vmem:[%s671 + $0x78] sm:$0xff]
      %v826 = vld [vmem:[%s671 + $0x80] sm:$0xff]
      %v827 = vld [vmem:[%s671 + $0x88] sm:$0xff]
      %v828 = vld [vmem:[%s671 + $0x90] sm:$0xff]
      %v829 = vld [vmem:[%s671 + $0x98] sm:$0xff]
      %v830 = vld [vmem:[%s671 + $0xa0] sm:$0xff]
      %v831 = vld [vmem:[%s671 + $0xa8] sm:$0xff]
      %v832 = vld [vmem:[%s671 + $0xb0] sm:$0xff]
      %v833 = vld [vmem:[%s671 + $0xb8] sm:$0xff]
      %v834 = vld [vmem:[%s671 + $0xc0] sm:$0xff]
      %v835 = vld [vmem:[%s671 + $0xc8] sm:$0xff]
      %v836 = vld [vmem:[%s671 + $0xd0] sm:$0xff]
      %v837 = vld [vmem:[%s671 + $0xd8] sm:$0xff]
      %v838 = vld [vmem:[%s671 + $0xe0] sm:$0xff]
      %v839 = vld [vmem:[%s671 + $0xe8] sm:$0xff]
      %v840 = vld [vmem:[%s671 + $0xf0] sm:$0xff]
      %v841 = vld [vmem:[%s671 + $0xf8] sm:$0xff]
      %874 = vrot.lane.b32.xlu0 %v810, 16
      %v875 = vpop.permute.xlu0 %874
      %876 = vrot.lane.b32.xlu0 %v811, 16
      %v877 = vpop.permute.xlu0 %876
      %878 = vrot.lane.b32.xlu0 %v812, 16
      %v879 = vpop.permute.xlu0 %878
      %880 = vrot.lane.b32.xlu0 %v813, 16
      %v881 = vpop.permute.xlu0 %880
      %882 = vrot.lane.b32.xlu0 %v814, 16
      %v883 = vpop.permute.xlu0 %882
      %884 = vrot.lane.b32.xlu0 %v815, 16
      %v885 = vpop.permute.xlu0 %884
      %886 = vrot.lane.b32.xlu0 %v816, 16
      %v887 = vpop.permute.xlu0 %886
      %888 = vrot.lane.b32.xlu0 %v817, 16
      %v889 = vpop.permute.xlu0 %888
      %890 = vrot.lane.b32.xlu0 %v818, 16
      %v891 = vpop.permute.xlu0 %890
      %892 = vrot.lane.b32.xlu0 %v819, 16
      %v893 = vpop.permute.xlu0 %892
      %894 = vrot.lane.b32.xlu0 %v820, 16
      %v895 = vpop.permute.xlu0 %894
      %896 = vrot.lane.b32.xlu0 %v821, 16
      %v897 = vpop.permute.xlu0 %896
      %898 = vrot.lane.b32.xlu0 %v822, 16
      %v899 = vpop.permute.xlu0 %898
      %900 = vrot.lane.b32.xlu0 %v823, 16
      %v901 = vpop.permute.xlu0 %900
      %902 = vrot.lane.b32.xlu0 %v824, 16
      %v903 = vpop.permute.xlu0 %902
      %904 = vrot.lane.b32.xlu0 %v825, 16
      %v905 = vpop.permute.xlu0 %904
      %906 = vrot.lane.b32.xlu0 %v826, 16
      %v907 = vpop.permute.xlu0 %906
      %908 = vrot.lane.b32.xlu0 %v827, 16
      %v909 = vpop.permute.xlu0 %908
      %910 = vrot.lane.b32.xlu0 %v828, 16
      %v911 = vpop.permute.xlu0 %910
      %912 = vrot.lane.b32.xlu0 %v829, 16
      %v913 = vpop.permute.xlu0 %912
      %914 = vrot.lane.b32.xlu0 %v830, 16
      %v915 = vpop.permute.xlu0 %914
      %916 = vrot.lane.b32.xlu0 %v831, 16
      %v917 = vpop.permute.xlu0 %916
      %918 = vrot.lane.b32.xlu0 %v832, 16
      %v919 = vpop.permute.xlu0 %918
      %920 = vrot.lane.b32.xlu0 %v833, 16
      %v921 = vpop.permute.xlu0 %920
      %922 = vrot.lane.b32.xlu0 %v834, 16
      %v923 = vpop.permute.xlu0 %922
      %924 = vrot.lane.b32.xlu0 %v835, 16
      %v925 = vpop.permute.xlu0 %924
      %926 = vrot.lane.b32.xlu0 %v836, 16
      %v927 = vpop.permute.xlu0 %926
      %928 = vrot.lane.b32.xlu0 %v837, 16
      %v929 = vpop.permute.xlu0 %928
      %930 = vrot.lane.b32.xlu0 %v838, 16
      %v931 = vpop.permute.xlu0 %930
      %932 = vrot.lane.b32.xlu0 %v839, 16
      %v933 = vpop.permute.xlu0 %932
      %934 = vrot.lane.b32.xlu0 %v840, 16
      %v935 = vpop.permute.xlu0 %934
      %936 = vrot.lane.b32.xlu0 %v841, 16
      %v937 = vpop.permute.xlu0 %936
      %970 = vst.msk [vmem:[#allocation2 + $0x11] sm:$0xff] %vm743, %v875
      %971 = vst.msk [vmem:[#allocation2 + $0x19] sm:$0xff] %vm743, %v877
      %972 = vst.msk [vmem:[#allocation2 + $0x21] sm:$0xff] %vm743, %v879
      %973 = vst.msk [vmem:[#allocation2 + $0x29] sm:$0xff] %vm743, %v881
      %974 = vst.msk [vmem:[#allocation2 + $0x31] sm:$0xff] %vm743, %v883
      %975 = vst.msk [vmem:[#allocation2 + $0x39] sm:$0xff] %vm743, %v885
      %976 = vst.msk [vmem:[#allocation2 + $0x41] sm:$0xff] %vm743, %v887
      %977 = vst.msk [vmem:[#allocation2 + $0x49] sm:$0xff] %vm743, %v889
      %978 = vst.msk [vmem:[#allocation2 + $0x51] sm:$0xff] %vm743, %v891
      %979 = vst.msk [vmem:[#allocation2 + $0x59] sm:$0xff] %vm743, %v893
      %980 = vst.msk [vmem:[#allocation2 + $0x61] sm:$0xff] %vm743, %v895
      %981 = vst.msk [vmem:[#allocation2 + $0x69] sm:$0xff] %vm743, %v897
      %982 = vst.msk [vmem:[#allocation2 + $0x71] sm:$0xff] %vm743, %v899
      %983 = vst.msk [vmem:[#allocation2 + $0x79] sm:$0xff] %vm743, %v901
      %984 = vst.msk [vmem:[#allocation2 + $0x81] sm:$0xff] %vm743, %v903
      %985 = vst.msk [vmem:[#allocation2 + $0x89] sm:$0xff] %vm743, %v905
      %986 = vst.msk [vmem:[#allocation2 + $0x91] sm:$0xff] %vm743, %v907
      %987 = vst.msk [vmem:[#allocation2 + $0x99] sm:$0xff] %vm743, %v909
      %988 = vst.msk [vmem:[#allocation2 + $0xa1] sm:$0xff] %vm743, %v911
      %989 = vst.msk [vmem:[#allocation2 + $0xa9] sm:$0xff] %vm743, %v913
      %990 = vst.msk [vmem:[#allocation2 + $0xb1] sm:$0xff] %vm743, %v915
      %991 = vst.msk [vmem:[#allocation2 + $0xb9] sm:$0xff] %vm743, %v917
      %992 = vst.msk [vmem:[#allocation2 + $0xc1] sm:$0xff] %vm743, %v919
      %993 = vst.msk [vmem:[#allocation2 + $0xc9] sm:$0xff] %vm743, %v921
      %994 = vst.msk [vmem:[#allocation2 + $0xd1] sm:$0xff] %vm743, %v923
      %995 = vst.msk [vmem:[#allocation2 + $0xd9] sm:$0xff] %vm743, %v925
      %996 = vst.msk [vmem:[#allocation2 + $0xe1] sm:$0xff] %vm743, %v927
      %997 = vst.msk [vmem:[#allocation2 + $0xe9] sm:$0xff] %vm743, %v929
      %998 = vst.msk [vmem:[#allocation2 + $0xf1] sm:$0xff] %vm743, %v931
      %999 = vst.msk [vmem:[#allocation2 + $0xf9] sm:$0xff] %vm743, %v933
      %1000 = vst.msk [vmem:[#allocation2 + $0x101] sm:$0xff] %vm743, %v935
      %1001 = vst.msk [vmem:[#allocation2 + $0x109] sm:$0xff] %vm743, %v937
      %v1002 = vld [vmem:[%s657] sm:$0xff]
      %v1003 = vld [vmem:[%s657 + $0x8] sm:$0xff]
      %v1004 = vmul.f32 %v1002, %v725
      %v1005 = vmul.f32 %v1003, %v725
      %1006 = vst.msk [vmem:[#allocation2 + $0x111] sm:$0xff] %vm728, %v1004
      %1007 = vst.msk [vmem:[#allocation2 + $0x119] sm:$0xff] %vm728, %v1005
      %v1008 = vld [vmem:[%s702] sm:$0xff]
      %v1009 = vld [vmem:[%s702 + $0x8] sm:$0xff]
      %v1010 = vmul.f32 %v1008, %v725
      %v1011 = vmul.f32 %v1009, %v725
      %1014 = vrot.lane.b32.xlu0 %v1010, 16
      %v1015 = vpop.permute.xlu0 %1014
      %1016 = vrot.lane.b32.xlu0 %v1011, 16
      %v1017 = vpop.permute.xlu0 %1016
      %1020 = vst.msk [vmem:[#allocation2 + $0x111] sm:$0xff] %vm743, %v1015
      %1021 = vst.msk [vmem:[#allocation2 + $0x119] sm:$0xff] %vm743, %v1017
      %v1022 = vlaneseq
      %v1023 = vshrl.u32 %v1022, 7
      %v1024 = vadd.s32 %v1023, 8
      %v1025 = vadd.s32 %v1023, 16
      %v1026 = vadd.s32 %v1023, 24
      %v1027 = vadd.s32 %v1023, 32
      %v1028 = vadd.s32 %v1023, 40
      %v1029 = vadd.s32 %v1023, 48
      %v1030 = vadd.s32 %v1023, 56
      %v1031 = vadd.s32 %v1023, 64
      %v1032 = vadd.s32 %v1023, 72
      %v1033 = vadd.s32 %v1023, 80
      %v1034 = vadd.s32 %v1023, 88
      %v1035 = vadd.s32 %v1023, 96
      %v1036 = vadd.s32 %v1023, 104
      %v1037 = vadd.s32 %v1023, 112
      %v1038 = vadd.s32 %v1023, 120
      %v1039 = vadd.s32 %v1023, 128
      %v1040 = vadd.s32 %v1023, 136
      %v1041 = vadd.s32 %v1023, 144
      %v1042 = vadd.s32 %v1023, 152
      %v1043 = vadd.s32 %v1023, 160
      %v1044 = vadd.s32 %v1023, 168
      %v1045 = vadd.s32 %v1023, 176
      %v1046 = vadd.s32 %v1023, 184
      %v1047 = vadd.s32 %v1023, 192
      %v1048 = vadd.s32 %v1023, 200
      %v1049 = vadd.s32 %v1023, 208
      %v1050 = vadd.s32 %v1023, 216
      %v1051 = vadd.s32 %v1023, 224
      %v1052 = vadd.s32 %v1023, 232
      %v1053 = vadd.s32 %v1023, 240
      %v1054 = vadd.s32 %v1023, 248
      %vm1055 = vcmp.lt.s32.totalorder %v1023, 0
      %v1056 = vsub.s32 0, %v1023
      %v1057 = vsel %vm1055, %v1056, %v1023
      %v1058 = vshrl.u32 %v1057, 4
      %v1059 = vand.u32 %v1057, 15
      %v1060 = vsub.s32 0, %v1059
      %v1061 = vsel %vm1055, %v1060, %v1059
      %vm1062 = vcmp.lt.s32.totalorder %v1024, 0
      %v1063 = vsub.s32 0, %v1024
      %v1064 = vsel %vm1062, %v1063, %v1024
      %v1065 = vshrl.u32 %v1064, 4
      %v1066 = vand.u32 %v1064, 15
      %v1067 = vsub.s32 0, %v1066
      %v1068 = vsel %vm1062, %v1067, %v1066
      %vm1069 = vcmp.lt.s32.totalorder %v1025, 0
      %v1070 = vsub.s32 0, %v1025
      %v1071 = vsel %vm1069, %v1070, %v1025
      %v1072 = vshrl.u32 %v1071, 4
      %v1073 = vand.u32 %v1071, 15
      %v1074 = vsub.s32 0, %v1073
      %v1075 = vsel %vm1069, %v1074, %v1073
      %vm1076 = vcmp.lt.s32.totalorder %v1026, 0
      %v1077 = vsub.s32 0, %v1026
      %v1078 = vsel %vm1076, %v1077, %v1026
      %v1079 = vshrl.u32 %v1078, 4
      %v1080 = vand.u32 %v1078, 15
      %v1081 = vsub.s32 0, %v1080
      %v1082 = vsel %vm1076, %v1081, %v1080
      %vm1083 = vcmp.lt.s32.totalorder %v1027, 0
      %v1084 = vsub.s32 0, %v1027
      %v1085 = vsel %vm1083, %v1084, %v1027
      %v1086 = vshrl.u32 %v1085, 4
      %v1087 = vand.u32 %v1085, 15
      %v1088 = vsub.s32 0, %v1087
      %v1089 = vsel %vm1083, %v1088, %v1087
      %vm1090 = vcmp.lt.s32.totalorder %v1028, 0
      %v1091 = vsub.s32 0, %v1028
      %v1092 = vsel %vm1090, %v1091, %v1028
      %v1093 = vshrl.u32 %v1092, 4
      %v1094 = vand.u32 %v1092, 15
      %v1095 = vsub.s32 0, %v1094
      %v1096 = vsel %vm1090, %v1095, %v1094
      %vm1097 = vcmp.lt.s32.totalorder %v1029, 0
      %v1098 = vsub.s32 0, %v1029
      %v1099 = vsel %vm1097, %v1098, %v1029
      %v1100 = vshrl.u32 %v1099, 4
      %v1101 = vand.u32 %v1099, 15
      %v1102 = vsub.s32 0, %v1101
      %v1103 = vsel %vm1097, %v1102, %v1101
      %vm1104 = vcmp.lt.s32.totalorder %v1030, 0
      %v1105 = vsub.s32 0, %v1030
      %v1106 = vsel %vm1104, %v1105, %v1030
      %v1107 = vshrl.u32 %v1106, 4
      %v1108 = vand.u32 %v1106, 15
      %v1109 = vsub.s32 0, %v1108
      %v1110 = vsel %vm1104, %v1109, %v1108
      %vm1111 = vcmp.lt.s32.totalorder %v1031, 0
      %v1112 = vsub.s32 0, %v1031
      %v1113 = vsel %vm1111, %v1112, %v1031
      %v1114 = vshrl.u32 %v1113, 4
      %v1115 = vand.u32 %v1113, 15
      %v1116 = vsub.s32 0, %v1115
      %v1117 = vsel %vm1111, %v1116, %v1115
      %vm1118 = vcmp.lt.s32.totalorder %v1032, 0
      %v1119 = vsub.s32 0, %v1032
      %v1120 = vsel %vm1118, %v1119, %v1032
      %v1121 = vshrl.u32 %v1120, 4
      %v1122 = vand.u32 %v1120, 15
      %v1123 = vsub.s32 0, %v1122
      %v1124 = vsel %vm1118, %v1123, %v1122
      %vm1125 = vcmp.lt.s32.totalorder %v1033, 0
      %v1126 = vsub.s32 0, %v1033
      %v1127 = vsel %vm1125, %v1126, %v1033
      %v1128 = vshrl.u32 %v1127, 4
      %v1129 = vand.u32 %v1127, 15
      %v1130 = vsub.s32 0, %v1129
      %v1131 = vsel %vm1125, %v1130, %v1129
      %vm1132 = vcmp.lt.s32.totalorder %v1034, 0
      %v1133 = vsub.s32 0, %v1034
      %v1134 = vsel %vm1132, %v1133, %v1034
      %v1135 = vshrl.u32 %v1134, 4
      %v1136 = vand.u32 %v1134, 15
      %v1137 = vsub.s32 0, %v1136
      %v1138 = vsel %vm1132, %v1137, %v1136
      %vm1139 = vcmp.lt.s32.totalorder %v1035, 0
      %v1140 = vsub.s32 0, %v1035
      %v1141 = vsel %vm1139, %v1140, %v1035
      %v1142 = vshrl.u32 %v1141, 4
      %v1143 = vand.u32 %v1141, 15
      %v1144 = vsub.s32 0, %v1143
      %v1145 = vsel %vm1139, %v1144, %v1143
      %vm1146 = vcmp.lt.s32.totalorder %v1036, 0
      %v1147 = vsub.s32 0, %v1036
      %v1148 = vsel %vm1146, %v1147, %v1036
      %v1149 = vshrl.u32 %v1148, 4
      %v1150 = vand.u32 %v1148, 15
      %v1151 = vsub.s32 0, %v1150
      %v1152 = vsel %vm1146, %v1151, %v1150
      %vm1153 = vcmp.lt.s32.totalorder %v1037, 0
      %v1154 = vsub.s32 0, %v1037
      %v1155 = vsel %vm1153, %v1154, %v1037
      %v1156 = vshrl.u32 %v1155, 4
      %v1157 = vand.u32 %v1155, 15
      %v1158 = vsub.s32 0, %v1157
      %v1159 = vsel %vm1153, %v1158, %v1157
      %vm1160 = vcmp.lt.s32.totalorder %v1038, 0
      %v1161 = vsub.s32 0, %v1038
      %v1162 = vsel %vm1160, %v1161, %v1038
      %v1163 = vshrl.u32 %v1162, 4
      %v1164 = vand.u32 %v1162, 15
      %v1165 = vsub.s32 0, %v1164
      %v1166 = vsel %vm1160, %v1165, %v1164
      %vm1167 = vcmp.lt.s32.totalorder %v1039, 0
      %v1168 = vsub.s32 0, %v1039
      %v1169 = vsel %vm1167, %v1168, %v1039
      %v1170 = vshrl.u32 %v1169, 4
      %v1171 = vand.u32 %v1169, 15
      %v1172 = vsub.s32 0, %v1171
      %v1173 = vsel %vm1167, %v1172, %v1171
      %vm1174 = vcmp.lt.s32.totalorder %v1040, 0
      %v1175 = vsub.s32 0, %v1040
      %v1176 = vsel %vm1174, %v1175, %v1040
      %v1177 = vshrl.u32 %v1176, 4
      %v1178 = vand.u32 %v1176, 15
      %v1179 = vsub.s32 0, %v1178
      %v1180 = vsel %vm1174, %v1179, %v1178
      %vm1181 = vcmp.lt.s32.totalorder %v1041, 0
      %v1182 = vsub.s32 0, %v1041
      %v1183 = vsel %vm1181, %v1182, %v1041
      %v1184 = vshrl.u32 %v1183, 4
      %v1185 = vand.u32 %v1183, 15
      %v1186 = vsub.s32 0, %v1185
      %v1187 = vsel %vm1181, %v1186, %v1185
      %vm1188 = vcmp.lt.s32.totalorder %v1042, 0
      %v1189 = vsub.s32 0, %v1042
      %v1190 = vsel %vm1188, %v1189, %v1042
      %v1191 = vshrl.u32 %v1190, 4
      %v1192 = vand.u32 %v1190, 15
      %v1193 = vsub.s32 0, %v1192
      %v1194 = vsel %vm1188, %v1193, %v1192
      %vm1195 = vcmp.lt.s32.totalorder %v1043, 0
      %v1196 = vsub.s32 0, %v1043
      %v1197 = vsel %vm1195, %v1196, %v1043
      %v1198 = vshrl.u32 %v1197, 4
      %v1199 = vand.u32 %v1197, 15
      %v1200 = vsub.s32 0, %v1199
      %v1201 = vsel %vm1195, %v1200, %v1199
      %vm1202 = vcmp.lt.s32.totalorder %v1044, 0
      %v1203 = vsub.s32 0, %v1044
      %v1204 = vsel %vm1202, %v1203, %v1044
      %v1205 = vshrl.u32 %v1204, 4
      %v1206 = vand.u32 %v1204, 15
      %v1207 = vsub.s32 0, %v1206
      %v1208 = vsel %vm1202, %v1207, %v1206
      %vm1209 = vcmp.lt.s32.totalorder %v1045, 0
      %v1210 = vsub.s32 0, %v1045
      %v1211 = vsel %vm1209, %v1210, %v1045
      %v1212 = vshrl.u32 %v1211, 4
      %v1213 = vand.u32 %v1211, 15
      %v1214 = vsub.s32 0, %v1213
      %v1215 = vsel %vm1209, %v1214, %v1213
      %vm1216 = vcmp.lt.s32.totalorder %v1046, 0
      %v1217 = vsub.s32 0, %v1046
      %v1218 = vsel %vm1216, %v1217, %v1046
      %v1219 = vshrl.u32 %v1218, 4
      %v1220 = vand.u32 %v1218, 15
      %v1221 = vsub.s32 0, %v1220
      %v1222 = vsel %vm1216, %v1221, %v1220
      %vm1223 = vcmp.lt.s32.totalorder %v1047, 0
      %v1224 = vsub.s32 0, %v1047
      %v1225 = vsel %vm1223, %v1224, %v1047
      %v1226 = vshrl.u32 %v1225, 4
      %v1227 = vand.u32 %v1225, 15
      %v1228 = vsub.s32 0, %v1227
      %v1229 = vsel %vm1223, %v1228, %v1227
      %vm1230 = vcmp.lt.s32.totalorder %v1048, 0
      %v1231 = vsub.s32 0, %v1048
      %v1232 = vsel %vm1230, %v1231, %v1048
      %v1233 = vshrl.u32 %v1232, 4
      %v1234 = vand.u32 %v1232, 15
      %v1235 = vsub.s32 0, %v1234
      %v1236 = vsel %vm1230, %v1235, %v1234
      %vm1237 = vcmp.lt.s32.totalorder %v1049, 0
      %v1238 = vsub.s32 0, %v1049
      %v1239 = vsel %vm1237, %v1238, %v1049
      %v1240 = vshrl.u32 %v1239, 4
      %v1241 = vand.u32 %v1239, 15
      %v1242 = vsub.s32 0, %v1241
      %v1243 = vsel %vm1237, %v1242, %v1241
      %vm1244 = vcmp.lt.s32.totalorder %v1050, 0
      %v1245 = vsub.s32 0, %v1050
      %v1246 = vsel %vm1244, %v1245, %v1050
      %v1247 = vshrl.u32 %v1246, 4
      %v1248 = vand.u32 %v1246, 15
      %v1249 = vsub.s32 0, %v1248
      %v1250 = vsel %vm1244, %v1249, %v1248
      %vm1251 = vcmp.lt.s32.totalorder %v1051, 0
      %v1252 = vsub.s32 0, %v1051
      %v1253 = vsel %vm1251, %v1252, %v1051
      %v1254 = vshrl.u32 %v1253, 4
      %v1255 = vand.u32 %v1253, 15
      %v1256 = vsub.s32 0, %v1255
      %v1257 = vsel %vm1251, %v1256, %v1255
      %vm1258 = vcmp.lt.s32.totalorder %v1052, 0
      %v1259 = vsub.s32 0, %v1052
      %v1260 = vsel %vm1258, %v1259, %v1052
      %v1261 = vshrl.u32 %v1260, 4
      %v1262 = vand.u32 %v1260, 15
      %v1263 = vsub.s32 0, %v1262
      %v1264 = vsel %vm1258, %v1263, %v1262
      %vm1265 = vcmp.lt.s32.totalorder %v1053, 0
      %v1266 = vsub.s32 0, %v1053
      %v1267 = vsel %vm1265, %v1266, %v1053
      %v1268 = vshrl.u32 %v1267, 4
      %v1269 = vand.u32 %v1267, 15
      %v1270 = vsub.s32 0, %v1269
      %v1271 = vsel %vm1265, %v1270, %v1269
      %vm1272 = vcmp.lt.s32.totalorder %v1054, 0
      %v1273 = vsub.s32 0, %v1054
      %v1274 = vsel %vm1272, %v1273, %v1054
      %v1275 = vshrl.u32 %v1274, 4
      %v1276 = vand.u32 %v1274, 15
      %v1277 = vsub.s32 0, %v1276
      %v1278 = vsel %vm1272, %v1277, %v1276
      %vm1279 = vcmp.ne.s32.totalorder %v1061, 0
      %vm1280 = vcmp.ne.s32.totalorder %v1068, 0
      %vm1281 = vcmp.ne.s32.totalorder %v1075, 0
      %vm1282 = vcmp.ne.s32.totalorder %v1082, 0
      %vm1283 = vcmp.ne.s32.totalorder %v1089, 0
      %vm1284 = vcmp.ne.s32.totalorder %v1096, 0
      %vm1285 = vcmp.ne.s32.totalorder %v1103, 0
      %vm1286 = vcmp.ne.s32.totalorder %v1110, 0
      %vm1287 = vcmp.ne.s32.totalorder %v1117, 0
      %vm1288 = vcmp.ne.s32.totalorder %v1124, 0
      %vm1289 = vcmp.ne.s32.totalorder %v1131, 0
      %vm1290 = vcmp.ne.s32.totalorder %v1138, 0
      %vm1291 = vcmp.ne.s32.totalorder %v1145, 0
      %vm1292 = vcmp.ne.s32.totalorder %v1152, 0
      %vm1293 = vcmp.ne.s32.totalorder %v1159, 0
      %vm1294 = vcmp.ne.s32.totalorder %v1166, 0
      %vm1295 = vcmp.ne.s32.totalorder %v1173, 0
      %vm1296 = vcmp.ne.s32.totalorder %v1180, 0
      %vm1297 = vcmp.ne.s32.totalorder %v1187, 0
      %vm1298 = vcmp.ne.s32.totalorder %v1194, 0
      %vm1299 = vcmp.ne.s32.totalorder %v1201, 0
      %vm1300 = vcmp.ne.s32.totalorder %v1208, 0
      %vm1301 = vcmp.ne.s32.totalorder %v1215, 0
      %vm1302 = vcmp.ne.s32.totalorder %v1222, 0
      %vm1303 = vcmp.ne.s32.totalorder %v1229, 0
      %vm1304 = vcmp.ne.s32.totalorder %v1236, 0
      %vm1305 = vcmp.ne.s32.totalorder %v1243, 0
      %vm1306 = vcmp.ne.s32.totalorder %v1250, 0
      %vm1307 = vcmp.ne.s32.totalorder %v1257, 0
      %vm1308 = vcmp.ne.s32.totalorder %v1264, 0
      %vm1309 = vcmp.ne.s32.totalorder %v1271, 0
      %vm1310 = vcmp.ne.s32.totalorder %v1278, 0
      %vm1311 = vcmp.lt.s32.totalorder %v1061, 0
      %vm1312 = vcmp.lt.s32.totalorder %v1068, 0
      %vm1313 = vcmp.lt.s32.totalorder %v1075, 0
      %vm1314 = vcmp.lt.s32.totalorder %v1082, 0
      %vm1315 = vcmp.lt.s32.totalorder %v1089, 0
      %vm1316 = vcmp.lt.s32.totalorder %v1096, 0
      %vm1317 = vcmp.lt.s32.totalorder %v1103, 0
      %vm1318 = vcmp.lt.s32.totalorder %v1110, 0
      %vm1319 = vcmp.lt.s32.totalorder %v1117, 0
      %vm1320 = vcmp.lt.s32.totalorder %v1124, 0
      %vm1321 = vcmp.lt.s32.totalorder %v1131, 0
      %vm1322 = vcmp.lt.s32.totalorder %v1138, 0
      %vm1323 = vcmp.lt.s32.totalorder %v1145, 0
      %vm1324 = vcmp.lt.s32.totalorder %v1152, 0
      %vm1325 = vcmp.lt.s32.totalorder %v1159, 0
      %vm1326 = vcmp.lt.s32.totalorder %v1166, 0
      %vm1327 = vcmp.lt.s32.totalorder %v1173, 0
      %vm1328 = vcmp.lt.s32.totalorder %v1180, 0
      %vm1329 = vcmp.lt.s32.totalorder %v1187, 0
      %vm1330 = vcmp.lt.s32.totalorder %v1194, 0
      %vm1331 = vcmp.lt.s32.totalorder %v1201, 0
      %vm1332 = vcmp.lt.s32.totalorder %v1208, 0
      %vm1333 = vcmp.lt.s32.totalorder %v1215, 0
      %vm1334 = vcmp.lt.s32.totalorder %v1222, 0
      %vm1335 = vcmp.lt.s32.totalorder %v1229, 0
      %vm1336 = vcmp.lt.s32.totalorder %v1236, 0
      %vm1337 = vcmp.lt.s32.totalorder %v1243, 0
      %vm1338 = vcmp.lt.s32.totalorder %v1250, 0
      %vm1339 = vcmp.lt.s32.totalorder %v1257, 0
      %vm1340 = vcmp.lt.s32.totalorder %v1264, 0
      %vm1341 = vcmp.lt.s32.totalorder %v1271, 0
      %vm1342 = vcmp.lt.s32.totalorder %v1278, 0
      %vm1343 = vmand %vm1311, %vm1279
      %vm1344 = vmand %vm1312, %vm1280
      %vm1345 = vmand %vm1313, %vm1281
      %vm1346 = vmand %vm1314, %vm1282
      %vm1347 = vmand %vm1315, %vm1283
      %vm1348 = vmand %vm1316, %vm1284
      %vm1349 = vmand %vm1317, %vm1285
      %vm1350 = vmand %vm1318, %vm1286
      %vm1351 = vmand %vm1319, %vm1287
      %vm1352 = vmand %vm1320, %vm1288
      %vm1353 = vmand %vm1321, %vm1289
      %vm1354 = vmand %vm1322, %vm1290
      %vm1355 = vmand %vm1323, %vm1291
      %vm1356 = vmand %vm1324, %vm1292
      %vm1357 = vmand %vm1325, %vm1293
      %vm1358 = vmand %vm1326, %vm1294
      %vm1359 = vmand %vm1327, %vm1295
      %vm1360 = vmand %vm1328, %vm1296
      %vm1361 = vmand %vm1329, %vm1297
      %vm1362 = vmand %vm1330, %vm1298
      %vm1363 = vmand %vm1331, %vm1299
      %vm1364 = vmand %vm1332, %vm1300
      %vm1365 = vmand %vm1333, %vm1301
      %vm1366 = vmand %vm1334, %vm1302
      %vm1367 = vmand %vm1335, %vm1303
      %vm1368 = vmand %vm1336, %vm1304
      %vm1369 = vmand %vm1337, %vm1305
      %vm1370 = vmand %vm1338, %vm1306
      %vm1371 = vmand %vm1339, %vm1307
      %vm1372 = vmand %vm1340, %vm1308
      %vm1373 = vmand %vm1341, %vm1309
      %vm1374 = vmand %vm1342, %vm1310
      %v1375 = vadd.s32 %v1061, 16
      %v1376 = vadd.s32 %v1068, 16
      %v1377 = vadd.s32 %v1075, 16
      %v1378 = vadd.s32 %v1082, 16
      %v1379 = vadd.s32 %v1089, 16
      %v1380 = vadd.s32 %v1096, 16
      %v1381 = vadd.s32 %v1103, 16
      %v1382 = vadd.s32 %v1110, 16
      %v1383 = vadd.s32 %v1117, 16
      %v1384 = vadd.s32 %v1124, 16
      %v1385 = vadd.s32 %v1131, 16
      %v1386 = vadd.s32 %v1138, 16
      %v1387 = vadd.s32 %v1145, 16
      %v1388 = vadd.s32 %v1152, 16
      %v1389 = vadd.s32 %v1159, 16
      %v1390 = vadd.s32 %v1166, 16
      %v1391 = vadd.s32 %v1173, 16
      %v1392 = vadd.s32 %v1180, 16
      %v1393 = vadd.s32 %v1187, 16
      %v1394 = vadd.s32 %v1194, 16
      %v1395 = vadd.s32 %v1201, 16
      %v1396 = vadd.s32 %v1208, 16
      %v1397 = vadd.s32 %v1215, 16
      %v1398 = vadd.s32 %v1222, 16
      %v1399 = vadd.s32 %v1229, 16
      %v1400 = vadd.s32 %v1236, 16
      %v1401 = vadd.s32 %v1243, 16
      %v1402 = vadd.s32 %v1250, 16
      %v1403 = vadd.s32 %v1257, 16
      %v1404 = vadd.s32 %v1264, 16
      %v1405 = vadd.s32 %v1271, 16
      %v1406 = vadd.s32 %v1278, 16
      %v1407 = vsel %vm1343, %v1375, %v1061
      %v1408 = vsel %vm1344, %v1376, %v1068
      %v1409 = vsel %vm1345, %v1377, %v1075
      %v1410 = vsel %vm1346, %v1378, %v1082
      %v1411 = vsel %vm1347, %v1379, %v1089
      %v1412 = vsel %vm1348, %v1380, %v1096
      %v1413 = vsel %vm1349, %v1381, %v1103
      %v1414 = vsel %vm1350, %v1382, %v1110
      %v1415 = vsel %vm1351, %v1383, %v1117
      %v1416 = vsel %vm1352, %v1384, %v1124
      %v1417 = vsel %vm1353, %v1385, %v1131
      %v1418 = vsel %vm1354, %v1386, %v1138
      %v1419 = vsel %vm1355, %v1387, %v1145
      %v1420 = vsel %vm1356, %v1388, %v1152
      %v1421 = vsel %vm1357, %v1389, %v1159
      %v1422 = vsel %vm1358, %v1390, %v1166
      %v1423 = vsel %vm1359, %v1391, %v1173
      %v1424 = vsel %vm1360, %v1392, %v1180
      %v1425 = vsel %vm1361, %v1393, %v1187
      %v1426 = vsel %vm1362, %v1394, %v1194
      %v1427 = vsel %vm1363, %v1395, %v1201
      %v1428 = vsel %vm1364, %v1396, %v1208
      %v1429 = vsel %vm1365, %v1397, %v1215
      %v1430 = vsel %vm1366, %v1398, %v1222
      %v1431 = vsel %vm1367, %v1399, %v1229
      %v1432 = vsel %vm1368, %v1400, %v1236
      %v1433 = vsel %vm1369, %v1401, %v1243
      %v1434 = vsel %vm1370, %v1402, %v1250
      %v1435 = vsel %vm1371, %v1403, %v1257
      %v1436 = vsel %vm1372, %v1404, %v1264
      %v1437 = vsel %vm1373, %v1405, %v1271
      %v1438 = vsel %vm1374, %v1406, %v1278
      %vm1439 = vcmp.ne.s32.totalorder %v1407, 0
      %vm1440 = vcmp.ne.s32.totalorder %v1408, 0
      %vm1441 = vcmp.ne.s32.totalorder %v1409, 0
      %vm1442 = vcmp.ne.s32.totalorder %v1410, 0
      %vm1443 = vcmp.ne.s32.totalorder %v1411, 0
      %vm1444 = vcmp.ne.s32.totalorder %v1412, 0
      %vm1445 = vcmp.ne.s32.totalorder %v1413, 0
      %vm1446 = vcmp.ne.s32.totalorder %v1414, 0
      %vm1447 = vcmp.ne.s32.totalorder %v1415, 0
      %vm1448 = vcmp.ne.s32.totalorder %v1416, 0
      %vm1449 = vcmp.ne.s32.totalorder %v1417, 0
      %vm1450 = vcmp.ne.s32.totalorder %v1418, 0
      %vm1451 = vcmp.ne.s32.totalorder %v1419, 0
      %vm1452 = vcmp.ne.s32.totalorder %v1420, 0
      %vm1453 = vcmp.ne.s32.totalorder %v1421, 0
      %vm1454 = vcmp.ne.s32.totalorder %v1422, 0
      %vm1455 = vcmp.ne.s32.totalorder %v1423, 0
      %vm1456 = vcmp.ne.s32.totalorder %v1424, 0
      %vm1457 = vcmp.ne.s32.totalorder %v1425, 0
      %vm1458 = vcmp.ne.s32.totalorder %v1426, 0
      %vm1459 = vcmp.ne.s32.totalorder %v1427, 0
      %vm1460 = vcmp.ne.s32.totalorder %v1428, 0
      %vm1461 = vcmp.ne.s32.totalorder %v1429, 0
      %vm1462 = vcmp.ne.s32.totalorder %v1430, 0
      %vm1463 = vcmp.ne.s32.totalorder %v1431, 0
      %vm1464 = vcmp.ne.s32.totalorder %v1432, 0
      %vm1465 = vcmp.ne.s32.totalorder %v1433, 0
      %vm1466 = vcmp.ne.s32.totalorder %v1434, 0
      %vm1467 = vcmp.ne.s32.totalorder %v1435, 0
      %vm1468 = vcmp.ne.s32.totalorder %v1436, 0
      %vm1469 = vcmp.ne.s32.totalorder %v1437, 0
      %vm1470 = vcmp.ne.s32.totalorder %v1438, 0
      %v1471 = vsel %vm1439, 1, 0
      %v1472 = vsel %vm1440, 1, 0
      %v1473 = vsel %vm1441, 1, 0
      %v1474 = vsel %vm1442, 1, 0
      %v1475 = vsel %vm1443, 1, 0
      %v1476 = vsel %vm1444, 1, 0
      %v1477 = vsel %vm1445, 1, 0
      %v1478 = vsel %vm1446, 1, 0
      %v1479 = vsel %vm1447, 1, 0
      %v1480 = vsel %vm1448, 1, 0
      %v1481 = vsel %vm1449, 1, 0
      %v1482 = vsel %vm1450, 1, 0
      %v1483 = vsel %vm1451, 1, 0
      %v1484 = vsel %vm1452, 1, 0
      %v1485 = vsel %vm1453, 1, 0
      %v1486 = vsel %vm1454, 1, 0
      %v1487 = vsel %vm1455, 1, 0
      %v1488 = vsel %vm1456, 1, 0
      %v1489 = vsel %vm1457, 1, 0
      %v1490 = vsel %vm1458, 1, 0
      %v1491 = vsel %vm1459, 1, 0
      %v1492 = vsel %vm1460, 1, 0
      %v1493 = vsel %vm1461, 1, 0
      %v1494 = vsel %vm1462, 1, 0
      %v1495 = vsel %vm1463, 1, 0
      %v1496 = vsel %vm1464, 1, 0
      %v1497 = vsel %vm1465, 1, 0
      %v1498 = vsel %vm1466, 1, 0
      %v1499 = vsel %vm1467, 1, 0
      %v1500 = vsel %vm1468, 1, 0
      %v1501 = vsel %vm1469, 1, 0
      %v1502 = vsel %vm1470, 1, 0
      %v1503 = vcvt.s32.f32 %v1471
      %v1504 = vcvt.s32.f32 %v1472
      %v1505 = vcvt.s32.f32 %v1473
      %v1506 = vcvt.s32.f32 %v1474
      %v1507 = vcvt.s32.f32 %v1475
      %v1508 = vcvt.s32.f32 %v1476
      %v1509 = vcvt.s32.f32 %v1477
      %v1510 = vcvt.s32.f32 %v1478
      %v1511 = vcvt.s32.f32 %v1479
      %v1512 = vcvt.s32.f32 %v1480
      %v1513 = vcvt.s32.f32 %v1481
      %v1514 = vcvt.s32.f32 %v1482
      %v1515 = vcvt.s32.f32 %v1483
      %v1516 = vcvt.s32.f32 %v1484
      %v1517 = vcvt.s32.f32 %v1485
      %v1518 = vcvt.s32.f32 %v1486
      %v1519 = vcvt.s32.f32 %v1487
      %v1520 = vcvt.s32.f32 %v1488
      %v1521 = vcvt.s32.f32 %v1489
      %v1522 = vcvt.s32.f32 %v1490
      %v1523 = vcvt.s32.f32 %v1491
      %v1524 = vcvt.s32.f32 %v1492
      %v1525 = vcvt.s32.f32 %v1493
      %v1526 = vcvt.s32.f32 %v1494
      %v1527 = vcvt.s32.f32 %v1495
      %v1528 = vcvt.s32.f32 %v1496
      %v1529 = vcvt.s32.f32 %v1497
      %v1530 = vcvt.s32.f32 %v1498
      %v1531 = vcvt.s32.f32 %v1499
      %v1532 = vcvt.s32.f32 %v1500
      %v1533 = vcvt.s32.f32 %v1501
      %v1534 = vcvt.s32.f32 %v1502
      %vm1535 = vcmp.ne.s32.totalorder %v1407, 15
      %vm1536 = vcmp.ne.s32.totalorder %v1408, 15
      %vm1537 = vcmp.ne.s32.totalorder %v1409, 15
      %vm1538 = vcmp.ne.s32.totalorder %v1410, 15
      %vm1539 = vcmp.ne.s32.totalorder %v1411, 15
      %vm1540 = vcmp.ne.s32.totalorder %v1412, 15
      %vm1541 = vcmp.ne.s32.totalorder %v1413, 15
      %vm1542 = vcmp.ne.s32.totalorder %v1414, 15
      %vm1543 = vcmp.ne.s32.totalorder %v1415, 15
      %vm1544 = vcmp.ne.s32.totalorder %v1416, 15
      %vm1545 = vcmp.ne.s32.totalorder %v1417, 15
      %vm1546 = vcmp.ne.s32.totalorder %v1418, 15
      %vm1547 = vcmp.ne.s32.totalorder %v1419, 15
      %vm1548 = vcmp.ne.s32.totalorder %v1420, 15
      %vm1549 = vcmp.ne.s32.totalorder %v1421, 15
      %vm1550 = vcmp.ne.s32.totalorder %v1422, 15
      %vm1551 = vcmp.ne.s32.totalorder %v1423, 15
      %vm1552 = vcmp.ne.s32.totalorder %v1424, 15
      %vm1553 = vcmp.ne.s32.totalorder %v1425, 15
      %vm1554 = vcmp.ne.s32.totalorder %v1426, 15
      %vm1555 = vcmp.ne.s32.totalorder %v1427, 15
      %vm1556 = vcmp.ne.s32.totalorder %v1428, 15
      %vm1557 = vcmp.ne.s32.totalorder %v1429, 15
      %vm1558 = vcmp.ne.s32.totalorder %v1430, 15
      %vm1559 = vcmp.ne.s32.totalorder %v1431, 15
      %vm1560 = vcmp.ne.s32.totalorder %v1432, 15
      %vm1561 = vcmp.ne.s32.totalorder %v1433, 15
      %vm1562 = vcmp.ne.s32.totalorder %v1434, 15
      %vm1563 = vcmp.ne.s32.totalorder %v1435, 15
      %vm1564 = vcmp.ne.s32.totalorder %v1436, 15
      %vm1565 = vcmp.ne.s32.totalorder %v1437, 15
      %vm1566 = vcmp.ne.s32.totalorder %v1438, 15
      %v1567 = vsel %vm1535, 1, 0
      %v1568 = vsel %vm1536, 1, 0
      %v1569 = vsel %vm1537, 1, 0
      %v1570 = vsel %vm1538, 1, 0
      %v1571 = vsel %vm1539, 1, 0
      %v1572 = vsel %vm1540, 1, 0
      %v1573 = vsel %vm1541, 1, 0
      %v1574 = vsel %vm1542, 1, 0
      %v1575 = vsel %vm1543, 1, 0
      %v1576 = vsel %vm1544, 1, 0
      %v1577 = vsel %vm1545, 1, 0
      %v1578 = vsel %vm1546, 1, 0
      %v1579 = vsel %vm1547, 1, 0
      %v1580 = vsel %vm1548, 1, 0
      %v1581 = vsel %vm1549, 1, 0
      %v1582 = vsel %vm1550, 1, 0
      %v1583 = vsel %vm1551, 1, 0
      %v1584 = vsel %vm1552, 1, 0
      %v1585 = vsel %vm1553, 1, 0
      %v1586 = vsel %vm1554, 1, 0
      %v1587 = vsel %vm1555, 1, 0
      %v1588 = vsel %vm1556, 1, 0
      %v1589 = vsel %vm1557, 1, 0
      %v1590 = vsel %vm1558, 1, 0
      %v1591 = vsel %vm1559, 1, 0
      %v1592 = vsel %vm1560, 1, 0
      %v1593 = vsel %vm1561, 1, 0
      %v1594 = vsel %vm1562, 1, 0
      %v1595 = vsel %vm1563, 1, 0
      %v1596 = vsel %vm1564, 1, 0
      %v1597 = vsel %vm1565, 1, 0
      %v1598 = vsel %vm1566, 1, 0
      %v1599 = vcvt.s32.f32 %v1567
      %v1600 = vcvt.s32.f32 %v1568
      %v1601 = vcvt.s32.f32 %v1569
      %v1602 = vcvt.s32.f32 %v1570
      %v1603 = vcvt.s32.f32 %v1571
      %v1604 = vcvt.s32.f32 %v1572
      %v1605 = vcvt.s32.f32 %v1573
      %v1606 = vcvt.s32.f32 %v1574
      %v1607 = vcvt.s32.f32 %v1575
      %v1608 = vcvt.s32.f32 %v1576
      %v1609 = vcvt.s32.f32 %v1577
      %v1610 = vcvt.s32.f32 %v1578
      %v1611 = vcvt.s32.f32 %v1579
      %v1612 = vcvt.s32.f32 %v1580
      %v1613 = vcvt.s32.f32 %v1581
      %v1614 = vcvt.s32.f32 %v1582
      %v1615 = vcvt.s32.f32 %v1583
      %v1616 = vcvt.s32.f32 %v1584
      %v1617 = vcvt.s32.f32 %v1585
      %v1618 = vcvt.s32.f32 %v1586
      %v1619 = vcvt.s32.f32 %v1587
      %v1620 = vcvt.s32.f32 %v1588
      %v1621 = vcvt.s32.f32 %v1589
      %v1622 = vcvt.s32.f32 %v1590
      %v1623 = vcvt.s32.f32 %v1591
      %v1624 = vcvt.s32.f32 %v1592
      %v1625 = vcvt.s32.f32 %v1593
      %v1626 = vcvt.s32.f32 %v1594
      %v1627 = vcvt.s32.f32 %v1595
      %v1628 = vcvt.s32.f32 %v1596
      %v1629 = vcvt.s32.f32 %v1597
      %v1630 = vcvt.s32.f32 %v1598
      %v1631 = vld [vmem:[#allocation2] sm:$0xff]
      %v1632 = vld [vmem:[#allocation2 + $0x8] sm:$0xff]
      %v1633 = vld [vmem:[#allocation2 + $0x10] sm:$0xff]
      %v1634 = vld [vmem:[#allocation2 + $0x18] sm:$0xff]
      %v1635 = vld [vmem:[#allocation2 + $0x20] sm:$0xff]
      %v1636 = vld [vmem:[#allocation2 + $0x28] sm:$0xff]
      %v1637 = vld [vmem:[#allocation2 + $0x30] sm:$0xff]
      %v1638 = vld [vmem:[#allocation2 + $0x38] sm:$0xff]
      %v1639 = vld [vmem:[#allocation2 + $0x40] sm:$0xff]
      %v1640 = vld [vmem:[#allocation2 + $0x48] sm:$0xff]
      %v1641 = vld [vmem:[#allocation2 + $0x50] sm:$0xff]
      %v1642 = vld [vmem:[#allocation2 + $0x58] sm:$0xff]
      %v1643 = vld [vmem:[#allocation2 + $0x60] sm:$0xff]
      %v1644 = vld [vmem:[#allocation2 + $0x68] sm:$0xff]
      %v1645 = vld [vmem:[#allocation2 + $0x70] sm:$0xff]
      %v1646 = vld [vmem:[#allocation2 + $0x78] sm:$0xff]
      %v1647 = vld [vmem:[#allocation2 + $0x80] sm:$0xff]
      %v1648 = vld [vmem:[#allocation2 + $0x88] sm:$0xff]
      %v1649 = vld [vmem:[#allocation2 + $0x90] sm:$0xff]
      %v1650 = vld [vmem:[#allocation2 + $0x98] sm:$0xff]
      %v1651 = vld [vmem:[#allocation2 + $0xa0] sm:$0xff]
      %v1652 = vld [vmem:[#allocation2 + $0xa8] sm:$0xff]
      %v1653 = vld [vmem:[#allocation2 + $0xb0] sm:$0xff]
      %v1654 = vld [vmem:[#allocation2 + $0xb8] sm:$0xff]
      %v1655 = vld [vmem:[#allocation2 + $0xc0] sm:$0xff]
      %v1656 = vld [vmem:[#allocation2 + $0xc8] sm:$0xff]
      %v1657 = vld [vmem:[#allocation2 + $0xd0] sm:$0xff]
      %v1658 = vld [vmem:[#allocation2 + $0xd8] sm:$0xff]
      %v1659 = vld [vmem:[#allocation2 + $0xe0] sm:$0xff]
      %v1660 = vld [vmem:[#allocation2 + $0xe8] sm:$0xff]
      %v1661 = vld [vmem:[#allocation2 + $0xf0] sm:$0xff]
      %v1662 = vld [vmem:[#allocation2 + $0xf8] sm:$0xff]
      %v1663 = vmul.f32 %v1631, %v1503
      %v1664 = vmul.f32 %v1632, %v1504
      %v1665 = vmul.f32 %v1633, %v1505
      %v1666 = vmul.f32 %v1634, %v1506
      %v1667 = vmul.f32 %v1635, %v1507
      %v1668 = vmul.f32 %v1636, %v1508
      %v1669 = vmul.f32 %v1637, %v1509
      %v1670 = vmul.f32 %v1638, %v1510
      %v1671 = vmul.f32 %v1639, %v1511
      %v1672 = vmul.f32 %v1640, %v1512
      %v1673 = vmul.f32 %v1641, %v1513
      %v1674 = vmul.f32 %v1642, %v1514
      %v1675 = vmul.f32 %v1643, %v1515
      %v1676 = vmul.f32 %v1644, %v1516
      %v1677 = vmul.f32 %v1645, %v1517
      %v1678 = vmul.f32 %v1646, %v1518
      %v1679 = vmul.f32 %v1647, %v1519
      %v1680 = vmul.f32 %v1648, %v1520
      %v1681 = vmul.f32 %v1649, %v1521
      %v1682 = vmul.f32 %v1650, %v1522
      %v1683 = vmul.f32 %v1651, %v1523
      %v1684 = vmul.f32 %v1652, %v1524
      %v1685 = vmul.f32 %v1653, %v1525
      %v1686 = vmul.f32 %v1654, %v1526
      %v1687 = vmul.f32 %v1655, %v1527
      %v1688 = vmul.f32 %v1656, %v1528
      %v1689 = vmul.f32 %v1657, %v1529
      %v1690 = vmul.f32 %v1658, %v1530
      %v1691 = vmul.f32 %v1659, %v1531
      %v1692 = vmul.f32 %v1660, %v1532
      %v1693 = vmul.f32 %v1661, %v1533
      %v1694 = vmul.f32 %v1662, %v1534
      %vm1695 = vcmask 261120
      %1696 = vst.msk [vmem:[#allocation3] sm:$0xff] %vm1695, %v1663
      %1697 = vst.msk [vmem:[#allocation3 + $0x18] sm:$0xff] %vm1695, %v1664
      %1698 = vst.msk [vmem:[#allocation3 + $0x30] sm:$0xff] %vm1695, %v1665
      %1699 = vst.msk [vmem:[#allocation3 + $0x48] sm:$0xff] %vm1695, %v1666
      %1700 = vst.msk [vmem:[#allocation3 + $0x60] sm:$0xff] %vm1695, %v1667
      %1701 = vst.msk [vmem:[#allocation3 + $0x78] sm:$0xff] %vm1695, %v1668
      %1702 = vst.msk [vmem:[#allocation3 + $0x90] sm:$0xff] %vm1695, %v1669
      %1703 = vst.msk [vmem:[#allocation3 + $0xa8] sm:$0xff] %vm1695, %v1670
      %1704 = vst.msk [vmem:[#allocation3 + $0xc0] sm:$0xff] %vm1695, %v1671
      %1705 = vst.msk [vmem:[#allocation3 + $0xd8] sm:$0xff] %vm1695, %v1672
      %1706 = vst.msk [vmem:[#allocation3 + $0xf0] sm:$0xff] %vm1695, %v1673
      %1707 = vst.msk [vmem:[#allocation3 + $0x108] sm:$0xff] %vm1695, %v1674
      %1708 = vst.msk [vmem:[#allocation3 + $0x120] sm:$0xff] %vm1695, %v1675
      %1709 = vst.msk [vmem:[#allocation3 + $0x138] sm:$0xff] %vm1695, %v1676
      %1710 = vst.msk [vmem:[#allocation3 + $0x150] sm:$0xff] %vm1695, %v1677
      %1711 = vst.msk [vmem:[#allocation3 + $0x168] sm:$0xff] %vm1695, %v1678
      %1712 = vst.msk [vmem:[#allocation3 + $0x180] sm:$0xff] %vm1695, %v1679
      %1713 = vst.msk [vmem:[#allocation3 + $0x198] sm:$0xff] %vm1695, %v1680
      %1714 = vst.msk [vmem:[#allocation3 + $0x1b0] sm:$0xff] %vm1695, %v1681
      %1715 = vst.msk [vmem:[#allocation3 + $0x1c8] sm:$0xff] %vm1695, %v1682
      %1716 = vst.msk [vmem:[#allocation3 + $0x1e0] sm:$0xff] %vm1695, %v1683
      %1717 = vst.msk [vmem:[#allocation3 + $0x1f8] sm:$0xff] %vm1695, %v1684
      %1718 = vst.msk [vmem:[#allocation3 + $0x210] sm:$0xff] %vm1695, %v1685
      %1719 = vst.msk [vmem:[#allocation3 + $0x228] sm:$0xff] %vm1695, %v1686
      %1720 = vst.msk [vmem:[#allocation3 + $0x240] sm:$0xff] %vm1695, %v1687
      %1721 = vst.msk [vmem:[#allocation3 + $0x258] sm:$0xff] %vm1695, %v1688
      %1722 = vst.msk [vmem:[#allocation3 + $0x270] sm:$0xff] %vm1695, %v1689
      %1723 = vst.msk [vmem:[#allocation3 + $0x288] sm:$0xff] %vm1695, %v1690
      %1724 = vst.msk [vmem:[#allocation3 + $0x2a0] sm:$0xff] %vm1695, %v1691
      %1725 = vst.msk [vmem:[#allocation3 + $0x2b8] sm:$0xff] %vm1695, %v1692
      %1726 = vst.msk [vmem:[#allocation3 + $0x2d0] sm:$0xff] %vm1695, %v1693
      %1727 = vst.msk [vmem:[#allocation3 + $0x2e8] sm:$0xff] %vm1695, %v1694
      %v1728 = vld [vmem:[#allocation2 + $0x1] sm:$0xff]
      %v1729 = vld [vmem:[#allocation2 + $0x9] sm:$0xff]
      %v1730 = vld [vmem:[#allocation2 + $0x11] sm:$0xff]
      %v1731 = vld [vmem:[#allocation2 + $0x19] sm:$0xff]
      %v1732 = vld [vmem:[#allocation2 + $0x21] sm:$0xff]
      %v1733 = vld [vmem:[#allocation2 + $0x29] sm:$0xff]
      %v1734 = vld [vmem:[#allocation2 + $0x31] sm:$0xff]
      %v1735 = vld [vmem:[#allocation2 + $0x39] sm:$0xff]
      %v1736 = vld [vmem:[#allocation2 + $0x41] sm:$0xff]
      %v1737 = vld [vmem:[#allocation2 + $0x49] sm:$0xff]
      %v1738 = vld [vmem:[#allocation2 + $0x51] sm:$0xff]
      %v1739 = vld [vmem:[#allocation2 + $0x59] sm:$0xff]
      %v1740 = vld [vmem:[#allocation2 + $0x61] sm:$0xff]
      %v1741 = vld [vmem:[#allocation2 + $0x69] sm:$0xff]
      %v1742 = vld [vmem:[#allocation2 + $0x71] sm:$0xff]
      %v1743 = vld [vmem:[#allocation2 + $0x79] sm:$0xff]
      %v1744 = vld [vmem:[#allocation2 + $0x81] sm:$0xff]
      %v1745 = vld [vmem:[#allocation2 + $0x89] sm:$0xff]
      %v1746 = vld [vmem:[#allocation2 + $0x91] sm:$0xff]
      %v1747 = vld [vmem:[#allocation2 + $0x99] sm:$0xff]
      %v1748 = vld [vmem:[#allocation2 + $0xa1] sm:$0xff]
      %v1749 = vld [vmem:[#allocation2 + $0xa9] sm:$0xff]
      %v1750 = vld [vmem:[#allocation2 + $0xb1] sm:$0xff]
      %v1751 = vld [vmem:[#allocation2 + $0xb9] sm:$0xff]
      %v1752 = vld [vmem:[#allocation2 + $0xc1] sm:$0xff]
      %v1753 = vld [vmem:[#allocation2 + $0xc9] sm:$0xff]
      %v1754 = vld [vmem:[#allocation2 + $0xd1] sm:$0xff]
      %v1755 = vld [vmem:[#allocation2 + $0xd9] sm:$0xff]
      %v1756 = vld [vmem:[#allocation2 + $0xe1] sm:$0xff]
      %v1757 = vld [vmem:[#allocation2 + $0xe9] sm:$0xff]
      %v1758 = vld [vmem:[#allocation2 + $0xf1] sm:$0xff]
      %v1759 = vld [vmem:[#allocation2 + $0xf9] sm:$0xff]
      %1792 = vrot.lane.b32.xlu0 %v1728, 32
      %v1793 = vpop.permute.xlu0 %1792
      %1794 = vrot.lane.b32.xlu0 %v1729, 32
      %v1795 = vpop.permute.xlu0 %1794
      %1796 = vrot.lane.b32.xlu0 %v1730, 32
      %v1797 = vpop.permute.xlu0 %1796
      %1798 = vrot.lane.b32.xlu0 %v1731, 32
      %v1799 = vpop.permute.xlu0 %1798
      %1800 = vrot.lane.b32.xlu0 %v1732, 32
      %v1801 = vpop.permute.xlu0 %1800
      %1802 = vrot.lane.b32.xlu0 %v1733, 32
      %v1803 = vpop.permute.xlu0 %1802
      %1804 = vrot.lane.b32.xlu0 %v1734, 32
      %v1805 = vpop.permute.xlu0 %1804
      %1806 = vrot.lane.b32.xlu0 %v1735, 32
      %v1807 = vpop.permute.xlu0 %1806
      %1808 = vrot.lane.b32.xlu0 %v1736, 32
      %v1809 = vpop.permute.xlu0 %1808
      %1810 = vrot.lane.b32.xlu0 %v1737, 32
      %v1811 = vpop.permute.xlu0 %1810
      %1812 = vrot.lane.b32.xlu0 %v1738, 32
      %v1813 = vpop.permute.xlu0 %1812
      %1814 = vrot.lane.b32.xlu0 %v1739, 32
      %v1815 = vpop.permute.xlu0 %1814
      %1816 = vrot.lane.b32.xlu0 %v1740, 32
      %v1817 = vpop.permute.xlu0 %1816
      %1818 = vrot.lane.b32.xlu0 %v1741, 32
      %v1819 = vpop.permute.xlu0 %1818
      %1820 = vrot.lane.b32.xlu0 %v1742, 32
      %v1821 = vpop.permute.xlu0 %1820
      %1822 = vrot.lane.b32.xlu0 %v1743, 32
      %v1823 = vpop.permute.xlu0 %1822
      %1824 = vrot.lane.b32.xlu0 %v1744, 32
      %v1825 = vpop.permute.xlu0 %1824
      %1826 = vrot.lane.b32.xlu0 %v1745, 32
      %v1827 = vpop.permute.xlu0 %1826
      %1828 = vrot.lane.b32.xlu0 %v1746, 32
      %v1829 = vpop.permute.xlu0 %1828
      %1830 = vrot.lane.b32.xlu0 %v1747, 32
      %v1831 = vpop.permute.xlu0 %1830
      %1832 = vrot.lane.b32.xlu0 %v1748, 32
      %v1833 = vpop.permute.xlu0 %1832
      %1834 = vrot.lane.b32.xlu0 %v1749, 32
      %v1835 = vpop.permute.xlu0 %1834
      %1836 = vrot.lane.b32.xlu0 %v1750, 32
      %v1837 = vpop.permute.xlu0 %1836
      %1838 = vrot.lane.b32.xlu0 %v1751, 32
      %v1839 = vpop.permute.xlu0 %1838
      %1840 = vrot.lane.b32.xlu0 %v1752, 32
      %v1841 = vpop.permute.xlu0 %1840
      %1842 = vrot.lane.b32.xlu0 %v1753, 32
      %v1843 = vpop.permute.xlu0 %1842
      %1844 = vrot.lane.b32.xlu0 %v1754, 32
      %v1845 = vpop.permute.xlu0 %1844
      %1846 = vrot.lane.b32.xlu0 %v1755, 32
      %v1847 = vpop.permute.xlu0 %1846
      %1848 = vrot.lane.b32.xlu0 %v1756, 32
      %v1849 = vpop.permute.xlu0 %1848
      %1850 = vrot.lane.b32.xlu0 %v1757, 32
      %v1851 = vpop.permute.xlu0 %1850
      %1852 = vrot.lane.b32.xlu0 %v1758, 32
      %v1853 = vpop.permute.xlu0 %1852
      %1854 = vrot.lane.b32.xlu0 %v1759, 32
      %v1855 = vpop.permute.xlu0 %1854
      %vm1888 = vcmask 523520
      %1889 = vst.msk [vmem:[#allocation3] sm:$0xff] %vm1888, %v1793
      %1890 = vst.msk [vmem:[#allocation3 + $0x18] sm:$0xff] %vm1888, %v1795
      %1891 = vst.msk [vmem:[#allocation3 + $0x30] sm:$0xff] %vm1888, %v1797
      %1892 = vst.msk [vmem:[#allocation3 + $0x48] sm:$0xff] %vm1888, %v1799
      %1893 = vst.msk [vmem:[#allocation3 + $0x60] sm:$0xff] %vm1888, %v1801
      %1894 = vst.msk [vmem:[#allocation3 + $0x78] sm:$0xff] %vm1888, %v1803
      %1895 = vst.msk [vmem:[#allocation3 + $0x90] sm:$0xff] %vm1888, %v1805
      %1896 = vst.msk [vmem:[#allocation3 + $0xa8] sm:$0xff] %vm1888, %v1807
      %1897 = vst.msk [vmem:[#allocation3 + $0xc0] sm:$0xff] %vm1888, %v1809
      %1898 = vst.msk [vmem:[#allocation3 + $0xd8] sm:$0xff] %vm1888, %v1811
      %1899 = vst.msk [vmem:[#allocation3 + $0xf0] sm:$0xff] %vm1888, %v1813
      %1900 = vst.msk [vmem:[#allocation3 + $0x108] sm:$0xff] %vm1888, %v1815
      %1901 = vst.msk [vmem:[#allocation3 + $0x120] sm:$0xff] %vm1888, %v1817
      %1902 = vst.msk [vmem:[#allocation3 + $0x138] sm:$0xff] %vm1888, %v1819
      %1903 = vst.msk [vmem:[#allocation3 + $0x150] sm:$0xff] %vm1888, %v1821
      %1904 = vst.msk [vmem:[#allocation3 + $0x168] sm:$0xff] %vm1888, %v1823
      %1905 = vst.msk [vmem:[#allocation3 + $0x180] sm:$0xff] %vm1888, %v1825
      %1906 = vst.msk [vmem:[#allocation3 + $0x198] sm:$0xff] %vm1888, %v1827
      %1907 = vst.msk [vmem:[#allocation3 + $0x1b0] sm:$0xff] %vm1888, %v1829
      %1908 = vst.msk [vmem:[#allocation3 + $0x1c8] sm:$0xff] %vm1888, %v1831
      %1909 = vst.msk [vmem:[#allocation3 + $0x1e0] sm:$0xff] %vm1888, %v1833
      %1910 = vst.msk [vmem:[#allocation3 + $0x1f8] sm:$0xff] %vm1888, %v1835
      %1911 = vst.msk [vmem:[#allocation3 + $0x210] sm:$0xff] %vm1888, %v1837
      %1912 = vst.msk [vmem:[#allocation3 + $0x228] sm:$0xff] %vm1888, %v1839
      %1913 = vst.msk [vmem:[#allocation3 + $0x240] sm:$0xff] %vm1888, %v1841
      %1914 = vst.msk [vmem:[#allocation3 + $0x258] sm:$0xff] %vm1888, %v1843
      %1915 = vst.msk [vmem:[#allocation3 + $0x270] sm:$0xff] %vm1888, %v1845
      %1916 = vst.msk [vmem:[#allocation3 + $0x288] sm:$0xff] %vm1888, %v1847
      %1917 = vst.msk [vmem:[#allocation3 + $0x2a0] sm:$0xff] %vm1888, %v1849
      %1918 = vst.msk [vmem:[#allocation3 + $0x2b8] sm:$0xff] %vm1888, %v1851
      %1919 = vst.msk [vmem:[#allocation3 + $0x2d0] sm:$0xff] %vm1888, %v1853
      %1920 = vst.msk [vmem:[#allocation3 + $0x2e8] sm:$0xff] %vm1888, %v1855
      %v1921 = vld [vmem:[#allocation2 + $0x2] sm:$0xff]
      %v1922 = vld [vmem:[#allocation2 + $0xa] sm:$0xff]
      %v1923 = vld [vmem:[#allocation2 + $0x12] sm:$0xff]
      %v1924 = vld [vmem:[#allocation2 + $0x1a] sm:$0xff]
      %v1925 = vld [vmem:[#allocation2 + $0x22] sm:$0xff]
      %v1926 = vld [vmem:[#allocation2 + $0x2a] sm:$0xff]
      %v1927 = vld [vmem:[#allocation2 + $0x32] sm:$0xff]
      %v1928 = vld [vmem:[#allocation2 + $0x3a] sm:$0xff]
      %v1929 = vld [vmem:[#allocation2 + $0x42] sm:$0xff]
      %v1930 = vld [vmem:[#allocation2 + $0x4a] sm:$0xff]
      %v1931 = vld [vmem:[#allocation2 + $0x52] sm:$0xff]
      %v1932 = vld [vmem:[#allocation2 + $0x5a] sm:$0xff]
      %v1933 = vld [vmem:[#allocation2 + $0x62] sm:$0xff]
      %v1934 = vld [vmem:[#allocation2 + $0x6a] sm:$0xff]
      %v1935 = vld [vmem:[#allocation2 + $0x72] sm:$0xff]
      %v1936 = vld [vmem:[#allocation2 + $0x7a] sm:$0xff]
      %v1937 = vld [vmem:[#allocation2 + $0x82] sm:$0xff]
      %v1938 = vld [vmem:[#allocation2 + $0x8a] sm:$0xff]
      %v1939 = vld [vmem:[#allocation2 + $0x92] sm:$0xff]
      %v1940 = vld [vmem:[#allocation2 + $0x9a] sm:$0xff]
      %v1941 = vld [vmem:[#allocation2 + $0xa2] sm:$0xff]
      %v1942 = vld [vmem:[#allocation2 + $0xaa] sm:$0xff]
      %v1943 = vld [vmem:[#allocation2 + $0xb2] sm:$0xff]
      %v1944 = vld [vmem:[#allocation2 + $0xba] sm:$0xff]
      %v1945 = vld [vmem:[#allocation2 + $0xc2] sm:$0xff]
      %v1946 = vld [vmem:[#allocation2 + $0xca] sm:$0xff]
      %v1947 = vld [vmem:[#allocation2 + $0xd2] sm:$0xff]
      %v1948 = vld [vmem:[#allocation2 + $0xda] sm:$0xff]
      %v1949 = vld [vmem:[#allocation2 + $0xe2] sm:$0xff]
      %v1950 = vld [vmem:[#allocation2 + $0xea] sm:$0xff]
      %v1951 = vld [vmem:[#allocation2 + $0xf2] sm:$0xff]
      %v1952 = vld [vmem:[#allocation2 + $0xfa] sm:$0xff]
      %v1953 = vmul.f32 %v1921, %v1599
      %v1954 = vmul.f32 %v1922, %v1600
      %v1955 = vmul.f32 %v1923, %v1601
      %v1956 = vmul.f32 %v1924, %v1602
      %v1957 = vmul.f32 %v1925, %v1603
      %v1958 = vmul.f32 %v1926, %v1604
      %v1959 = vmul.f32 %v1927, %v1605
      %v1960 = vmul.f32 %v1928, %v1606
      %v1961 = vmul.f32 %v1929, %v1607
      %v1962 = vmul.f32 %v1930, %v1608
      %v1963 = vmul.f32 %v1931, %v1609
      %v1964 = vmul.f32 %v1932, %v1610
      %v1965 = vmul.f32 %v1933, %v1611
      %v1966 = vmul.f32 %v1934, %v1612
      %v1967 = vmul.f32 %v1935, %v1613
      %v1968 = vmul.f32 %v1936, %v1614
      %v1969 = vmul.f32 %v1937, %v1615
      %v1970 = vmul.f32 %v1938, %v1616
      %v1971 = vmul.f32 %v1939, %v1617
      %v1972 = vmul.f32 %v1940, %v1618
      %v1973 = vmul.f32 %v1941, %v1619
      %v1974 = vmul.f32 %v1942, %v1620
      %v1975 = vmul.f32 %v1943, %v1621
      %v1976 = vmul.f32 %v1944, %v1622
      %v1977 = vmul.f32 %v1945, %v1623
      %v1978 = vmul.f32 %v1946, %v1624
      %v1979 = vmul.f32 %v1947, %v1625
      %v1980 = vmul.f32 %v1948, %v1626
      %v1981 = vmul.f32 %v1949, %v1627
      %v1982 = vmul.f32 %v1950, %v1628
      %v1983 = vmul.f32 %v1951, %v1629
      %v1984 = vmul.f32 %v1952, %v1630
      %2017 = vrot.lane.b32.xlu0 %v1953, 64
      %v2018 = vpop.permute.xlu0 %2017
      %2019 = vrot.lane.b32.xlu0 %v1954, 64
      %v2020 = vpop.permute.xlu0 %2019
      %2021 = vrot.lane.b32.xlu0 %v1955, 64
      %v2022 = vpop.permute.xlu0 %2021
      %2023 = vrot.lane.b32.xlu0 %v1956, 64
      %v2024 = vpop.permute.xlu0 %2023
      %2025 = vrot.lane.b32.xlu0 %v1957, 64
      %v2026 = vpop.permute.xlu0 %2025
      %2027 = vrot.lane.b32.xlu0 %v1958, 64
      %v2028 = vpop.permute.xlu0 %2027
      %2029 = vrot.lane.b32.xlu0 %v1959, 64
      %v2030 = vpop.permute.xlu0 %2029
      %2031 = vrot.lane.b32.xlu0 %v1960, 64
      %v2032 = vpop.permute.xlu0 %2031
      %2033 = vrot.lane.b32.xlu0 %v1961, 64
      %v2034 = vpop.permute.xlu0 %2033
      %2035 = vrot.lane.b32.xlu0 %v1962, 64
      %v2036 = vpop.permute.xlu0 %2035
      %2037 = vrot.lane.b32.xlu0 %v1963, 64
      %v2038 = vpop.permute.xlu0 %2037
      %2039 = vrot.lane.b32.xlu0 %v1964, 64
      %v2040 = vpop.permute.xlu0 %2039
      %2041 = vrot.lane.b32.xlu0 %v1965, 64
      %v2042 = vpop.permute.xlu0 %2041
      %2043 = vrot.lane.b32.xlu0 %v1966, 64
      %v2044 = vpop.permute.xlu0 %2043
      %2045 = vrot.lane.b32.xlu0 %v1967, 64
      %v2046 = vpop.permute.xlu0 %2045
      %2047 = vrot.lane.b32.xlu0 %v1968, 64
      %v2048 = vpop.permute.xlu0 %2047
      %2049 = vrot.lane.b32.xlu0 %v1969, 64
      %v2050 = vpop.permute.xlu0 %2049
      %2051 = vrot.lane.b32.xlu0 %v1970, 64
      %v2052 = vpop.permute.xlu0 %2051
      %2053 = vrot.lane.b32.xlu0 %v1971, 64
      %v2054 = vpop.permute.xlu0 %2053
      %2055 = vrot.lane.b32.xlu0 %v1972, 64
      %v2056 = vpop.permute.xlu0 %2055
      %2057 = vrot.lane.b32.xlu0 %v1973, 64
      %v2058 = vpop.permute.xlu0 %2057
      %2059 = vrot.lane.b32.xlu0 %v1974, 64
      %v2060 = vpop.permute.xlu0 %2059
      %2061 = vrot.lane.b32.xlu0 %v1975, 64
      %v2062 = vpop.permute.xlu0 %2061
      %2063 = vrot.lane.b32.xlu0 %v1976, 64
      %v2064 = vpop.permute.xlu0 %2063
      %2065 = vrot.lane.b32.xlu0 %v1977, 64
      %v2066 = vpop.permute.xlu0 %2065
      %2067 = vrot.lane.b32.xlu0 %v1978, 64
      %v2068 = vpop.permute.xlu0 %2067
      %2069 = vrot.lane.b32.xlu0 %v1979, 64
      %v2070 = vpop.permute.xlu0 %2069
      %2071 = vrot.lane.b32.xlu0 %v1980, 64
      %v2072 = vpop.permute.xlu0 %2071
      %2073 = vrot.lane.b32.xlu0 %v1981, 64
      %v2074 = vpop.permute.xlu0 %2073
      %2075 = vrot.lane.b32.xlu0 %v1982, 64
      %v2076 = vpop.permute.xlu0 %2075
      %2077 = vrot.lane.b32.xlu0 %v1983, 64
      %v2078 = vpop.permute.xlu0 %2077
      %2079 = vrot.lane.b32.xlu0 %v1984, 64
      %v2080 = vpop.permute.xlu0 %2079
      %vm2113 = vcmask 785920
      %2114 = vst.msk [vmem:[#allocation3] sm:$0xff] %vm2113, %v2018
      %2115 = vst.msk [vmem:[#allocation3 + $0x18] sm:$0xff] %vm2113, %v2020
      %2116 = vst.msk [vmem:[#allocation3 + $0x30] sm:$0xff] %vm2113, %v2022
      %2117 = vst.msk [vmem:[#allocation3 + $0x48] sm:$0xff] %vm2113, %v2024
      %2118 = vst.msk [vmem:[#allocation3 + $0x60] sm:$0xff] %vm2113, %v2026
      %2119 = vst.msk [vmem:[#allocation3 + $0x78] sm:$0xff] %vm2113, %v2028
      %2120 = vst.msk [vmem:[#allocation3 + $0x90] sm:$0xff] %vm2113, %v2030
      %2121 = vst.msk [vmem:[#allocation3 + $0xa8] sm:$0xff] %vm2113, %v2032
      %2122 = vst.msk [vmem:[#allocation3 + $0xc0] sm:$0xff] %vm2113, %v2034
      %2123 = vst.msk [vmem:[#allocation3 + $0xd8] sm:$0xff] %vm2113, %v2036
      %2124 = vst.msk [vmem:[#allocation3 + $0xf0] sm:$0xff] %vm2113, %v2038
      %2125 = vst.msk [vmem:[#allocation3 + $0x108] sm:$0xff] %vm2113, %v2040
      %2126 = vst.msk [vmem:[#allocation3 + $0x120] sm:$0xff] %vm2113, %v2042
      %2127 = vst.msk [vmem:[#allocation3 + $0x138] sm:$0xff] %vm2113, %v2044
      %2128 = vst.msk [vmem:[#allocation3 + $0x150] sm:$0xff] %vm2113, %v2046
      %2129 = vst.msk [vmem:[#allocation3 + $0x168] sm:$0xff] %vm2113, %v2048
      %2130 = vst.msk [vmem:[#allocation3 + $0x180] sm:$0xff] %vm2113, %v2050
      %2131 = vst.msk [vmem:[#allocation3 + $0x198] sm:$0xff] %vm2113, %v2052
      %2132 = vst.msk [vmem:[#allocation3 + $0x1b0] sm:$0xff] %vm2113, %v2054
      %2133 = vst.msk [vmem:[#allocation3 + $0x1c8] sm:$0xff] %vm2113, %v2056
      %2134 = vst.msk [vmem:[#allocation3 + $0x1e0] sm:$0xff] %vm2113, %v2058
      %2135 = vst.msk [vmem:[#allocation3 + $0x1f8] sm:$0xff] %vm2113, %v2060
      %2136 = vst.msk [vmem:[#allocation3 + $0x210] sm:$0xff] %vm2113, %v2062
      %2137 = vst.msk [vmem:[#allocation3 + $0x228] sm:$0xff] %vm2113, %v2064
      %2138 = vst.msk [vmem:[#allocation3 + $0x240] sm:$0xff] %vm2113, %v2066
      %2139 = vst.msk [vmem:[#allocation3 + $0x258] sm:$0xff] %vm2113, %v2068
      %2140 = vst.msk [vmem:[#allocation3 + $0x270] sm:$0xff] %vm2113, %v2070
      %2141 = vst.msk [vmem:[#allocation3 + $0x288] sm:$0xff] %vm2113, %v2072
      %2142 = vst.msk [vmem:[#allocation3 + $0x2a0] sm:$0xff] %vm2113, %v2074
      %2143 = vst.msk [vmem:[#allocation3 + $0x2b8] sm:$0xff] %vm2113, %v2076
      %2144 = vst.msk [vmem:[#allocation3 + $0x2d0] sm:$0xff] %vm2113, %v2078
      %2145 = vst.msk [vmem:[#allocation3 + $0x2e8] sm:$0xff] %vm2113, %v2080
      %v2146 = vld [vmem:[#allocation2 + $0x10] sm:$0xff]
      %v2147 = vld [vmem:[#allocation2 + $0x18] sm:$0xff]
      %v2148 = vld [vmem:[#allocation2 + $0x20] sm:$0xff]
      %v2149 = vld [vmem:[#allocation2 + $0x28] sm:$0xff]
      %v2150 = vld [vmem:[#allocation2 + $0x30] sm:$0xff]
      %v2151 = vld [vmem:[#allocation2 + $0x38] sm:$0xff]
      %v2152 = vld [vmem:[#allocation2 + $0x40] sm:$0xff]
      %v2153 = vld [vmem:[#allocation2 + $0x48] sm:$0xff]
      %v2154 = vld [vmem:[#allocation2 + $0x50] sm:$0xff]
      %v2155 = vld [vmem:[#allocation2 + $0x58] sm:$0xff]
      %v2156 = vld [vmem:[#allocation2 + $0x60] sm:$0xff]
      %v2157 = vld [vmem:[#allocation2 + $0x68] sm:$0xff]
      %v2158 = vld [vmem:[#allocation2 + $0x70] sm:$0xff]
      %v2159 = vld [vmem:[#allocation2 + $0x78] sm:$0xff]
      %v2160 = vld [vmem:[#allocation2 + $0x80] sm:$0xff]
      %v2161 = vld [vmem:[#allocation2 + $0x88] sm:$0xff]
      %v2162 = vld [vmem:[#allocation2 + $0x90] sm:$0xff]
      %v2163 = vld [vmem:[#allocation2 + $0x98] sm:$0xff]
      %v2164 = vld [vmem:[#allocation2 + $0xa0] sm:$0xff]
      %v2165 = vld [vmem:[#allocation2 + $0xa8] sm:$0xff]
      %v2166 = vld [vmem:[#allocation2 + $0xb0] sm:$0xff]
      %v2167 = vld [vmem:[#allocation2 + $0xb8] sm:$0xff]
      %v2168 = vld [vmem:[#allocation2 + $0xc0] sm:$0xff]
      %v2169 = vld [vmem:[#allocation2 + $0xc8] sm:$0xff]
      %v2170 = vld [vmem:[#allocation2 + $0xd0] sm:$0xff]
      %v2171 = vld [vmem:[#allocation2 + $0xd8] sm:$0xff]
      %v2172 = vld [vmem:[#allocation2 + $0xe0] sm:$0xff]
      %v2173 = vld [vmem:[#allocation2 + $0xe8] sm:$0xff]
      %v2174 = vld [vmem:[#allocation2 + $0xf0] sm:$0xff]
      %v2175 = vld [vmem:[#allocation2 + $0xf8] sm:$0xff]
      %v2176 = vld [vmem:[#allocation2 + $0x100] sm:$0xff]
      %v2177 = vld [vmem:[#allocation2 + $0x108] sm:$0xff]
      %v2178 = vmul.f32 %v2146, %v1503
      %v2179 = vmul.f32 %v2147, %v1504
      %v2180 = vmul.f32 %v2148, %v1505
      %v2181 = vmul.f32 %v2149, %v1506
      %v2182 = vmul.f32 %v2150, %v1507
      %v2183 = vmul.f32 %v2151, %v1508
      %v2184 = vmul.f32 %v2152, %v1509
      %v2185 = vmul.f32 %v2153, %v1510
      %v2186 = vmul.f32 %v2154, %v1511
      %v2187 = vmul.f32 %v2155, %v1512
      %v2188 = vmul.f32 %v2156, %v1513
      %v2189 = vmul.f32 %v2157, %v1514
      %v2190 = vmul.f32 %v2158, %v1515
      %v2191 = vmul.f32 %v2159, %v1516
      %v2192 = vmul.f32 %v2160, %v1517
      %v2193 = vmul.f32 %v2161, %v1518
      %v2194 = vmul.f32 %v2162, %v1519
      %v2195 = vmul.f32 %v2163, %v1520
      %v2196 = vmul.f32 %v2164, %v1521
      %v2197 = vmul.f32 %v2165, %v1522
      %v2198 = vmul.f32 %v2166, %v1523
      %v2199 = vmul.f32 %v2167, %v1524
      %v2200 = vmul.f32 %v2168, %v1525
      %v2201 = vmul.f32 %v2169, %v1526
      %v2202 = vmul.f32 %v2170, %v1527
      %v2203 = vmul.f32 %v2171, %v1528
      %v2204 = vmul.f32 %v2172, %v1529
      %v2205 = vmul.f32 %v2173, %v1530
      %v2206 = vmul.f32 %v2174, %v1531
      %v2207 = vmul.f32 %v2175, %v1532
      %v2208 = vmul.f32 %v2176, %v1533
      %v2209 = vmul.f32 %v2177, %v1534
      %2242 = vrot.lane.b32.xlu0 %v2178, 96
      %v2243 = vpop.permute.xlu0 %2242
      %2244 = vrot.lane.b32.xlu0 %v2179, 96
      %v2245 = vpop.permute.xlu0 %2244
      %2246 = vrot.lane.b32.xlu0 %v2180, 96
      %v2247 = vpop.permute.xlu0 %2246
      %2248 = vrot.lane.b32.xlu0 %v2181, 96
      %v2249 = vpop.permute.xlu0 %2248
      %2250 = vrot.lane.b32.xlu0 %v2182, 96
      %v2251 = vpop.permute.xlu0 %2250
      %2252 = vrot.lane.b32.xlu0 %v2183, 96
      %v2253 = vpop.permute.xlu0 %2252
      %2254 = vrot.lane.b32.xlu0 %v2184, 96
      %v2255 = vpop.permute.xlu0 %2254
      %2256 = vrot.lane.b32.xlu0 %v2185, 96
      %v2257 = vpop.permute.xlu0 %2256
      %2258 = vrot.lane.b32.xlu0 %v2186, 96
      %v2259 = vpop.permute.xlu0 %2258
      %2260 = vrot.lane.b32.xlu0 %v2187, 96
      %v2261 = vpop.permute.xlu0 %2260
      %2262 = vrot.lane.b32.xlu0 %v2188, 96
      %v2263 = vpop.permute.xlu0 %2262
      %2264 = vrot.lane.b32.xlu0 %v2189, 96
      %v2265 = vpop.permute.xlu0 %2264
      %2266 = vrot.lane.b32.xlu0 %v2190, 96
      %v2267 = vpop.permute.xlu0 %2266
      %2268 = vrot.lane.b32.xlu0 %v2191, 96
      %v2269 = vpop.permute.xlu0 %2268
      %2270 = vrot.lane.b32.xlu0 %v2192, 96
      %v2271 = vpop.permute.xlu0 %2270
      %2272 = vrot.lane.b32.xlu0 %v2193, 96
      %v2273 = vpop.permute.xlu0 %2272
      %2274 = vrot.lane.b32.xlu0 %v2194, 96
      %v2275 = vpop.permute.xlu0 %2274
      %2276 = vrot.lane.b32.xlu0 %v2195, 96
      %v2277 = vpop.permute.xlu0 %2276
      %2278 = vrot.lane.b32.xlu0 %v2196, 96
      %v2279 = vpop.permute.xlu0 %2278
      %2280 = vrot.lane.b32.xlu0 %v2197, 96
      %v2281 = vpop.permute.xlu0 %2280
      %2282 = vrot.lane.b32.xlu0 %v2198, 96
      %v2283 = vpop.permute.xlu0 %2282
      %2284 = vrot.lane.b32.xlu0 %v2199, 96
      %v2285 = vpop.permute.xlu0 %2284
      %2286 = vrot.lane.b32.xlu0 %v2200, 96
      %v2287 = vpop.permute.xlu0 %2286
      %2288 = vrot.lane.b32.xlu0 %v2201, 96
      %v2289 = vpop.permute.xlu0 %2288
      %2290 = vrot.lane.b32.xlu0 %v2202, 96
      %v2291 = vpop.permute.xlu0 %2290
      %2292 = vrot.lane.b32.xlu0 %v2203, 96
      %v2293 = vpop.permute.xlu0 %2292
      %2294 = vrot.lane.b32.xlu0 %v2204, 96
      %v2295 = vpop.permute.xlu0 %2294
      %2296 = vrot.lane.b32.xlu0 %v2205, 96
      %v2297 = vpop.permute.xlu0 %2296
      %2298 = vrot.lane.b32.xlu0 %v2206, 96
      %v2299 = vpop.permute.xlu0 %2298
      %2300 = vrot.lane.b32.xlu0 %v2207, 96
      %v2301 = vpop.permute.xlu0 %2300
      %2302 = vrot.lane.b32.xlu0 %v2208, 96
      %v2303 = vpop.permute.xlu0 %2302
      %2304 = vrot.lane.b32.xlu0 %v2209, 96
      %v2305 = vpop.permute.xlu0 %2304
      %vm2338 = vcmask 1048320
      %2339 = vst.msk [vmem:[#allocation3] sm:$0xff] %vm2338, %v2243
      %2340 = vst.msk [vmem:[#allocation3 + $0x18] sm:$0xff] %vm2338, %v2245
      %2341 = vst.msk [vmem:[#allocation3 + $0x30] sm:$0xff] %vm2338, %v2247
      %2342 = vst.msk [vmem:[#allocation3 + $0x48] sm:$0xff] %vm2338, %v2249
      %2343 = vst.msk [vmem:[#allocation3 + $0x60] sm:$0xff] %vm2338, %v2251
      %2344 = vst.msk [vmem:[#allocation3 + $0x78] sm:$0xff] %vm2338, %v2253
      %2345 = vst.msk [vmem:[#allocation3 + $0x90] sm:$0xff] %vm2338, %v2255
      %2346 = vst.msk [vmem:[#allocation3 + $0xa8] sm:$0xff] %vm2338, %v2257
      %2347 = vst.msk [vmem:[#allocation3 + $0xc0] sm:$0xff] %vm2338, %v2259
      %2348 = vst.msk [vmem:[#allocation3 + $0xd8] sm:$0xff] %vm2338, %v2261
      %2349 = vst.msk [vmem:[#allocation3 + $0xf0] sm:$0xff] %vm2338, %v2263
      %2350 = vst.msk [vmem:[#allocation3 + $0x108] sm:$0xff] %vm2338, %v2265
      %2351 = vst.msk [vmem:[#allocation3 + $0x120] sm:$0xff] %vm2338, %v2267
      %2352 = vst.msk [vmem:[#allocation3 + $0x138] sm:$0xff] %vm2338, %v2269
      %2353 = vst.msk [vmem:[#allocation3 + $0x150] sm:$0xff] %vm2338, %v2271
      %2354 = vst.msk [vmem:[#allocation3 + $0x168] sm:$0xff] %vm2338, %v2273
      %2355 = vst.msk [vmem:[#allocation3 + $0x180] sm:$0xff] %vm2338, %v2275
      %2356 = vst.msk [vmem:[#allocation3 + $0x198] sm:$0xff] %vm2338, %v2277
      %2357 = vst.msk [vmem:[#allocation3 + $0x1b0] sm:$0xff] %vm2338, %v2279
      %2358 = vst.msk [vmem:[#allocation3 + $0x1c8] sm:$0xff] %vm2338, %v2281
      %2359 = vst.msk [vmem:[#allocation3 + $0x1e0] sm:$0xff] %vm2338, %v2283
      %2360 = vst.msk [vmem:[#allocation3 + $0x1f8] sm:$0xff] %vm2338, %v2285
      %2361 = vst.msk [vmem:[#allocation3 + $0x210] sm:$0xff] %vm2338, %v2287
      %2362 = vst.msk [vmem:[#allocation3 + $0x228] sm:$0xff] %vm2338, %v2289
      %2363 = vst.msk [vmem:[#allocation3 + $0x240] sm:$0xff] %vm2338, %v2291
      %2364 = vst.msk [vmem:[#allocation3 + $0x258] sm:$0xff] %vm2338, %v2293
      %2365 = vst.msk [vmem:[#allocation3 + $0x270] sm:$0xff] %vm2338, %v2295
      %2366 = vst.msk [vmem:[#allocation3 + $0x288] sm:$0xff] %vm2338, %v2297
      %2367 = vst.msk [vmem:[#allocation3 + $0x2a0] sm:$0xff] %vm2338, %v2299
      %2368 = vst.msk [vmem:[#allocation3 + $0x2b8] sm:$0xff] %vm2338, %v2301
      %2369 = vst.msk [vmem:[#allocation3 + $0x2d0] sm:$0xff] %vm2338, %v2303
      %2370 = vst.msk [vmem:[#allocation3 + $0x2e8] sm:$0xff] %vm2338, %v2305
      %v2371 = vld [vmem:[#allocation2 + $0x11] sm:$0xff]
      %v2372 = vld [vmem:[#allocation2 + $0x19] sm:$0xff]
      %v2373 = vld [vmem:[#allocation2 + $0x21] sm:$0xff]
      %v2374 = vld [vmem:[#allocation2 + $0x29] sm:$0xff]
      %v2375 = vld [vmem:[#allocation2 + $0x31] sm:$0xff]
      %v2376 = vld [vmem:[#allocation2 + $0x39] sm:$0xff]
      %v2377 = vld [vmem:[#allocation2 + $0x41] sm:$0xff]
      %v2378 = vld [vmem:[#allocation2 + $0x49] sm:$0xff]
      %v2379 = vld [vmem:[#allocation2 + $0x51] sm:$0xff]
      %v2380 = vld [vmem:[#allocation2 + $0x59] sm:$0xff]
      %v2381 = vld [vmem:[#allocation2 + $0x61] sm:$0xff]
      %v2382 = vld [vmem:[#allocation2 + $0x69] sm:$0xff]
      %v2383 = vld [vmem:[#allocation2 + $0x71] sm:$0xff]
      %v2384 = vld [vmem:[#allocation2 + $0x79] sm:$0xff]
      %v2385 = vld [vmem:[#allocation2 + $0x81] sm:$0xff]
      %v2386 = vld [vmem:[#allocation2 + $0x89] sm:$0xff]
      %v2387 = vld [vmem:[#allocation2 + $0x91] sm:$0xff]
      %v2388 = vld [vmem:[#allocation2 + $0x99] sm:$0xff]
      %v2389 = vld [vmem:[#allocation2 + $0xa1] sm:$0xff]
      %v2390 = vld [vmem:[#allocation2 + $0xa9] sm:$0xff]
      %v2391 = vld [vmem:[#allocation2 + $0xb1] sm:$0xff]
      %v2392 = vld [vmem:[#allocation2 + $0xb9] sm:$0xff]
      %v2393 = vld [vmem:[#allocation2 + $0xc1] sm:$0xff]
      %v2394 = vld [vmem:[#allocation2 + $0xc9] sm:$0xff]
      %v2395 = vld [vmem:[#allocation2 + $0xd1] sm:$0xff]
      %v2396 = vld [vmem:[#allocation2 + $0xd9] sm:$0xff]
      %v2397 = vld [vmem:[#allocation2 + $0xe1] sm:$0xff]
      %v2398 = vld [vmem:[#allocation2 + $0xe9] sm:$0xff]
      %v2399 = vld [vmem:[#allocation2 + $0xf1] sm:$0xff]
      %v2400 = vld [vmem:[#allocation2 + $0xf9] sm:$0xff]
      %v2401 = vld [vmem:[#allocation2 + $0x101] sm:$0xff]
      %v2402 = vld [vmem:[#allocation2 + $0x109] sm:$0xff]
      %2403 = vst.msk [vmem:[#allocation3 + $0x8] sm:$0xff] %vm1695, %v2371
      %2404 = vst.msk [vmem:[#allocation3 + $0x20] sm:$0xff] %vm1695, %v2372
      %2405 = vst.msk [vmem:[#allocation3 + $0x38] sm:$0xff] %vm1695, %v2373
      %2406 = vst.msk [vmem:[#allocation3 + $0x50] sm:$0xff] %vm1695, %v2374
      %2407 = vst.msk [vmem:[#allocation3 + $0x68] sm:$0xff] %vm1695, %v2375
      %2408 = vst.msk [vmem:[#allocation3 + $0x80] sm:$0xff] %vm1695, %v2376
      %2409 = vst.msk [vmem:[#allocation3 + $0x98] sm:$0xff] %vm1695, %v2377
      %2410 = vst.msk [vmem:[#allocation3 + $0xb0] sm:$0xff] %vm1695, %v2378
      %2411 = vst.msk [vmem:[#allocation3 + $0xc8] sm:$0xff] %vm1695, %v2379
      %2412 = vst.msk [vmem:[#allocation3 + $0xe0] sm:$0xff] %vm1695, %v2380
      %2413 = vst.msk [vmem:[#allocation3 + $0xf8] sm:$0xff] %vm1695, %v2381
      %2414 = vst.msk [vmem:[#allocation3 + $0x110] sm:$0xff] %vm1695, %v2382
      %2415 = vst.msk [vmem:[#allocation3 + $0x128] sm:$0xff] %vm1695, %v2383
      %2416 = vst.msk [vmem:[#allocation3 + $0x140] sm:$0xff] %vm1695, %v2384
      %2417 = vst.msk [vmem:[#allocation3 + $0x158] sm:$0xff] %vm1695, %v2385
      %2418 = vst.msk [vmem:[#allocation3 + $0x170] sm:$0xff] %vm1695, %v2386
      %2419 = vst.msk [vmem:[#allocation3 + $0x188] sm:$0xff] %vm1695, %v2387
      %2420 = vst.msk [vmem:[#allocation3 + $0x1a0] sm:$0xff] %vm1695, %v2388
      %2421 = vst.msk [vmem:[#allocation3 + $0x1b8] sm:$0xff] %vm1695, %v2389
      %2422 = vst.msk [vmem:[#allocation3 + $0x1d0] sm:$0xff] %vm1695, %v2390
      %2423 = vst.msk [vmem:[#allocation3 + $0x1e8] sm:$0xff] %vm1695, %v2391
      %2424 = vst.msk [vmem:[#allocation3 + $0x200] sm:$0xff] %vm1695, %v2392
      %2425 = vst.msk [vmem:[#allocation3 + $0x218] sm:$0xff] %vm1695, %v2393
      %2426 = vst.msk [vmem:[#allocation3 + $0x230] sm:$0xff] %vm1695, %v2394
      %2427 = vst.msk [vmem:[#allocation3 + $0x248] sm:$0xff] %vm1695, %v2395
      %2428 = vst.msk [vmem:[#allocation3 + $0x260] sm:$0xff] %vm1695, %v2396
      %2429 = vst.msk [vmem:[#allocation3 + $0x278] sm:$0xff] %vm1695, %v2397
      %2430 = vst.msk [vmem:[#allocation3 + $0x290] sm:$0xff] %vm1695, %v2398
      %2431 = vst.msk [vmem:[#allocation3 + $0x2a8] sm:$0xff] %vm1695, %v2399
      %2432 = vst.msk [vmem:[#allocation3 + $0x2c0] sm:$0xff] %vm1695, %v2400
      %2433 = vst.msk [vmem:[#allocation3 + $0x2d8] sm:$0xff] %vm1695, %v2401
      %2434 = vst.msk [vmem:[#allocation3 + $0x2f0] sm:$0xff] %vm1695, %v2402
      %v2435 = vld [vmem:[#allocation2 + $0x12] sm:$0xff]
      %v2436 = vld [vmem:[#allocation2 + $0x1a] sm:$0xff]
      %v2437 = vld [vmem:[#allocation2 + $0x22] sm:$0xff]
      %v2438 = vld [vmem:[#allocation2 + $0x2a] sm:$0xff]
      %v2439 = vld [vmem:[#allocation2 + $0x32] sm:$0xff]
      %v2440 = vld [vmem:[#allocation2 + $0x3a] sm:$0xff]
      %v2441 = vld [vmem:[#allocation2 + $0x42] sm:$0xff]
      %v2442 = vld [vmem:[#allocation2 + $0x4a] sm:$0xff]
      %v2443 = vld [vmem:[#allocation2 + $0x52] sm:$0xff]
      %v2444 = vld [vmem:[#allocation2 + $0x5a] sm:$0xff]
      %v2445 = vld [vmem:[#allocation2 + $0x62] sm:$0xff]
      %v2446 = vld [vmem:[#allocation2 + $0x6a] sm:$0xff]
      %v2447 = vld [vmem:[#allocation2 + $0x72] sm:$0xff]
      %v2448 = vld [vmem:[#allocation2 + $0x7a] sm:$0xff]
      %v2449 = vld [vmem:[#allocation2 + $0x82] sm:$0xff]
      %v2450 = vld [vmem:[#allocation2 + $0x8a] sm:$0xff]
      %v2451 = vld [vmem:[#allocation2 + $0x92] sm:$0xff]
      %v2452 = vld [vmem:[#allocation2 + $0x9a] sm:$0xff]
      %v2453 = vld [vmem:[#allocation2 + $0xa2] sm:$0xff]
      %v2454 = vld [vmem:[#allocation2 + $0xaa] sm:$0xff]
      %v2455 = vld [vmem:[#allocation2 + $0xb2] sm:$0xff]
      %v2456 = vld [vmem:[#allocation2 + $0xba] sm:$0xff]
      %v2457 = vld [vmem:[#allocation2 + $0xc2] sm:$0xff]
      %v2458 = vld [vmem:[#allocation2 + $0xca] sm:$0xff]
      %v2459 = vld [vmem:[#allocation2 + $0xd2] sm:$0xff]
      %v2460 = vld [vmem:[#allocation2 + $0xda] sm:$0xff]
      %v2461 = vld [vmem:[#allocation2 + $0xe2] sm:$0xff]
      %v2462 = vld [vmem:[#allocation2 + $0xea] sm:$0xff]
      %v2463 = vld [vmem:[#allocation2 + $0xf2] sm:$0xff]
      %v2464 = vld [vmem:[#allocation2 + $0xfa] sm:$0xff]
      %v2465 = vld [vmem:[#allocation2 + $0x102] sm:$0xff]
      %v2466 = vld [vmem:[#allocation2 + $0x10a] sm:$0xff]
      %v2467 = vmul.f32 %v2435, %v1599
      %v2468 = vmul.f32 %v2436, %v1600
      %v2469 = vmul.f32 %v2437, %v1601
      %v2470 = vmul.f32 %v2438, %v1602
      %v2471 = vmul.f32 %v2439, %v1603
      %v2472 = vmul.f32 %v2440, %v1604
      %v2473 = vmul.f32 %v2441, %v1605
      %v2474 = vmul.f32 %v2442, %v1606
      %v2475 = vmul.f32 %v2443, %v1607
      %v2476 = vmul.f32 %v2444, %v1608
      %v2477 = vmul.f32 %v2445, %v1609
      %v2478 = vmul.f32 %v2446, %v1610
      %v2479 = vmul.f32 %v2447, %v1611
      %v2480 = vmul.f32 %v2448, %v1612
      %v2481 = vmul.f32 %v2449, %v1613
      %v2482 = vmul.f32 %v2450, %v1614
      %v2483 = vmul.f32 %v2451, %v1615
      %v2484 = vmul.f32 %v2452, %v1616
      %v2485 = vmul.f32 %v2453, %v1617
      %v2486 = vmul.f32 %v2454, %v1618
      %v2487 = vmul.f32 %v2455, %v1619
      %v2488 = vmul.f32 %v2456, %v1620
      %v2489 = vmul.f32 %v2457, %v1621
      %v2490 = vmul.f32 %v2458, %v1622
      %v2491 = vmul.f32 %v2459, %v1623
      %v2492 = vmul.f32 %v2460, %v1624
      %v2493 = vmul.f32 %v2461, %v1625
      %v2494 = vmul.f32 %v2462, %v1626
      %v2495 = vmul.f32 %v2463, %v1627
      %v2496 = vmul.f32 %v2464, %v1628
      %v2497 = vmul.f32 %v2465, %v1629
      %v2498 = vmul.f32 %v2466, %v1630
      %2531 = vrot.lane.b32.xlu0 %v2467, 32
      %v2532 = vpop.permute.xlu0 %2531
      %2533 = vrot.lane.b32.xlu0 %v2468, 32
      %v2534 = vpop.permute.xlu0 %2533
      %2535 = vrot.lane.b32.xlu0 %v2469, 32
      %v2536 = vpop.permute.xlu0 %2535
      %2537 = vrot.lane.b32.xlu0 %v2470, 32
      %v2538 = vpop.permute.xlu0 %2537
      %2539 = vrot.lane.b32.xlu0 %v2471, 32
      %v2540 = vpop.permute.xlu0 %2539
      %2541 = vrot.lane.b32.xlu0 %v2472, 32
      %v2542 = vpop.permute.xlu0 %2541
      %2543 = vrot.lane.b32.xlu0 %v2473, 32
      %v2544 = vpop.permute.xlu0 %2543
      %2545 = vrot.lane.b32.xlu0 %v2474, 32
      %v2546 = vpop.permute.xlu0 %2545
      %2547 = vrot.lane.b32.xlu0 %v2475, 32
      %v2548 = vpop.permute.xlu0 %2547
      %2549 = vrot.lane.b32.xlu0 %v2476, 32
      %v2550 = vpop.permute.xlu0 %2549
      %2551 = vrot.lane.b32.xlu0 %v2477, 32
      %v2552 = vpop.permute.xlu0 %2551
      %2553 = vrot.lane.b32.xlu0 %v2478, 32
      %v2554 = vpop.permute.xlu0 %2553
      %2555 = vrot.lane.b32.xlu0 %v2479, 32
      %v2556 = vpop.permute.xlu0 %2555
      %2557 = vrot.lane.b32.xlu0 %v2480, 32
      %v2558 = vpop.permute.xlu0 %2557
      %2559 = vrot.lane.b32.xlu0 %v2481, 32
      %v2560 = vpop.permute.xlu0 %2559
      %2561 = vrot.lane.b32.xlu0 %v2482, 32
      %v2562 = vpop.permute.xlu0 %2561
      %2563 = vrot.lane.b32.xlu0 %v2483, 32
      %v2564 = vpop.permute.xlu0 %2563
      %2565 = vrot.lane.b32.xlu0 %v2484, 32
      %v2566 = vpop.permute.xlu0 %2565
      %2567 = vrot.lane.b32.xlu0 %v2485, 32
      %v2568 = vpop.permute.xlu0 %2567
      %2569 = vrot.lane.b32.xlu0 %v2486, 32
      %v2570 = vpop.permute.xlu0 %2569
      %2571 = vrot.lane.b32.xlu0 %v2487, 32
      %v2572 = vpop.permute.xlu0 %2571
      %2573 = vrot.lane.b32.xlu0 %v2488, 32
      %v2574 = vpop.permute.xlu0 %2573
      %2575 = vrot.lane.b32.xlu0 %v2489, 32
      %v2576 = vpop.permute.xlu0 %2575
      %2577 = vrot.lane.b32.xlu0 %v2490, 32
      %v2578 = vpop.permute.xlu0 %2577
      %2579 = vrot.lane.b32.xlu0 %v2491, 32
      %v2580 = vpop.permute.xlu0 %2579
      %2581 = vrot.lane.b32.xlu0 %v2492, 32
      %v2582 = vpop.permute.xlu0 %2581
      %2583 = vrot.lane.b32.xlu0 %v2493, 32
      %v2584 = vpop.permute.xlu0 %2583
      %2585 = vrot.lane.b32.xlu0 %v2494, 32
      %v2586 = vpop.permute.xlu0 %2585
      %2587 = vrot.lane.b32.xlu0 %v2495, 32
      %v2588 = vpop.permute.xlu0 %2587
      %2589 = vrot.lane.b32.xlu0 %v2496, 32
      %v2590 = vpop.permute.xlu0 %2589
      %2591 = vrot.lane.b32.xlu0 %v2497, 32
      %v2592 = vpop.permute.xlu0 %2591
      %2593 = vrot.lane.b32.xlu0 %v2498, 32
      %v2594 = vpop.permute.xlu0 %2593
      %2627 = vst.msk [vmem:[#allocation3 + $0x8] sm:$0xff] %vm1888, %v2532
      %2628 = vst.msk [vmem:[#allocation3 + $0x20] sm:$0xff] %vm1888, %v2534
      %2629 = vst.msk [vmem:[#allocation3 + $0x38] sm:$0xff] %vm1888, %v2536
      %2630 = vst.msk [vmem:[#allocation3 + $0x50] sm:$0xff] %vm1888, %v2538
      %2631 = vst.msk [vmem:[#allocation3 + $0x68] sm:$0xff] %vm1888, %v2540
      %2632 = vst.msk [vmem:[#allocation3 + $0x80] sm:$0xff] %vm1888, %v2542
      %2633 = vst.msk [vmem:[#allocation3 + $0x98] sm:$0xff] %vm1888, %v2544
      %2634 = vst.msk [vmem:[#allocation3 + $0xb0] sm:$0xff] %vm1888, %v2546
      %2635 = vst.msk [vmem:[#allocation3 + $0xc8] sm:$0xff] %vm1888, %v2548
      %2636 = vst.msk [vmem:[#allocation3 + $0xe0] sm:$0xff] %vm1888, %v2550
      %2637 = vst.msk [vmem:[#allocation3 + $0xf8] sm:$0xff] %vm1888, %v2552
      %2638 = vst.msk [vmem:[#allocation3 + $0x110] sm:$0xff] %vm1888, %v2554
      %2639 = vst.msk [vmem:[#allocation3 + $0x128] sm:$0xff] %vm1888, %v2556
      %2640 = vst.msk [vmem:[#allocation3 + $0x140] sm:$0xff] %vm1888, %v2558
      %2641 = vst.msk [vmem:[#allocation3 + $0x158] sm:$0xff] %vm1888, %v2560
      %2642 = vst.msk [vmem:[#allocation3 + $0x170] sm:$0xff] %vm1888, %v2562
      %2643 = vst.msk [vmem:[#allocation3 + $0x188] sm:$0xff] %vm1888, %v2564
      %2644 = vst.msk [vmem:[#allocation3 + $0x1a0] sm:$0xff] %vm1888, %v2566
      %2645 = vst.msk [vmem:[#allocation3 + $0x1b8] sm:$0xff] %vm1888, %v2568
      %2646 = vst.msk [vmem:[#allocation3 + $0x1d0] sm:$0xff] %vm1888, %v2570
      %2647 = vst.msk [vmem:[#allocation3 + $0x1e8] sm:$0xff] %vm1888, %v2572
      %2648 = vst.msk [vmem:[#allocation3 + $0x200] sm:$0xff] %vm1888, %v2574
      %2649 = vst.msk [vmem:[#allocation3 + $0x218] sm:$0xff] %vm1888, %v2576
      %2650 = vst.msk [vmem:[#allocation3 + $0x230] sm:$0xff] %vm1888, %v2578
      %2651 = vst.msk [vmem:[#allocation3 + $0x248] sm:$0xff] %vm1888, %v2580
      %2652 = vst.msk [vmem:[#allocation3 + $0x260] sm:$0xff] %vm1888, %v2582
      %2653 = vst.msk [vmem:[#allocation3 + $0x278] sm:$0xff] %vm1888, %v2584
      %2654 = vst.msk [vmem:[#allocation3 + $0x290] sm:$0xff] %vm1888, %v2586
      %2655 = vst.msk [vmem:[#allocation3 + $0x2a8] sm:$0xff] %vm1888, %v2588
      %2656 = vst.msk [vmem:[#allocation3 + $0x2c0] sm:$0xff] %vm1888, %v2590
      %2657 = vst.msk [vmem:[#allocation3 + $0x2d8] sm:$0xff] %vm1888, %v2592
      %2658 = vst.msk [vmem:[#allocation3 + $0x2f0] sm:$0xff] %vm1888, %v2594
      %v2659 = vld [vmem:[#allocation2 + $0x20] sm:$0xff]
      %v2660 = vld [vmem:[#allocation2 + $0x28] sm:$0xff]
      %v2661 = vld [vmem:[#allocation2 + $0x30] sm:$0xff]
      %v2662 = vld [vmem:[#allocation2 + $0x38] sm:$0xff]
      %v2663 = vld [vmem:[#allocation2 + $0x40] sm:$0xff]
      %v2664 = vld [vmem:[#allocation2 + $0x48] sm:$0xff]
      %v2665 = vld [vmem:[#allocation2 + $0x50] sm:$0xff]
      %v2666 = vld [vmem:[#allocation2 + $0x58] sm:$0xff]
      %v2667 = vld [vmem:[#allocation2 + $0x60] sm:$0xff]
      %v2668 = vld [vmem:[#allocation2 + $0x68] sm:$0xff]
      %v2669 = vld [vmem:[#allocation2 + $0x70] sm:$0xff]
      %v2670 = vld [vmem:[#allocation2 + $0x78] sm:$0xff]
      %v2671 = vld [vmem:[#allocation2 + $0x80] sm:$0xff]
      %v2672 = vld [vmem:[#allocation2 + $0x88] sm:$0xff]
      %v2673 = vld [vmem:[#allocation2 + $0x90] sm:$0xff]
      %v2674 = vld [vmem:[#allocation2 + $0x98] sm:$0xff]
      %v2675 = vld [vmem:[#allocation2 + $0xa0] sm:$0xff]
      %v2676 = vld [vmem:[#allocation2 + $0xa8] sm:$0xff]
      %v2677 = vld [vmem:[#allocation2 + $0xb0] sm:$0xff]
      %v2678 = vld [vmem:[#allocation2 + $0xb8] sm:$0xff]
      %v2679 = vld [vmem:[#allocation2 + $0xc0] sm:$0xff]
      %v2680 = vld [vmem:[#allocation2 + $0xc8] sm:$0xff]
      %v2681 = vld [vmem:[#allocation2 + $0xd0] sm:$0xff]
      %v2682 = vld [vmem:[#allocation2 + $0xd8] sm:$0xff]
      %v2683 = vld [vmem:[#allocation2 + $0xe0] sm:$0xff]
      %v2684 = vld [vmem:[#allocation2 + $0xe8] sm:$0xff]
      %v2685 = vld [vmem:[#allocation2 + $0xf0] sm:$0xff]
      %v2686 = vld [vmem:[#allocation2 + $0xf8] sm:$0xff]
      %v2687 = vld [vmem:[#allocation2 + $0x100] sm:$0xff]
      %v2688 = vld [vmem:[#allocation2 + $0x108] sm:$0xff]
      %v2689 = vld [vmem:[#allocation2 + $0x110] sm:$0xff]
      %v2690 = vld [vmem:[#allocation2 + $0x118] sm:$0xff]
      %v2691 = vmul.f32 %v2659, %v1503
      %v2692 = vmul.f32 %v2660, %v1504
      %v2693 = vmul.f32 %v2661, %v1505
      %v2694 = vmul.f32 %v2662, %v1506
      %v2695 = vmul.f32 %v2663, %v1507
      %v2696 = vmul.f32 %v2664, %v1508
      %v2697 = vmul.f32 %v2665, %v1509
      %v2698 = vmul.f32 %v2666, %v1510
      %v2699 = vmul.f32 %v2667, %v1511
      %v2700 = vmul.f32 %v2668, %v1512
      %v2701 = vmul.f32 %v2669, %v1513
      %v2702 = vmul.f32 %v2670, %v1514
      %v2703 = vmul.f32 %v2671, %v1515
      %v2704 = vmul.f32 %v2672, %v1516
      %v2705 = vmul.f32 %v2673, %v1517
      %v2706 = vmul.f32 %v2674, %v1518
      %v2707 = vmul.f32 %v2675, %v1519
      %v2708 = vmul.f32 %v2676, %v1520
      %v2709 = vmul.f32 %v2677, %v1521
      %v2710 = vmul.f32 %v2678, %v1522
      %v2711 = vmul.f32 %v2679, %v1523
      %v2712 = vmul.f32 %v2680, %v1524
      %v2713 = vmul.f32 %v2681, %v1525
      %v2714 = vmul.f32 %v2682, %v1526
      %v2715 = vmul.f32 %v2683, %v1527
      %v2716 = vmul.f32 %v2684, %v1528
      %v2717 = vmul.f32 %v2685, %v1529
      %v2718 = vmul.f32 %v2686, %v1530
      %v2719 = vmul.f32 %v2687, %v1531
      %v2720 = vmul.f32 %v2688, %v1532
      %v2721 = vmul.f32 %v2689, %v1533
      %v2722 = vmul.f32 %v2690, %v1534
      %2755 = vrot.lane.b32.xlu0 %v2691, 64
      %v2756 = vpop.permute.xlu0 %2755
      %2757 = vrot.lane.b32.xlu0 %v2692, 64
      %v2758 = vpop.permute.xlu0 %2757
      %2759 = vrot.lane.b32.xlu0 %v2693, 64
      %v2760 = vpop.permute.xlu0 %2759
      %2761 = vrot.lane.b32.xlu0 %v2694, 64
      %v2762 = vpop.permute.xlu0 %2761
      %2763 = vrot.lane.b32.xlu0 %v2695, 64
      %v2764 = vpop.permute.xlu0 %2763
      %2765 = vrot.lane.b32.xlu0 %v2696, 64
      %v2766 = vpop.permute.xlu0 %2765
      %2767 = vrot.lane.b32.xlu0 %v2697, 64
      %v2768 = vpop.permute.xlu0 %2767
      %2769 = vrot.lane.b32.xlu0 %v2698, 64
      %v2770 = vpop.permute.xlu0 %2769
      %2771 = vrot.lane.b32.xlu0 %v2699, 64
      %v2772 = vpop.permute.xlu0 %2771
      %2773 = vrot.lane.b32.xlu0 %v2700, 64
      %v2774 = vpop.permute.xlu0 %2773
      %2775 = vrot.lane.b32.xlu0 %v2701, 64
      %v2776 = vpop.permute.xlu0 %2775
      %2777 = vrot.lane.b32.xlu0 %v2702, 64
      %v2778 = vpop.permute.xlu0 %2777
      %2779 = vrot.lane.b32.xlu0 %v2703, 64
      %v2780 = vpop.permute.xlu0 %2779
      %2781 = vrot.lane.b32.xlu0 %v2704, 64
      %v2782 = vpop.permute.xlu0 %2781
      %2783 = vrot.lane.b32.xlu0 %v2705, 64
      %v2784 = vpop.permute.xlu0 %2783
      %2785 = vrot.lane.b32.xlu0 %v2706, 64
      %v2786 = vpop.permute.xlu0 %2785
      %2787 = vrot.lane.b32.xlu0 %v2707, 64
      %v2788 = vpop.permute.xlu0 %2787
      %2789 = vrot.lane.b32.xlu0 %v2708, 64
      %v2790 = vpop.permute.xlu0 %2789
      %2791 = vrot.lane.b32.xlu0 %v2709, 64
      %v2792 = vpop.permute.xlu0 %2791
      %2793 = vrot.lane.b32.xlu0 %v2710, 64
      %v2794 = vpop.permute.xlu0 %2793
      %2795 = vrot.lane.b32.xlu0 %v2711, 64
      %v2796 = vpop.permute.xlu0 %2795
      %2797 = vrot.lane.b32.xlu0 %v2712, 64
      %v2798 = vpop.permute.xlu0 %2797
      %2799 = vrot.lane.b32.xlu0 %v2713, 64
      %v2800 = vpop.permute.xlu0 %2799
      %2801 = vrot.lane.b32.xlu0 %v2714, 64
      %v2802 = vpop.permute.xlu0 %2801
      %2803 = vrot.lane.b32.xlu0 %v2715, 64
      %v2804 = vpop.permute.xlu0 %2803
      %2805 = vrot.lane.b32.xlu0 %v2716, 64
      %v2806 = vpop.permute.xlu0 %2805
      %2807 = vrot.lane.b32.xlu0 %v2717, 64
      %v2808 = vpop.permute.xlu0 %2807
      %2809 = vrot.lane.b32.xlu0 %v2718, 64
      %v2810 = vpop.permute.xlu0 %2809
      %2811 = vrot.lane.b32.xlu0 %v2719, 64
      %v2812 = vpop.permute.xlu0 %2811
      %2813 = vrot.lane.b32.xlu0 %v2720, 64
      %v2814 = vpop.permute.xlu0 %2813
      %2815 = vrot.lane.b32.xlu0 %v2721, 64
      %v2816 = vpop.permute.xlu0 %2815
      %2817 = vrot.lane.b32.xlu0 %v2722, 64
      %v2818 = vpop.permute.xlu0 %2817
      %2851 = vst.msk [vmem:[#allocation3 + $0x8] sm:$0xff] %vm2113, %v2756
      %2852 = vst.msk [vmem:[#allocation3 + $0x20] sm:$0xff] %vm2113, %v2758
      %2853 = vst.msk [vmem:[#allocation3 + $0x38] sm:$0xff] %vm2113, %v2760
      %2854 = vst.msk [vmem:[#allocation3 + $0x50] sm:$0xff] %vm2113, %v2762
      %2855 = vst.msk [vmem:[#allocation3 + $0x68] sm:$0xff] %vm2113, %v2764
      %2856 = vst.msk [vmem:[#allocation3 + $0x80] sm:$0xff] %vm2113, %v2766
      %2857 = vst.msk [vmem:[#allocation3 + $0x98] sm:$0xff] %vm2113, %v2768
      %2858 = vst.msk [vmem:[#allocation3 + $0xb0] sm:$0xff] %vm2113, %v2770
      %2859 = vst.msk [vmem:[#allocation3 + $0xc8] sm:$0xff] %vm2113, %v2772
      %2860 = vst.msk [vmem:[#allocation3 + $0xe0] sm:$0xff] %vm2113, %v2774
      %2861 = vst.msk [vmem:[#allocation3 + $0xf8] sm:$0xff] %vm2113, %v2776
      %2862 = vst.msk [vmem:[#allocation3 + $0x110] sm:$0xff] %vm2113, %v2778
      %2863 = vst.msk [vmem:[#allocation3 + $0x128] sm:$0xff] %vm2113, %v2780
      %2864 = vst.msk [vmem:[#allocation3 + $0x140] sm:$0xff] %vm2113, %v2782
      %2865 = vst.msk [vmem:[#allocation3 + $0x158] sm:$0xff] %vm2113, %v2784
      %2866 = vst.msk [vmem:[#allocation3 + $0x170] sm:$0xff] %vm2113, %v2786
      %2867 = vst.msk [vmem:[#allocation3 + $0x188] sm:$0xff] %vm2113, %v2788
      %2868 = vst.msk [vmem:[#allocation3 + $0x1a0] sm:$0xff] %vm2113, %v2790
      %2869 = vst.msk [vmem:[#allocation3 + $0x1b8] sm:$0xff] %vm2113, %v2792
      %2870 = vst.msk [vmem:[#allocation3 + $0x1d0] sm:$0xff] %vm2113, %v2794
      %2871 = vst.msk [vmem:[#allocation3 + $0x1e8] sm:$0xff] %vm2113, %v2796
      %2872 = vst.msk [vmem:[#allocation3 + $0x200] sm:$0xff] %vm2113, %v2798
      %2873 = vst.msk [vmem:[#allocation3 + $0x218] sm:$0xff] %vm2113, %v2800
      %2874 = vst.msk [vmem:[#allocation3 + $0x230] sm:$0xff] %vm2113, %v2802
      %2875 = vst.msk [vmem:[#allocation3 + $0x248] sm:$0xff] %vm2113, %v2804
      %2876 = vst.msk [vmem:[#allocation3 + $0x260] sm:$0xff] %vm2113, %v2806
      %2877 = vst.msk [vmem:[#allocation3 + $0x278] sm:$0xff] %vm2113, %v2808
      %2878 = vst.msk [vmem:[#allocation3 + $0x290] sm:$0xff] %vm2113, %v2810
      %2879 = vst.msk [vmem:[#allocation3 + $0x2a8] sm:$0xff] %vm2113, %v2812
      %2880 = vst.msk [vmem:[#allocation3 + $0x2c0] sm:$0xff] %vm2113, %v2814
      %2881 = vst.msk [vmem:[#allocation3 + $0x2d8] sm:$0xff] %vm2113, %v2816
      %2882 = vst.msk [vmem:[#allocation3 + $0x2f0] sm:$0xff] %vm2113, %v2818
      %v2883 = vld [vmem:[#allocation2 + $0x21] sm:$0xff]
      %v2884 = vld [vmem:[#allocation2 + $0x29] sm:$0xff]
      %v2885 = vld [vmem:[#allocation2 + $0x31] sm:$0xff]
      %v2886 = vld [vmem:[#allocation2 + $0x39] sm:$0xff]
      %v2887 = vld [vmem:[#allocation2 + $0x41] sm:$0xff]
      %v2888 = vld [vmem:[#allocation2 + $0x49] sm:$0xff]
      %v2889 = vld [vmem:[#allocation2 + $0x51] sm:$0xff]
      %v2890 = vld [vmem:[#allocation2 + $0x59] sm:$0xff]
      %v2891 = vld [vmem:[#allocation2 + $0x61] sm:$0xff]
      %v2892 = vld [vmem:[#allocation2 + $0x69] sm:$0xff]
      %v2893 = vld [vmem:[#allocation2 + $0x71] sm:$0xff]
      %v2894 = vld [vmem:[#allocation2 + $0x79] sm:$0xff]
      %v2895 = vld [vmem:[#allocation2 + $0x81] sm:$0xff]
      %v2896 = vld [vmem:[#allocation2 + $0x89] sm:$0xff]
      %v2897 = vld [vmem:[#allocation2 + $0x91] sm:$0xff]
      %v2898 = vld [vmem:[#allocation2 + $0x99] sm:$0xff]
      %v2899 = vld [vmem:[#allocation2 + $0xa1] sm:$0xff]
      %v2900 = vld [vmem:[#allocation2 + $0xa9] sm:$0xff]
      %v2901 = vld [vmem:[#allocation2 + $0xb1] sm:$0xff]
      %v2902 = vld [vmem:[#allocation2 + $0xb9] sm:$0xff]
      %v2903 = vld [vmem:[#allocation2 + $0xc1] sm:$0xff]
      %v2904 = vld [vmem:[#allocation2 + $0xc9] sm:$0xff]
      %v2905 = vld [vmem:[#allocation2 + $0xd1] sm:$0xff]
      %v2906 = vld [vmem:[#allocation2 + $0xd9] sm:$0xff]
      %v2907 = vld [vmem:[#allocation2 + $0xe1] sm:$0xff]
      %v2908 = vld [vmem:[#allocation2 + $0xe9] sm:$0xff]
      %v2909 = vld [vmem:[#allocation2 + $0xf1] sm:$0xff]
      %v2910 = vld [vmem:[#allocation2 + $0xf9] sm:$0xff]
      %v2911 = vld [vmem:[#allocation2 + $0x101] sm:$0xff]
      %v2912 = vld [vmem:[#allocation2 + $0x109] sm:$0xff]
      %v2913 = vld [vmem:[#allocation2 + $0x111] sm:$0xff]
      %v2914 = vld [vmem:[#allocation2 + $0x119] sm:$0xff]
      %2947 = vrot.lane.b32.xlu0 %v2883, 96
      %v2948 = vpop.permute.xlu0 %2947
      %2949 = vrot.lane.b32.xlu0 %v2884, 96
      %v2950 = vpop.permute.xlu0 %2949
      %2951 = vrot.lane.b32.xlu0 %v2885, 96
      %v2952 = vpop.permute.xlu0 %2951
      %2953 = vrot.lane.b32.xlu0 %v2886, 96
      %v2954 = vpop.permute.xlu0 %2953
      %2955 = vrot.lane.b32.xlu0 %v2887, 96
      %v2956 = vpop.permute.xlu0 %2955
      %2957 = vrot.lane.b32.xlu0 %v2888, 96
      %v2958 = vpop.permute.xlu0 %2957
      %2959 = vrot.lane.b32.xlu0 %v2889, 96
      %v2960 = vpop.permute.xlu0 %2959
      %2961 = vrot.lane.b32.xlu0 %v2890, 96
      %v2962 = vpop.permute.xlu0 %2961
      %2963 = vrot.lane.b32.xlu0 %v2891, 96
      %v2964 = vpop.permute.xlu0 %2963
      %2965 = vrot.lane.b32.xlu0 %v2892, 96
      %v2966 = vpop.permute.xlu0 %2965
      %2967 = vrot.lane.b32.xlu0 %v2893, 96
      %v2968 = vpop.permute.xlu0 %2967
      %2969 = vrot.lane.b32.xlu0 %v2894, 96
      %v2970 = vpop.permute.xlu0 %2969
      %2971 = vrot.lane.b32.xlu0 %v2895, 96
      %v2972 = vpop.permute.xlu0 %2971
      %2973 = vrot.lane.b32.xlu0 %v2896, 96
      %v2974 = vpop.permute.xlu0 %2973
      %2975 = vrot.lane.b32.xlu0 %v2897, 96
      %v2976 = vpop.permute.xlu0 %2975
      %2977 = vrot.lane.b32.xlu0 %v2898, 96
      %v2978 = vpop.permute.xlu0 %2977
      %2979 = vrot.lane.b32.xlu0 %v2899, 96
      %v2980 = vpop.permute.xlu0 %2979
      %2981 = vrot.lane.b32.xlu0 %v2900, 96
      %v2982 = vpop.permute.xlu0 %2981
      %2983 = vrot.lane.b32.xlu0 %v2901, 96
      %v2984 = vpop.permute.xlu0 %2983
      %2985 = vrot.lane.b32.xlu0 %v2902, 96
      %v2986 = vpop.permute.xlu0 %2985
      %2987 = vrot.lane.b32.xlu0 %v2903, 96
      %v2988 = vpop.permute.xlu0 %2987
      %2989 = vrot.lane.b32.xlu0 %v2904, 96
      %v2990 = vpop.permute.xlu0 %2989
      %2991 = vrot.lane.b32.xlu0 %v2905, 96
      %v2992 = vpop.permute.xlu0 %2991
      %2993 = vrot.lane.b32.xlu0 %v2906, 96
      %v2994 = vpop.permute.xlu0 %2993
      %2995 = vrot.lane.b32.xlu0 %v2907, 96
      %v2996 = vpop.permute.xlu0 %2995
      %2997 = vrot.lane.b32.xlu0 %v2908, 96
      %v2998 = vpop.permute.xlu0 %2997
      %2999 = vrot.lane.b32.xlu0 %v2909, 96
      %v3000 = vpop.permute.xlu0 %2999
      %3001 = vrot.lane.b32.xlu0 %v2910, 96
      %v3002 = vpop.permute.xlu0 %3001
      %3003 = vrot.lane.b32.xlu0 %v2911, 96
      %v3004 = vpop.permute.xlu0 %3003
      %3005 = vrot.lane.b32.xlu0 %v2912, 96
      %v3006 = vpop.permute.xlu0 %3005
      %3007 = vrot.lane.b32.xlu0 %v2913, 96
      %v3008 = vpop.permute.xlu0 %3007
      %3009 = vrot.lane.b32.xlu0 %v2914, 96
      %v3010 = vpop.permute.xlu0 %3009
      %3043 = vst.msk [vmem:[#allocation3 + $0x8] sm:$0xff] %vm2338, %v2948
      %3044 = vst.msk [vmem:[#allocation3 + $0x20] sm:$0xff] %vm2338, %v2950
      %3045 = vst.msk [vmem:[#allocation3 + $0x38] sm:$0xff] %vm2338, %v2952
      %3046 = vst.msk [vmem:[#allocation3 + $0x50] sm:$0xff] %vm2338, %v2954
      %3047 = vst.msk [vmem:[#allocation3 + $0x68] sm:$0xff] %vm2338, %v2956
      %3048 = vst.msk [vmem:[#allocation3 + $0x80] sm:$0xff] %vm2338, %v2958
      %3049 = vst.msk [vmem:[#allocation3 + $0x98] sm:$0xff] %vm2338, %v2960
      %3050 = vst.msk [vmem:[#allocation3 + $0xb0] sm:$0xff] %vm2338, %v2962
      %3051 = vst.msk [vmem:[#allocation3 + $0xc8] sm:$0xff] %vm2338, %v2964
      %3052 = vst.msk [vmem:[#allocation3 + $0xe0] sm:$0xff] %vm2338, %v2966
      %3053 = vst.msk [vmem:[#allocation3 + $0xf8] sm:$0xff] %vm2338, %v2968
      %3054 = vst.msk [vmem:[#allocation3 + $0x110] sm:$0xff] %vm2338, %v2970
      %3055 = vst.msk [vmem:[#allocation3 + $0x128] sm:$0xff] %vm2338, %v2972
      %3056 = vst.msk [vmem:[#allocation3 + $0x140] sm:$0xff] %vm2338, %v2974
      %3057 = vst.msk [vmem:[#allocation3 + $0x158] sm:$0xff] %vm2338, %v2976
      %3058 = vst.msk [vmem:[#allocation3 + $0x170] sm:$0xff] %vm2338, %v2978
      %3059 = vst.msk [vmem:[#allocation3 + $0x188] sm:$0xff] %vm2338, %v2980
      %3060 = vst.msk [vmem:[#allocation3 + $0x1a0] sm:$0xff] %vm2338, %v2982
      %3061 = vst.msk [vmem:[#allocation3 + $0x1b8] sm:$0xff] %vm2338, %v2984
      %3062 = vst.msk [vmem:[#allocation3 + $0x1d0] sm:$0xff] %vm2338, %v2986
      %3063 = vst.msk [vmem:[#allocation3 + $0x1e8] sm:$0xff] %vm2338, %v2988
      %3064 = vst.msk [vmem:[#allocation3 + $0x200] sm:$0xff] %vm2338, %v2990
      %3065 = vst.msk [vmem:[#allocation3 + $0x218] sm:$0xff] %vm2338, %v2992
      %3066 = vst.msk [vmem:[#allocation3 + $0x230] sm:$0xff] %vm2338, %v2994
      %3067 = vst.msk [vmem:[#allocation3 + $0x248] sm:$0xff] %vm2338, %v2996
      %3068 = vst.msk [vmem:[#allocation3 + $0x260] sm:$0xff] %vm2338, %v2998
      %3069 = vst.msk [vmem:[#allocation3 + $0x278] sm:$0xff] %vm2338, %v3000
      %3070 = vst.msk [vmem:[#allocation3 + $0x290] sm:$0xff] %vm2338, %v3002
      %3071 = vst.msk [vmem:[#allocation3 + $0x2a8] sm:$0xff] %vm2338, %v3004
      %3072 = vst.msk [vmem:[#allocation3 + $0x2c0] sm:$0xff] %vm2338, %v3006
      %3073 = vst.msk [vmem:[#allocation3 + $0x2d8] sm:$0xff] %vm2338, %v3008
      %3074 = vst.msk [vmem:[#allocation3 + $0x2f0] sm:$0xff] %vm2338, %v3010
      %v3075 = vld [vmem:[#allocation2 + $0x22] sm:$0xff]
      %v3076 = vld [vmem:[#allocation2 + $0x2a] sm:$0xff]
      %v3077 = vld [vmem:[#allocation2 + $0x32] sm:$0xff]
      %v3078 = vld [vmem:[#allocation2 + $0x3a] sm:$0xff]
      %v3079 = vld [vmem:[#allocation2 + $0x42] sm:$0xff]
      %v3080 = vld [vmem:[#allocation2 + $0x4a] sm:$0xff]
      %v3081 = vld [vmem:[#allocation2 + $0x52] sm:$0xff]
      %v3082 = vld [vmem:[#allocation2 + $0x5a] sm:$0xff]
      %v3083 = vld [vmem:[#allocation2 + $0x62] sm:$0xff]
      %v3084 = vld [vmem:[#allocation2 + $0x6a] sm:$0xff]
      %v3085 = vld [vmem:[#allocation2 + $0x72] sm:$0xff]
      %v3086 = vld [vmem:[#allocation2 + $0x7a] sm:$0xff]
      %v3087 = vld [vmem:[#allocation2 + $0x82] sm:$0xff]
      %v3088 = vld [vmem:[#allocation2 + $0x8a] sm:$0xff]
      %v3089 = vld [vmem:[#allocation2 + $0x92] sm:$0xff]
      %v3090 = vld [vmem:[#allocation2 + $0x9a] sm:$0xff]
      %v3091 = vld [vmem:[#allocation2 + $0xa2] sm:$0xff]
      %v3092 = vld [vmem:[#allocation2 + $0xaa] sm:$0xff]
      %v3093 = vld [vmem:[#allocation2 + $0xb2] sm:$0xff]
      %v3094 = vld [vmem:[#allocation2 + $0xba] sm:$0xff]
      %v3095 = vld [vmem:[#allocation2 + $0xc2] sm:$0xff]
      %v3096 = vld [vmem:[#allocation2 + $0xca] sm:$0xff]
      %v3097 = vld [vmem:[#allocation2 + $0xd2] sm:$0xff]
      %v3098 = vld [vmem:[#allocation2 + $0xda] sm:$0xff]
      %v3099 = vld [vmem:[#allocation2 + $0xe2] sm:$0xff]
      %v3100 = vld [vmem:[#allocation2 + $0xea] sm:$0xff]
      %v3101 = vld [vmem:[#allocation2 + $0xf2] sm:$0xff]
      %v3102 = vld [vmem:[#allocation2 + $0xfa] sm:$0xff]
      %v3103 = vld [vmem:[#allocation2 + $0x102] sm:$0xff]
      %v3104 = vld [vmem:[#allocation2 + $0x10a] sm:$0xff]
      %v3105 = vld [vmem:[#allocation2 + $0x112] sm:$0xff]
      %v3106 = vld [vmem:[#allocation2 + $0x11a] sm:$0xff]
      %v3107 = vmul.f32 %v3075, %v1599
      %v3108 = vmul.f32 %v3076, %v1600
      %v3109 = vmul.f32 %v3077, %v1601
      %v3110 = vmul.f32 %v3078, %v1602
      %v3111 = vmul.f32 %v3079, %v1603
      %v3112 = vmul.f32 %v3080, %v1604
      %v3113 = vmul.f32 %v3081, %v1605
      %v3114 = vmul.f32 %v3082, %v1606
      %v3115 = vmul.f32 %v3083, %v1607
      %v3116 = vmul.f32 %v3084, %v1608
      %v3117 = vmul.f32 %v3085, %v1609
      %v3118 = vmul.f32 %v3086, %v1610
      %v3119 = vmul.f32 %v3087, %v1611
      %v3120 = vmul.f32 %v3088, %v1612
      %v3121 = vmul.f32 %v3089, %v1613
      %v3122 = vmul.f32 %v3090, %v1614
      %v3123 = vmul.f32 %v3091, %v1615
      %v3124 = vmul.f32 %v3092, %v1616
      %v3125 = vmul.f32 %v3093, %v1617
      %v3126 = vmul.f32 %v3094, %v1618
      %v3127 = vmul.f32 %v3095, %v1619
      %v3128 = vmul.f32 %v3096, %v1620
      %v3129 = vmul.f32 %v3097, %v1621
      %v3130 = vmul.f32 %v3098, %v1622
      %v3131 = vmul.f32 %v3099, %v1623
      %v3132 = vmul.f32 %v3100, %v1624
      %v3133 = vmul.f32 %v3101, %v1625
      %v3134 = vmul.f32 %v3102, %v1626
      %v3135 = vmul.f32 %v3103, %v1627
      %v3136 = vmul.f32 %v3104, %v1628
      %v3137 = vmul.f32 %v3105, %v1629
      %v3138 = vmul.f32 %v3106, %v1630
      %3139 = vst.msk [vmem:[#allocation3 + $0x10] sm:$0xff] %vm1695, %v3107
      %3140 = vst.msk [vmem:[#allocation3 + $0x28] sm:$0xff] %vm1695, %v3108
      %3141 = vst.msk [vmem:[#allocation3 + $0x40] sm:$0xff] %vm1695, %v3109
      %3142 = vst.msk [vmem:[#allocation3 + $0x58] sm:$0xff] %vm1695, %v3110
      %3143 = vst.msk [vmem:[#allocation3 + $0x70] sm:$0xff] %vm1695, %v3111
      %3144 = vst.msk [vmem:[#allocation3 + $0x88] sm:$0xff] %vm1695, %v3112
      %3145 = vst.msk [vmem:[#allocation3 + $0xa0] sm:$0xff] %vm1695, %v3113
      %3146 = vst.msk [vmem:[#allocation3 + $0xb8] sm:$0xff] %vm1695, %v3114
      %3147 = vst.msk [vmem:[#allocation3 + $0xd0] sm:$0xff] %vm1695, %v3115
      %3148 = vst.msk [vmem:[#allocation3 + $0xe8] sm:$0xff] %vm1695, %v3116
      %3149 = vst.msk [vmem:[#allocation3 + $0x100] sm:$0xff] %vm1695, %v3117
      %3150 = vst.msk [vmem:[#allocation3 + $0x118] sm:$0xff] %vm1695, %v3118
      %3151 = vst.msk [vmem:[#allocation3 + $0x130] sm:$0xff] %vm1695, %v3119
      %3152 = vst.msk [vmem:[#allocation3 + $0x148] sm:$0xff] %vm1695, %v3120
      %3153 = vst.msk [vmem:[#allocation3 + $0x160] sm:$0xff] %vm1695, %v3121
      %3154 = vst.msk [vmem:[#allocation3 + $0x178] sm:$0xff] %vm1695, %v3122
      %3155 = vst.msk [vmem:[#allocation3 + $0x190] sm:$0xff] %vm1695, %v3123
      %3156 = vst.msk [vmem:[#allocation3 + $0x1a8] sm:$0xff] %vm1695, %v3124
      %3157 = vst.msk [vmem:[#allocation3 + $0x1c0] sm:$0xff] %vm1695, %v3125
      %3158 = vst.msk [vmem:[#allocation3 + $0x1d8] sm:$0xff] %vm1695, %v3126
      %3159 = vst.msk [vmem:[#allocation3 + $0x1f0] sm:$0xff] %vm1695, %v3127
      %3160 = vst.msk [vmem:[#allocation3 + $0x208] sm:$0xff] %vm1695, %v3128
      %3161 = vst.msk [vmem:[#allocation3 + $0x220] sm:$0xff] %vm1695, %v3129
      %3162 = vst.msk [vmem:[#allocation3 + $0x238] sm:$0xff] %vm1695, %v3130
      %3163 = vst.msk [vmem:[#allocation3 + $0x250] sm:$0xff] %vm1695, %v3131
      %3164 = vst.msk [vmem:[#allocation3 + $0x268] sm:$0xff] %vm1695, %v3132
      %3165 = vst.msk [vmem:[#allocation3 + $0x280] sm:$0xff] %vm1695, %v3133
      %3166 = vst.msk [vmem:[#allocation3 + $0x298] sm:$0xff] %vm1695, %v3134
      %3167 = vst.msk [vmem:[#allocation3 + $0x2b0] sm:$0xff] %vm1695, %v3135
      %3168 = vst.msk [vmem:[#allocation3 + $0x2c8] sm:$0xff] %vm1695, %v3136
      %3169 = vst.msk [vmem:[#allocation3 + $0x2e0] sm:$0xff] %vm1695, %v3137
      %3170 = vst.msk [vmem:[#allocation3 + $0x2f8] sm:$0xff] %vm1695, %v3138
      %v3171 = vld [vmem:[#allocation3] sm:$0xff]
      %v3172 = vld [vmem:[#allocation3 + $0x8] sm:$0xff]
      %v3173 = vld [vmem:[#allocation3 + $0x10] sm:$0xff]
      %v3174 = vld [vmem:[#allocation3 + $0x18] sm:$0xff]
      %v3175 = vld [vmem:[#allocation3 + $0x20] sm:$0xff]
      %v3176 = vld [vmem:[#allocation3 + $0x28] sm:$0xff]
      %v3177 = vld [vmem:[#allocation3 + $0x30] sm:$0xff]
      %v3178 = vld [vmem:[#allocation3 + $0x38] sm:$0xff]
      %v3179 = vld [vmem:[#allocation3 + $0x40] sm:$0xff]
      %v3180 = vld [vmem:[#allocation3 + $0x48] sm:$0xff]
      %v3181 = vld [vmem:[#allocation3 + $0x50] sm:$0xff]
      %v3182 = vld [vmem:[#allocation3 + $0x58] sm:$0xff]
      %v3183 = vld [vmem:[#allocation3 + $0x60] sm:$0xff]
      %v3184 = vld [vmem:[#allocation3 + $0x68] sm:$0xff]
      %v3185 = vld [vmem:[#allocation3 + $0x70] sm:$0xff]
      %v3186 = vld [vmem:[#allocation3 + $0x78] sm:$0xff]
      %v3187 = vld [vmem:[#allocation3 + $0x80] sm:$0xff]
      %v3188 = vld [vmem:[#allocation3 + $0x88] sm:$0xff]
      %v3189 = vld [vmem:[#allocation3 + $0x90] sm:$0xff]
      %v3190 = vld [vmem:[#allocation3 + $0x98] sm:$0xff]
      %v3191 = vld [vmem:[#allocation3 + $0xa0] sm:$0xff]
      %v3192 = vld [vmem:[#allocation3 + $0xa8] sm:$0xff]
      %v3193 = vld [vmem:[#allocation3 + $0xb0] sm:$0xff]
      %v3194 = vld [vmem:[#allocation3 + $0xb8] sm:$0xff]
      %v3195 = vld [vmem:[#allocation3 + $0xc0] sm:$0xff]
      %v3196 = vld [vmem:[#allocation3 + $0xc8] sm:$0xff]
      %v3197 = vld [vmem:[#allocation3 + $0xd0] sm:$0xff]
      %v3198 = vld [vmem:[#allocation3 + $0xd8] sm:$0xff]
      %v3199 = vld [vmem:[#allocation3 + $0xe0] sm:$0xff]
      %v3200 = vld [vmem:[#allocation3 + $0xe8] sm:$0xff]
      %v3201 = vld [vmem:[#allocation3 + $0xf0] sm:$0xff]
      %v3202 = vld [vmem:[#allocation3 + $0xf8] sm:$0xff]
      %v3203 = vld [vmem:[#allocation3 + $0x100] sm:$0xff]
      %v3204 = vld [vmem:[#allocation3 + $0x108] sm:$0xff]
      %v3205 = vld [vmem:[#allocation3 + $0x110] sm:$0xff]
      %v3206 = vld [vmem:[#allocation3 + $0x118] sm:$0xff]
      %v3207 = vld [vmem:[#allocation3 + $0x120] sm:$0xff]
      %v3208 = vld [vmem:[#allocation3 + $0x128] sm:$0xff]
      %v3209 = vld [vmem:[#allocation3 + $0x130] sm:$0xff]
      %v3210 = vld [vmem:[#allocation3 + $0x138] sm:$0xff]
      %v3211 = vld [vmem:[#allocation3 + $0x140] sm:$0xff]
      %v3212 = vld [vmem:[#allocation3 + $0x148] sm:$0xff]
      %v3213 = vld [vmem:[#allocation3 + $0x150] sm:$0xff]
      %v3214 = vld [vmem:[#allocation3 + $0x158] sm:$0xff]
      %v3215 = vld [vmem:[#allocation3 + $0x160] sm:$0xff]
      %v3216 = vld [vmem:[#allocation3 + $0x168] sm:$0xff]
      %v3217 = vld [vmem:[#allocation3 + $0x170] sm:$0xff]
      %v3218 = vld [vmem:[#allocation3 + $0x178] sm:$0xff]
      %v3219 = vld [vmem:[#allocation3 + $0x180] sm:$0xff]
      %v3220 = vld [vmem:[#allocation3 + $0x188] sm:$0xff]
      %v3221 = vld [vmem:[#allocation3 + $0x190] sm:$0xff]
      %v3222 = vld [vmem:[#allocation3 + $0x198] sm:$0xff]
      %v3223 = vld [vmem:[#allocation3 + $0x1a0] sm:$0xff]
      %v3224 = vld [vmem:[#allocation3 + $0x1a8] sm:$0xff]
      %v3225 = vld [vmem:[#allocation3 + $0x1b0] sm:$0xff]
      %v3226 = vld [vmem:[#allocation3 + $0x1b8] sm:$0xff]
      %v3227 = vld [vmem:[#allocation3 + $0x1c0] sm:$0xff]
      %v3228 = vld [vmem:[#allocation3 + $0x1c8] sm:$0xff]
      %v3229 = vld [vmem:[#allocation3 + $0x1d0] sm:$0xff]
      %v3230 = vld [vmem:[#allocation3 + $0x1d8] sm:$0xff]
      %v3231 = vld [vmem:[#allocation3 + $0x1e0] sm:$0xff]
      %v3232 = vld [vmem:[#allocation3 + $0x1e8] sm:$0xff]
      %v3233 = vld [vmem:[#allocation3 + $0x1f0] sm:$0xff]
      %v3234 = vld [vmem:[#allocation3 + $0x1f8] sm:$0xff]
      %v3235 = vld [vmem:[#allocation3 + $0x200] sm:$0xff]
      %v3236 = vld [vmem:[#allocation3 + $0x208] sm:$0xff]
      %v3237 = vld [vmem:[#allocation3 + $0x210] sm:$0xff]
      %v3238 = vld [vmem:[#allocation3 + $0x218] sm:$0xff]
      %v3239 = vld [vmem:[#allocation3 + $0x220] sm:$0xff]
      %v3240 = vld [vmem:[#allocation3 + $0x228] sm:$0xff]
      %v3241 = vld [vmem:[#allocation3 + $0x230] sm:$0xff]
      %v3242 = vld [vmem:[#allocation3 + $0x238] sm:$0xff]
      %v3243 = vld [vmem:[#allocation3 + $0x240] sm:$0xff]
      %v3244 = vld [vmem:[#allocation3 + $0x248] sm:$0xff]
      %v3245 = vld [vmem:[#allocation3 + $0x250] sm:$0xff]
      %v3246 = vld [vmem:[#allocation3 + $0x258] sm:$0xff]
      %v3247 = vld [vmem:[#allocation3 + $0x260] sm:$0xff]
      %v3248 = vld [vmem:[#allocation3 + $0x268] sm:$0xff]
      %v3249 = vld [vmem:[#allocation3 + $0x270] sm:$0xff]
      %v3250 = vld [vmem:[#allocation3 + $0x278] sm:$0xff]
      %v3251 = vld [vmem:[#allocation3 + $0x280] sm:$0xff]
      %v3252 = vld [vmem:[#allocation3 + $0x288] sm:$0xff]
      %v3253 = vld [vmem:[#allocation3 + $0x290] sm:$0xff]
      %v3254 = vld [vmem:[#allocation3 + $0x298] sm:$0xff]
      %v3255 = vld [vmem:[#allocation3 + $0x2a0] sm:$0xff]
      %v3256 = vld [vmem:[#allocation3 + $0x2a8] sm:$0xff]
      %v3257 = vld [vmem:[#allocation3 + $0x2b0] sm:$0xff]
      %v3258 = vld [vmem:[#allocation3 + $0x2b8] sm:$0xff]
      %v3259 = vld [vmem:[#allocation3 + $0x2c0] sm:$0xff]
      %v3260 = vld [vmem:[#allocation3 + $0x2c8] sm:$0xff]
      %v3261 = vld [vmem:[#allocation3 + $0x2d0] sm:$0xff]
      %v3262 = vld [vmem:[#allocation3 + $0x2d8] sm:$0xff]
      %v3263 = vld [vmem:[#allocation3 + $0x2e0] sm:$0xff]
      %v3264 = vld [vmem:[#allocation3 + $0x2e8] sm:$0xff]
      %v3265 = vld [vmem:[#allocation3 + $0x2f0] sm:$0xff]
      %v3266 = vld [vmem:[#allocation3 + $0x2f8] sm:$0xff]
      %v3267 = vld [vmem:[%s6] sm:$0xff]
      %v3268 = vld [vmem:[%s6 + $0x8] sm:$0xff]
      %v3269 = vld [vmem:[%s6 + $0x10] sm:$0xff]
      %v3270 = vld [vmem:[%s6 + $0x18] sm:$0xff]
      %v3271 = vld [vmem:[%s6 + $0x20] sm:$0xff]
      %v3272 = vld [vmem:[%s6 + $0x28] sm:$0xff]
      %v3273 = vld [vmem:[%s6 + $0x30] sm:$0xff]
      %v3274 = vld [vmem:[%s6 + $0x38] sm:$0xff]
      %v3275 = vld [vmem:[%s6 + $0x40] sm:$0xff]
      %v3276 = vld [vmem:[%s6 + $0x48] sm:$0xff]
      %v3277 = vld [vmem:[%s6 + $0x50] sm:$0xff]
      %v3278 = vld [vmem:[%s6 + $0x58] sm:$0xff]
      %v3279 = vld [vmem:[%s6 + $0x60] sm:$0xff]
      %v3280 = vld [vmem:[%s6 + $0x68] sm:$0xff]
      %v3281 = vld [vmem:[%s6 + $0x70] sm:$0xff]
      %v3282 = vld [vmem:[%s6 + $0x78] sm:$0xff]
      %v3283 = vld [vmem:[%s6 + $0x80] sm:$0xff]
      %v3284 = vld [vmem:[%s6 + $0x88] sm:$0xff]
      %v3285 = vld [vmem:[%s6 + $0x90] sm:$0xff]
      %v3286 = vld [vmem:[%s6 + $0x98] sm:$0xff]
      %v3287 = vld [vmem:[%s6 + $0xa0] sm:$0xff]
      %v3288 = vld [vmem:[%s6 + $0xa8] sm:$0xff]
      %v3289 = vld [vmem:[%s6 + $0xb0] sm:$0xff]
      %v3290 = vld [vmem:[%s6 + $0xb8] sm:$0xff]
      %v3291 = vld [vmem:[%s6 + $0xc0] sm:$0xff]
      %v3292 = vld [vmem:[%s6 + $0xc8] sm:$0xff]
      %v3293 = vld [vmem:[%s6 + $0xd0] sm:$0xff]
      %v3294 = vld [vmem:[%s6 + $0xd8] sm:$0xff]
      %v3295 = vld [vmem:[%s6 + $0xe0] sm:$0xff]
      %v3296 = vld [vmem:[%s6 + $0xe8] sm:$0xff]
      %v3297 = vld [vmem:[%s6 + $0xf0] sm:$0xff]
      %v3298 = vld [vmem:[%s6 + $0xf8] sm:$0xff]
      %v3299 = vld [vmem:[%s6 + $0x100] sm:$0xff]
      %v3300 = vld [vmem:[%s6 + $0x108] sm:$0xff]
      %v3301 = vld [vmem:[%s6 + $0x110] sm:$0xff]
      %v3302 = vld [vmem:[%s6 + $0x118] sm:$0xff]
      %v3304 = vsel %vm1695, %v3173, 0
      %v3307 = vsel %vm1695, %v3176, 0
      %v3310 = vsel %vm1695, %v3179, 0
      %v3313 = vsel %vm1695, %v3182, 0
      %v3316 = vsel %vm1695, %v3185, 0
      %v3319 = vsel %vm1695, %v3188, 0
      %v3322 = vsel %vm1695, %v3191, 0
      %v3325 = vsel %vm1695, %v3194, 0
      %v3328 = vsel %vm1695, %v3197, 0
      %v3331 = vsel %vm1695, %v3200, 0
      %v3334 = vsel %vm1695, %v3203, 0
      %v3337 = vsel %vm1695, %v3206, 0
      %v3340 = vsel %vm1695, %v3209, 0
      %v3343 = vsel %vm1695, %v3212, 0
      %v3346 = vsel %vm1695, %v3215, 0
      %v3349 = vsel %vm1695, %v3218, 0
      %v3352 = vsel %vm1695, %v3221, 0
      %v3355 = vsel %vm1695, %v3224, 0
      %v3358 = vsel %vm1695, %v3227, 0
      %v3361 = vsel %vm1695, %v3230, 0
      %v3364 = vsel %vm1695, %v3233, 0
      %v3367 = vsel %vm1695, %v3236, 0
      %v3370 = vsel %vm1695, %v3239, 0
      %v3373 = vsel %vm1695, %v3242, 0
      %v3376 = vsel %vm1695, %v3245, 0
      %v3379 = vsel %vm1695, %v3248, 0
      %v3382 = vsel %vm1695, %v3251, 0
      %v3385 = vsel %vm1695, %v3254, 0
      %v3388 = vsel %vm1695, %v3257, 0
      %v3391 = vsel %vm1695, %v3260, 0
      %v3394 = vsel %vm1695, %v3263, 0
      %v3397 = vsel %vm1695, %v3266, 0
      %3399 = vmatprep.subr.mxu0 0.0
      %3400 = vmatpush1.msra.mxu0 %v3267
      %3401 = vmatprep.subr.mxu0 0.0
      %3402 = vmatpush1.msra.mxu0 %v3268
      %3403 = vmatprep.subr.mxu0 0.0
      %3404 = vmatpush1.msra.mxu0 %v3269
      %3405 = vmatprep.subr.mxu0 0.0
      %3406 = vmatpush1.msra.mxu0 %v3270
      %3407 = vmatprep.subr.mxu0 0.0
      %3408 = vmatpush1.msra.mxu0 %v3271
      %3409 = vmatprep.subr.mxu0 0.0
      %3410 = vmatpush1.msra.mxu0 %v3272
      %3411 = vmatprep.subr.mxu0 0.0
      %3412 = vmatpush1.msra.mxu0 %v3273
      %3413 = vmatprep.subr.mxu0 0.0
      %3414 = vmatpush1.msra.mxu0 %v3274
      %3415 = vmatprep.subr.mxu0 0.0
      %3416 = vmatpush1.msra.mxu0 %v3275
      %3417 = vmatprep.subr.mxu0 0.0
      %3418 = vmatpush1.msra.mxu0 %v3276
      %3419 = vmatprep.subr.mxu0 0.0
      %3420 = vmatpush1.msra.mxu0 %v3277
      %3421 = vmatprep.subr.mxu0 0.0
      %3422 = vmatpush1.msra.mxu0 %v3278
      %3423 = vmatprep.subr.mxu0 0.0
      %3424 = vmatpush1.msra.mxu0 %v3279
      %3425 = vmatprep.subr.mxu0 0.0
      %3426 = vmatpush1.msra.mxu0 %v3280
      %3427 = vmatprep.subr.mxu0 0.0
      %3428 = vmatpush1.msra.mxu0 %v3281
      %3429 = vmatprep.subr.mxu0 0.0
      %3430 = vmatpush1.msra.mxu0 %v3282
      %3431 = vmatprep.subr.mxu0 0.0
      %3432 = vmatpush1.msra.mxu0 %v3283
      %3433 = vmatprep.subr.mxu0 0.0
      %3434 = vmatpush1.msra.mxu0 %v3284
      %3435 = vmatprep.subr.mxu0 0.0
      %3436 = vmatpush1.msra.mxu0 %v3285
      %3437 = vmatprep.subr.mxu0 0.0
      %3438 = vmatpush1.msra.mxu0 %v3286
      %3439 = vmatprep.subr.mxu0 0.0
      %3440 = vmatpush1.msra.mxu0 %v3287
      %3441 = vmatprep.subr.mxu0 0.0
      %3442 = vmatpush1.msra.mxu0 %v3288
      %3443 = vmatprep.subr.mxu0 0.0
      %3444 = vmatpush1.msra.mxu0 %v3289
      %3445 = vmatprep.subr.mxu0 0.0
      %3446 = vmatpush1.msra.mxu0 %v3290
      %3447 = vmatprep.subr.mxu0 0.0
      %3448 = vmatpush1.msra.mxu0 %v3291
      %3449 = vmatprep.subr.mxu0 0.0
      %3450 = vmatpush1.msra.mxu0 %v3292
      %3451 = vmatprep.subr.mxu0 0.0
      %3452 = vmatpush1.msra.mxu0 %v3293
      %3453 = vmatprep.subr.mxu0 0.0
      %3454 = vmatpush1.msra.mxu0 %v3294
      %3455 = vmatprep.subr.mxu0 0.0
      %3456 = vmatpush1.msra.mxu0 %v3295
      %3457 = vmatprep.subr.mxu0 0.0
      %3458 = vmatpush1.msra.mxu0 %v3296
      %3459 = vmatprep.subr.mxu0 0.0
      %3460 = vmatpush1.msra.mxu0 %v3297
      %3461 = vmatprep.subr.mxu0 0.0
      %3462 = vmatpush1.msra.mxu0 %v3298
      %3463 = vmatprep.mubr.f32.mxu0 %v3172
      %3464 = vmatmul.mubr.f32.gmra.mrb[0].mxu0 %v3171
      %v3465 = vpop.f32.mrb[0].mxu0
      %v3466 = vadd.f32 0.0, %v3465
      %v3467 = vpop.f32.mrb[0].mxu0
      %3468 = vmatprep.mubr.f32.mxu0 %v3175
      %3469 = vmatmul.mubr.f32.gmra.mrb[0].mxu0 %v3174
      %v3470 = vpop.f32.mrb[0].mxu0
      %v3471 = vadd.f32 0.0, %v3470
      %v3472 = vpop.f32.mrb[0].mxu0
      %3473 = vmatprep.mubr.f32.mxu0 %v3178
      %3474 = vmatmul.mubr.f32.gmra.mrb[0].mxu0 %v3177
      %v3475 = vpop.f32.mrb[0].mxu0
      %v3476 = vadd.f32 0.0, %v3475
      %v3477 = vpop.f32.mrb[0].mxu0
      %3478 = vmatprep.mubr.f32.mxu0 %v3181
      %3479 = vmatmul.mubr.f32.gmra.mrb[0].mxu0 %v3180
      %v3480 = vpop.f32.mrb[0].mxu0
      %v3481 = vadd.f32 0.0, %v3480
      %v3482 = vpop.f32.mrb[0].mxu0
      %3483 = vmatprep.mubr.f32.mxu0 %v3184
      %3484 = vmatmul.mubr.f32.gmra.mrb[0].mxu0 %v3183
      %v3485 = vpop.f32.mrb[0].mxu0
      %v3486 = vadd.f32 0.0, %v3485
      %v3487 = vpop.f32.mrb[0].mxu0
      %3488 = vmatprep.mubr.f32.mxu0 %v3187
      %3489 = vmatmul.mubr.f32.gmra.mrb[0].mxu0 %v3186
      %v3490 = vpop.f32.mrb[0].mxu0
      %v3491 = vadd.f32 0.0, %v3490
      %v3492 = vpop.f32.mrb[0].mxu0
      %3493 = vmatprep.mubr.f32.mxu0 %v3190
      %3494 = vmatmul.mubr.f32.gmra.mrb[0].mxu0 %v3189
      %v3495 = vpop.f32.mrb[0].mxu0
      %v3496 = vadd.f32 0.0, %v3495
      %v3497 = vpop.f32.mrb[0].mxu0
      %3498 = vmatprep.mubr.f32.mxu0 %v3193
      %3499 = vmatmul.mubr.f32.gmra.mrb[0].mxu0 %v3192
      %v3500 = vpop.f32.mrb[0].mxu0
      %v3501 = vadd.f32 0.0, %v3500
      %v3502 = vpop.f32.mrb[0].mxu0
      %3503 = vmatprep.mubr.f32.mxu0 %v3196
      %3504 = vmatmul.mubr.f32.gmra.mrb[0].mxu0 %v3195
      %v3505 = vpop.f32.mrb[0].mxu0
      %v3506 = vadd.f32 0.0, %v3505
      %v3507 = vpop.f32.mrb[0].mxu0
      %3508 = vmatprep.mubr.f32.mxu0 %v3199
      %3509 = vmatmul.mubr.f32.gmra.mrb[0].mxu0 %v3198
      %v3510 = vpop.f32.mrb[0].mxu0
      %v3511 = vadd.f32 0.0, %v3510
      %v3512 = vpop.f32.mrb[0].mxu0
      %3513 = vmatprep.mubr.f32.mxu0 %v3202
      %3514 = vmatmul.mubr.f32.gmra.mrb[0].mxu0 %v3201
      %v3515 = vpop.f32.mrb[0].mxu0
      %v3516 = vadd.f32 0.0, %v3515
      %v3517 = vpop.f32.mrb[0].mxu0
      %3518 = vmatprep.mubr.f32.mxu0 %v3205
      %3519 = vmatmul.mubr.f32.gmra.mrb[0].mxu0 %v3204
      %v3520 = vpop.f32.mrb[0].mxu0
      %v3521 = vadd.f32 0.0, %v3520
      %v3522 = vpop.f32.mrb[0].mxu0
      %3523 = vmatprep.mubr.f32.mxu0 %v3208
      %3524 = vmatmul.mubr.f32.gmra.mrb[0].mxu0 %v3207
      %v3525 = vpop.f32.mrb[0].mxu0
      %v3526 = vadd.f32 0.0, %v3525
      %v3527 = vpop.f32.mrb[0].mxu0
      %3528 = vmatprep.mubr.f32.mxu0 %v3211
      %3529 = vmatmul.mubr.f32.gmra.mrb[0].mxu0 %v3210
      %v3530 = vpop.f32.mrb[0].mxu0
      %v3531 = vadd.f32 0.0, %v3530
      %v3532 = vpop.f32.mrb[0].mxu0
      %3533 = vmatprep.mubr.f32.mxu0 %v3214
      %3534 = vmatmul.mubr.f32.gmra.mrb[0].mxu0 %v3213
      %v3535 = vpop.f32.mrb[0].mxu0
      %v3536 = vadd.f32 0.0, %v3535
      %v3537 = vpop.f32.mrb[0].mxu0
      %3538 = vmatprep.mubr.f32.mxu0 %v3217
      %3539 = vmatmul.mubr.f32.gmra.mrb[0].mxu0 %v3216
      %v3540 = vpop.f32.mrb[0].mxu0
      %v3541 = vadd.f32 0.0, %v3540
      %v3542 = vpop.f32.mrb[0].mxu0
      %3543 = vmatprep.mubr.f32.mxu0 %v3220
      %3544 = vmatmul.mubr.f32.gmra.mrb[0].mxu0 %v3219
      %v3545 = vpop.f32.mrb[0].mxu0
      %v3546 = vadd.f32 0.0, %v3545
      %v3547 = vpop.f32.mrb[0].mxu0
      %3548 = vmatprep.mubr.f32.mxu0 %v3223
      %3549 = vmatmul.mubr.f32.gmra.mrb[0].mxu0 %v3222
      %v3550 = vpop.f32.mrb[0].mxu0
      %v3551 = vadd.f32 0.0, %v3550
      %v3552 = vpop.f32.mrb[0].mxu0
      %3553 = vmatprep.mubr.f32.mxu0 %v3226
      %3554 = vmatmul.mubr.f32.gmra.mrb[0].mxu0 %v3225
      %v3555 = vpop.f32.mrb[0].mxu0
      %v3556 = vadd.f32 0.0, %v3555
      %v3557 = vpop.f32.mrb[0].mxu0
      %3558 = vmatprep.mubr.f32.mxu0 %v3229
      %3559 = vmatmul.mubr.f32.gmra.mrb[0].mxu0 %v3228
      %v3560 = vpop.f32.mrb[0].mxu0
      %v3561 = vadd.f32 0.0, %v3560
      %v3562 = vpop.f32.mrb[0].mxu0
      %3563 = vmatprep.mubr.f32.mxu0 %v3232
      %3564 = vmatmul.mubr.f32.gmra.mrb[0].mxu0 %v3231
      %v3565 = vpop.f32.mrb[0].mxu0
      %v3566 = vadd.f32 0.0, %v3565
      %v3567 = vpop.f32.mrb[0].mxu0
      %3568 = vmatprep.mubr.f32.mxu0 %v3235
      %3569 = vmatmul.mubr.f32.gmra.mrb[0].mxu0 %v3234
      %v3570 = vpop.f32.mrb[0].mxu0
      %v3571 = vadd.f32 0.0, %v3570
      %v3572 = vpop.f32.mrb[0].mxu0
      %3573 = vmatprep.mubr.f32.mxu0 %v3238
      %3574 = vmatmul.mubr.f32.gmra.mrb[0].mxu0 %v3237
      %v3575 = vpop.f32.mrb[0].mxu0
      %v3576 = vadd.f32 0.0, %v3575
      %v3577 = vpop.f32.mrb[0].mxu0
      %3578 = vmatprep.mubr.f32.mxu0 %v3241
      %3579 = vmatmul.mubr.f32.gmra.mrb[0].mxu0 %v3240
      %v3580 = vpop.f32.mrb[0].mxu0
      %v3581 = vadd.f32 0.0, %v3580
      %v3582 = vpop.f32.mrb[0].mxu0
      %3583 = vmatprep.mubr.f32.mxu0 %v3244
      %3584 = vmatmul.mubr.f32.gmra.mrb[0].mxu0 %v3243
      %v3585 = vpop.f32.mrb[0].mxu0
      %v3586 = vadd.f32 0.0, %v3585
      %v3587 = vpop.f32.mrb[0].mxu0
      %3588 = vmatprep.mubr.f32.mxu0 %v3247
      %3589 = vmatmul.mubr.f32.gmra.mrb[0].mxu0 %v3246
      %v3590 = vpop.f32.mrb[0].mxu0
      %v3591 = vadd.f32 0.0, %v3590
      %v3592 = vpop.f32.mrb[0].mxu0
      %3593 = vmatprep.mubr.f32.mxu0 %v3250
      %3594 = vmatmul.mubr.f32.gmra.mrb[0].mxu0 %v3249
      %v3595 = vpop.f32.mrb[0].mxu0
      %v3596 = vadd.f32 0.0, %v3595
      %v3597 = vpop.f32.mrb[0].mxu0
      %3598 = vmatprep.mubr.f32.mxu0 %v3253
      %3599 = vmatmul.mubr.f32.gmra.mrb[0].mxu0 %v3252
      %v3600 = vpop.f32.mrb[0].mxu0
      %v3601 = vadd.f32 0.0, %v3600
      %v3602 = vpop.f32.mrb[0].mxu0
      %3603 = vmatprep.mubr.f32.mxu0 %v3256
      %3604 = vmatmul.mubr.f32.gmra.mrb[0].mxu0 %v3255
      %v3605 = vpop.f32.mrb[0].mxu0
      %v3606 = vadd.f32 0.0, %v3605
      %v3607 = vpop.f32.mrb[0].mxu0
      %3608 = vmatprep.mubr.f32.mxu0 %v3259
      %3609 = vmatmul.mubr.f32.gmra.mrb[0].mxu0 %v3258
      %v3610 = vpop.f32.mrb[0].mxu0
      %v3611 = vadd.f32 0.0, %v3610
      %v3612 = vpop.f32.mrb[0].mxu0
      %3613 = vmatprep.mubr.f32.mxu0 %v3262
      %3614 = vmatmul.mubr.f32.gmra.mrb[0].mxu0 %v3261
      %v3615 = vpop.f32.mrb[0].mxu0
      %v3616 = vadd.f32 0.0, %v3615
      %v3617 = vpop.f32.mrb[0].mxu0
      %3618 = vmatprep.mubr.f32.mxu0 %v3265
      %3619 = vmatmul.mubr.f32.gmra.mrb[0].mxu0 %v3264
      %v3620 = vpop.f32.mrb[0].mxu0
      %v3621 = vadd.f32 0.0, %v3620
      %v3622 = vpop.f32.mrb[0].mxu0
      %3623 = vdwg.mxu0
      %3624 = vmatprep.subr.mxu0 0.0
      %3625 = vmatpush1.msra.mxu0 %v3299
      %3626 = vmatprep.subr.mxu0 0.0
      %3627 = vmatpush1.msra.mxu0 %v3300
      %3628 = vmatprep.subr.mxu0 0.0
      %3629 = vmatpush1.msra.mxu0 %v3301
      %3630 = vmatprep.subr.mxu0 0.0
      %3631 = vmatpush1.msra.mxu0 %v3302
      %3632 = vmatprep.subr.mxu0 0.0
      %3633 = vmatpush1.msra.mxu0 0.0
      %3634 = vmatprep.subr.mxu0 0.0
      %3635 = vmatpush1.msra.mxu0 0.0
      %3636 = vmatprep.subr.mxu0 0.0
      %3637 = vmatpush1.msra.mxu0 0.0
      %3638 = vmatprep.subr.mxu0 0.0
      %3639 = vmatpush1.msra.mxu0 0.0
      %3640 = vmatprep.subr.mxu0 0.0
      %3641 = vmatpush1.msra.mxu0 0.0
      %3642 = vmatprep.subr.mxu0 0.0
      %3643 = vmatpush1.msra.mxu0 0.0
      %3644 = vmatprep.subr.mxu0 0.0
      %3645 = vmatpush1.msra.mxu0 0.0
      %3646 = vmatprep.subr.mxu0 0.0
      %3647 = vmatpush1.msra.mxu0 0.0
      %3648 = vmatprep.subr.mxu0 0.0
      %3649 = vmatpush1.msra.mxu0 0.0
      %3650 = vmatprep.subr.mxu0 0.0
      %3651 = vmatpush1.msra.mxu0 0.0
      %3652 = vmatprep.subr.mxu0 0.0
      %3653 = vmatpush1.msra.mxu0 0.0
      %3654 = vmatprep.subr.mxu0 0.0
      %3655 = vmatpush1.msra.mxu0 0.0
      %3656 = vmatprep.subr.mxu0 0.0
      %3657 = vmatpush1.msra.mxu0 0.0
      %3658 = vmatprep.subr.mxu0 0.0
      %3659 = vmatpush1.msra.mxu0 0.0
      %3660 = vmatprep.subr.mxu0 0.0
      %3661 = vmatpush1.msra.mxu0 0.0
      %3662 = vmatprep.subr.mxu0 0.0
      %3663 = vmatpush1.msra.mxu0 0.0
      %3664 = vmatprep.subr.mxu0 0.0
      %3665 = vmatpush1.msra.mxu0 0.0
      %3666 = vmatprep.subr.mxu0 0.0
      %3667 = vmatpush1.msra.mxu0 0.0
      %3668 = vmatprep.subr.mxu0 0.0
      %3669 = vmatpush1.msra.mxu0 0.0
      %3670 = vmatprep.subr.mxu0 0.0
      %3671 = vmatpush1.msra.mxu0 0.0
      %3672 = vmatprep.subr.mxu0 0.0
      %3673 = vmatpush1.msra.mxu0 0.0
      %3674 = vmatprep.subr.mxu0 0.0
      %3675 = vmatpush1.msra.mxu0 0.0
      %3676 = vmatprep.subr.mxu0 0.0
      %3677 = vmatpush1.msra.mxu0 0.0
      %3678 = vmatprep.subr.mxu0 0.0
      %3679 = vmatpush1.msra.mxu0 0.0
      %3680 = vmatprep.subr.mxu0 0.0
      %3681 = vmatpush1.msra.mxu0 0.0
      %3682 = vmatprep.subr.mxu0 0.0
      %3683 = vmatpush1.msra.mxu0 0.0
      %3684 = vmatprep.subr.mxu0 0.0
      %3685 = vmatpush1.msra.mxu0 0.0
      %3686 = vmatprep.subr.mxu0 0.0
      %3687 = vmatpush1.msra.mxu0 0.0
      %3688 = vmatprep.mubr.f32.mxu0 0.0
      %3689 = vmatmul.mubr.f32.gmra.mrb[0].mxu0 %v3304
      %v3690 = vpop.f32.mrb[0].mxu0
      %v3691 = vadd.f32 %v3466, %v3690
      %v3692 = vpop.f32.mrb[0].mxu0
      %3693 = vmatprep.mubr.f32.mxu0 0.0
      %3694 = vmatmul.mubr.f32.gmra.mrb[0].mxu0 %v3307
      %v3695 = vpop.f32.mrb[0].mxu0
      %v3696 = vadd.f32 %v3471, %v3695
      %v3697 = vpop.f32.mrb[0].mxu0
      %3698 = vmatprep.mubr.f32.mxu0 0.0
      %3699 = vmatmul.mubr.f32.gmra.mrb[0].mxu0 %v3310
      %v3700 = vpop.f32.mrb[0].mxu0
      %v3701 = vadd.f32 %v3476, %v3700
      %v3702 = vpop.f32.mrb[0].mxu0
      %3703 = vmatprep.mubr.f32.mxu0 0.0
      %3704 = vmatmul.mubr.f32.gmra.mrb[0].mxu0 %v3313
      %v3705 = vpop.f32.mrb[0].mxu0
      %v3706 = vadd.f32 %v3481, %v3705
      %v3707 = vpop.f32.mrb[0].mxu0
      %3708 = vmatprep.mubr.f32.mxu0 0.0
      %3709 = vmatmul.mubr.f32.gmra.mrb[0].mxu0 %v3316
      %v3710 = vpop.f32.mrb[0].mxu0
      %v3711 = vadd.f32 %v3486, %v3710
      %v3712 = vpop.f32.mrb[0].mxu0
      %3713 = vmatprep.mubr.f32.mxu0 0.0
      %3714 = vmatmul.mubr.f32.gmra.mrb[0].mxu0 %v3319
      %v3715 = vpop.f32.mrb[0].mxu0
      %v3716 = vadd.f32 %v3491, %v3715
      %v3717 = vpop.f32.mrb[0].mxu0
      %3718 = vmatprep.mubr.f32.mxu0 0.0
      %3719 = vmatmul.mubr.f32.gmra.mrb[0].mxu0 %v3322
      %v3720 = vpop.f32.mrb[0].mxu0
      %v3721 = vadd.f32 %v3496, %v3720
      %v3722 = vpop.f32.mrb[0].mxu0
      %3723 = vmatprep.mubr.f32.mxu0 0.0
      %3724 = vmatmul.mubr.f32.gmra.mrb[0].mxu0 %v3325
      %v3725 = vpop.f32.mrb[0].mxu0
      %v3726 = vadd.f32 %v3501, %v3725
      %v3727 = vpop.f32.mrb[0].mxu0
      %3728 = vmatprep.mubr.f32.mxu0 0.0
      %3729 = vmatmul.mubr.f32.gmra.mrb[0].mxu0 %v3328
      %v3730 = vpop.f32.mrb[0].mxu0
      %v3731 = vadd.f32 %v3506, %v3730
      %v3732 = vpop.f32.mrb[0].mxu0
      %3733 = vmatprep.mubr.f32.mxu0 0.0
      %3734 = vmatmul.mubr.f32.gmra.mrb[0].mxu0 %v3331
      %v3735 = vpop.f32.mrb[0].mxu0
      %v3736 = vadd.f32 %v3511, %v3735
      %v3737 = vpop.f32.mrb[0].mxu0
      %3738 = vmatprep.mubr.f32.mxu0 0.0
      %3739 = vmatmul.mubr.f32.gmra.mrb[0].mxu0 %v3334
      %v3740 = vpop.f32.mrb[0].mxu0
      %v3741 = vadd.f32 %v3516, %v3740
      %v3742 = vpop.f32.mrb[0].mxu0
      %3743 = vmatprep.mubr.f32.mxu0 0.0
      %3744 = vmatmul.mubr.f32.gmra.mrb[0].mxu0 %v3337
      %v3745 = vpop.f32.mrb[0].mxu0
      %v3746 = vadd.f32 %v3521, %v3745
      %v3747 = vpop.f32.mrb[0].mxu0
      %3748 = vmatprep.mubr.f32.mxu0 0.0
      %3749 = vmatmul.mubr.f32.gmra.mrb[0].mxu0 %v3340
      %v3750 = vpop.f32.mrb[0].mxu0
      %v3751 = vadd.f32 %v3526, %v3750
      %v3752 = vpop.f32.mrb[0].mxu0
      %3753 = vmatprep.mubr.f32.mxu0 0.0
      %3754 = vmatmul.mubr.f32.gmra.mrb[0].mxu0 %v3343
      %v3755 = vpop.f32.mrb[0].mxu0
      %v3756 = vadd.f32 %v3531, %v3755
      %v3757 = vpop.f32.mrb[0].mxu0
      %3758 = vmatprep.mubr.f32.mxu0 0.0
      %3759 = vmatmul.mubr.f32.gmra.mrb[0].mxu0 %v3346
      %v3760 = vpop.f32.mrb[0].mxu0
      %v3761 = vadd.f32 %v3536, %v3760
      %v3762 = vpop.f32.mrb[0].mxu0
      %3763 = vmatprep.mubr.f32.mxu0 0.0
      %3764 = vmatmul.mubr.f32.gmra.mrb[0].mxu0 %v3349
      %v3765 = vpop.f32.mrb[0].mxu0
      %v3766 = vadd.f32 %v3541, %v3765
      %v3767 = vpop.f32.mrb[0].mxu0
      %3768 = vmatprep.mubr.f32.mxu0 0.0
      %3769 = vmatmul.mubr.f32.gmra.mrb[0].mxu0 %v3352
      %v3770 = vpop.f32.mrb[0].mxu0
      %v3771 = vadd.f32 %v3546, %v3770
      %v3772 = vpop.f32.mrb[0].mxu0
      %3773 = vmatprep.mubr.f32.mxu0 0.0
      %3774 = vmatmul.mubr.f32.gmra.mrb[0].mxu0 %v3355
      %v3775 = vpop.f32.mrb[0].mxu0
      %v3776 = vadd.f32 %v3551, %v3775
      %v3777 = vpop.f32.mrb[0].mxu0
      %3778 = vmatprep.mubr.f32.mxu0 0.0
      %3779 = vmatmul.mubr.f32.gmra.mrb[0].mxu0 %v3358
      %v3780 = vpop.f32.mrb[0].mxu0
      %v3781 = vadd.f32 %v3556, %v3780
      %v3782 = vpop.f32.mrb[0].mxu0
      %3783 = vmatprep.mubr.f32.mxu0 0.0
      %3784 = vmatmul.mubr.f32.gmra.mrb[0].mxu0 %v3361
      %v3785 = vpop.f32.mrb[0].mxu0
      %v3786 = vadd.f32 %v3561, %v3785
      %v3787 = vpop.f32.mrb[0].mxu0
      %3788 = vmatprep.mubr.f32.mxu0 0.0
      %3789 = vmatmul.mubr.f32.gmra.mrb[0].mxu0 %v3364
      %v3790 = vpop.f32.mrb[0].mxu0
      %v3791 = vadd.f32 %v3566, %v3790
      %v3792 = vpop.f32.mrb[0].mxu0
      %3793 = vmatprep.mubr.f32.mxu0 0.0
      %3794 = vmatmul.mubr.f32.gmra.mrb[0].mxu0 %v3367
      %v3795 = vpop.f32.mrb[0].mxu0
      %v3796 = vadd.f32 %v3571, %v3795
      %v3797 = vpop.f32.mrb[0].mxu0
      %3798 = vmatprep.mubr.f32.mxu0 0.0
      %3799 = vmatmul.mubr.f32.gmra.mrb[0].mxu0 %v3370
      %v3800 = vpop.f32.mrb[0].mxu0
      %v3801 = vadd.f32 %v3576, %v3800
      %v3802 = vpop.f32.mrb[0].mxu0
      %3803 = vmatprep.mubr.f32.mxu0 0.0
      %3804 = vmatmul.mubr.f32.gmra.mrb[0].mxu0 %v3373
      %v3805 = vpop.f32.mrb[0].mxu0
      %v3806 = vadd.f32 %v3581, %v3805
      %v3807 = vpop.f32.mrb[0].mxu0
      %3808 = vmatprep.mubr.f32.mxu0 0.0
      %3809 = vmatmul.mubr.f32.gmra.mrb[0].mxu0 %v3376
      %v3810 = vpop.f32.mrb[0].mxu0
      %v3811 = vadd.f32 %v3586, %v3810
      %v3812 = vpop.f32.mrb[0].mxu0
      %3813 = vmatprep.mubr.f32.mxu0 0.0
      %3814 = vmatmul.mubr.f32.gmra.mrb[0].mxu0 %v3379
      %v3815 = vpop.f32.mrb[0].mxu0
      %v3816 = vadd.f32 %v3591, %v3815
      %v3817 = vpop.f32.mrb[0].mxu0
      %3818 = vmatprep.mubr.f32.mxu0 0.0
      %3819 = vmatmul.mubr.f32.gmra.mrb[0].mxu0 %v3382
      %v3820 = vpop.f32.mrb[0].mxu0
      %v3821 = vadd.f32 %v3596, %v3820
      %v3822 = vpop.f32.mrb[0].mxu0
      %3823 = vmatprep.mubr.f32.mxu0 0.0
      %3824 = vmatmul.mubr.f32.gmra.mrb[0].mxu0 %v3385
      %v3825 = vpop.f32.mrb[0].mxu0
      %v3826 = vadd.f32 %v3601, %v3825
      %v3827 = vpop.f32.mrb[0].mxu0
      %3828 = vmatprep.mubr.f32.mxu0 0.0
      %3829 = vmatmul.mubr.f32.gmra.mrb[0].mxu0 %v3388
      %v3830 = vpop.f32.mrb[0].mxu0
      %v3831 = vadd.f32 %v3606, %v3830
      %v3832 = vpop.f32.mrb[0].mxu0
      %3833 = vmatprep.mubr.f32.mxu0 0.0
      %3834 = vmatmul.mubr.f32.gmra.mrb[0].mxu0 %v3391
      %v3835 = vpop.f32.mrb[0].mxu0
      %v3836 = vadd.f32 %v3611, %v3835
      %v3837 = vpop.f32.mrb[0].mxu0
      %3838 = vmatprep.mubr.f32.mxu0 0.0
      %3839 = vmatmul.mubr.f32.gmra.mrb[0].mxu0 %v3394
      %v3840 = vpop.f32.mrb[0].mxu0
      %v3841 = vadd.f32 %v3616, %v3840
      %v3842 = vpop.f32.mrb[0].mxu0
      %3843 = vmatprep.mubr.f32.mxu0 0.0
      %3844 = vmatmul.mubr.f32.gmra.mrb[0].mxu0 %v3397
      %v3845 = vpop.f32.mrb[0].mxu0
      %v3846 = vadd.f32 %v3621, %v3845
      %v3847 = vpop.f32.mrb[0].mxu0
      %3848 = vdwg.mxu0
      %v3849 = vld [vmem:[%s7] sm:$0x1]
      %v3851 = vlaneseq
      %v3852 = vshrl.u32 %v3851, 7
      %v3853 = vsub.s32 0, %v3852
      %v3854 = vrot.slane %v3849, %v3853
      %v3856 = vmul.f32 %v3691, %v3854
      %v3857 = vmul.f32 %v3696, %v3854
      %v3858 = vmul.f32 %v3701, %v3854
      %v3859 = vmul.f32 %v3706, %v3854
      %v3860 = vmul.f32 %v3711, %v3854
      %v3861 = vmul.f32 %v3716, %v3854
      %v3862 = vmul.f32 %v3721, %v3854
      %v3863 = vmul.f32 %v3726, %v3854
      %v3864 = vmul.f32 %v3731, %v3854
      %v3865 = vmul.f32 %v3736, %v3854
      %v3866 = vmul.f32 %v3741, %v3854
      %v3867 = vmul.f32 %v3746, %v3854
      %v3868 = vmul.f32 %v3751, %v3854
      %v3869 = vmul.f32 %v3756, %v3854
      %v3870 = vmul.f32 %v3761, %v3854
      %v3871 = vmul.f32 %v3766, %v3854
      %v3872 = vmul.f32 %v3771, %v3854
      %v3873 = vmul.f32 %v3776, %v3854
      %v3874 = vmul.f32 %v3781, %v3854
      %v3875 = vmul.f32 %v3786, %v3854
      %v3876 = vmul.f32 %v3791, %v3854
      %v3877 = vmul.f32 %v3796, %v3854
      %v3878 = vmul.f32 %v3801, %v3854
      %v3879 = vmul.f32 %v3806, %v3854
      %v3880 = vmul.f32 %v3811, %v3854
      %v3881 = vmul.f32 %v3816, %v3854
      %v3882 = vmul.f32 %v3821, %v3854
      %v3883 = vmul.f32 %v3826, %v3854
      %v3884 = vmul.f32 %v3831, %v3854
      %v3885 = vmul.f32 %v3836, %v3854
      %v3886 = vmul.f32 %v3841, %v3854
      %v3887 = vmul.f32 %v3846, %v3854
      %v3888 = vld [vmem:[%s8] sm:$0x1]
      %v3890 = vlaneseq
      %v3891 = vshrl.u32 %v3890, 7
      %v3892 = vsub.s32 0, %v3891
      %v3893 = vrot.slane %v3888, %v3892
      %v3895 = vadd.f32 %v3856, %v3893
      %v3896 = vadd.f32 %v3857, %v3893
      %v3897 = vadd.f32 %v3858, %v3893
      %v3898 = vadd.f32 %v3859, %v3893
      %v3899 = vadd.f32 %v3860, %v3893
      %v3900 = vadd.f32 %v3861, %v3893
      %v3901 = vadd.f32 %v3862, %v3893
      %v3902 = vadd.f32 %v3863, %v3893
      %v3903 = vadd.f32 %v3864, %v3893
      %v3904 = vadd.f32 %v3865, %v3893
      %v3905 = vadd.f32 %v3866, %v3893
      %v3906 = vadd.f32 %v3867, %v3893
      %v3907 = vadd.f32 %v3868, %v3893
      %v3908 = vadd.f32 %v3869, %v3893
      %v3909 = vadd.f32 %v3870, %v3893
      %v3910 = vadd.f32 %v3871, %v3893
      %v3911 = vadd.f32 %v3872, %v3893
      %v3912 = vadd.f32 %v3873, %v3893
      %v3913 = vadd.f32 %v3874, %v3893
      %v3914 = vadd.f32 %v3875, %v3893
      %v3915 = vadd.f32 %v3876, %v3893
      %v3916 = vadd.f32 %v3877, %v3893
      %v3917 = vadd.f32 %v3878, %v3893
      %v3918 = vadd.f32 %v3879, %v3893
      %v3919 = vadd.f32 %v3880, %v3893
      %v3920 = vadd.f32 %v3881, %v3893
      %v3921 = vadd.f32 %v3882, %v3893
      %v3922 = vadd.f32 %v3883, %v3893
      %v3923 = vadd.f32 %v3884, %v3893
      %v3924 = vadd.f32 %v3885, %v3893
      %v3925 = vadd.f32 %v3886, %v3893
      %v3926 = vadd.f32 %v3887, %v3893
      %v3927 = vmax.f32 %v3895, 0.0
      %v3928 = vmax.f32 %v3896, 0.0
      %v3929 = vmax.f32 %v3897, 0.0
      %v3930 = vmax.f32 %v3898, 0.0
      %v3931 = vmax.f32 %v3899, 0.0
      %v3932 = vmax.f32 %v3900, 0.0
      %v3933 = vmax.f32 %v3901, 0.0
      %v3934 = vmax.f32 %v3902, 0.0
      %v3935 = vmax.f32 %v3903, 0.0
      %v3936 = vmax.f32 %v3904, 0.0
      %v3937 = vmax.f32 %v3905, 0.0
      %v3938 = vmax.f32 %v3906, 0.0
      %v3939 = vmax.f32 %v3907, 0.0
      %v3940 = vmax.f32 %v3908, 0.0
      %v3941 = vmax.f32 %v3909, 0.0
      %v3942 = vmax.f32 %v3910, 0.0
      %v3943 = vmax.f32 %v3911, 0.0
      %v3944 = vmax.f32 %v3912, 0.0
      %v3945 = vmax.f32 %v3913, 0.0
      %v3946 = vmax.f32 %v3914, 0.0
      %v3947 = vmax.f32 %v3915, 0.0
      %v3948 = vmax.f32 %v3916, 0.0
      %v3949 = vmax.f32 %v3917, 0.0
      %v3950 = vmax.f32 %v3918, 0.0
      %v3951 = vmax.f32 %v3919, 0.0
      %v3952 = vmax.f32 %v3920, 0.0
      %v3953 = vmax.f32 %v3921, 0.0
      %v3954 = vmax.f32 %v3922, 0.0
      %v3955 = vmax.f32 %v3923, 0.0
      %v3956 = vmax.f32 %v3924, 0.0
      %v3957 = vmax.f32 %v3925, 0.0
      %v3958 = vmax.f32 %v3926, 0.0
      %v3959 = vld [vmem:[%s9] sm:$0xf]
      %v3960 = vld [vmem:[%s10] sm:$0x1]
      %v3962 = vlaneseq
      %v3963 = vshrl.u32 %v3962, 7
      %v3964 = vsub.s32 0, %v3963
      %v3965 = vrot.slane %v3960, %v3964
      %vm3967 = vcmask 31744
      %v3969 = vsel %vm3967, %v3927, 0
      %v3972 = vsel %vm3967, %v3928, 0
      %v3975 = vsel %vm3967, %v3929, 0
      %v3978 = vsel %vm3967, %v3930, 0
      %v3981 = vsel %vm3967, %v3931, 0
      %v3984 = vsel %vm3967, %v3932, 0
      %v3987 = vsel %vm3967, %v3933, 0
      %v3990 = vsel %vm3967, %v3934, 0
      %v3993 = vsel %vm3967, %v3935, 0
      %v3996 = vsel %vm3967, %v3936, 0
      %v3999 = vsel %vm3967, %v3937, 0
      %v4002 = vsel %vm3967, %v3938, 0
      %v4005 = vsel %vm3967, %v3939, 0
      %v4008 = vsel %vm3967, %v3940, 0
      %v4011 = vsel %vm3967, %v3941, 0
      %v4014 = vsel %vm3967, %v3942, 0
      %v4017 = vsel %vm3967, %v3943, 0
      %v4020 = vsel %vm3967, %v3944, 0
      %v4023 = vsel %vm3967, %v3945, 0
      %v4026 = vsel %vm3967, %v3946, 0
      %v4029 = vsel %vm3967, %v3947, 0
      %v4032 = vsel %vm3967, %v3948, 0
      %v4035 = vsel %vm3967, %v3949, 0
      %v4038 = vsel %vm3967, %v3950, 0
      %v4041 = vsel %vm3967, %v3951, 0
      %v4044 = vsel %vm3967, %v3952, 0
      %v4047 = vsel %vm3967, %v3953, 0
      %v4050 = vsel %vm3967, %v3954, 0
      %v4053 = vsel %vm3967, %v3955, 0
      %v4056 = vsel %vm3967, %v3956, 0
      %v4059 = vsel %vm3967, %v3957, 0
      %v4062 = vsel %vm3967, %v3958, 0
      %vm4064 = vcmask 1043456
      %v4066 = vsel %vm4064, %v3959, 0
      %4068 = vmatprep.subr.mxu0 0.0
      %4069 = vmatpush1.msra.mxu0 %v4066
      %4070 = vmatprep.subr.mxu0 0.0
      %4071 = vmatpush1.msra.mxu0 0.0
      %4072 = vmatprep.subr.mxu0 0.0
      %4073 = vmatpush1.msra.mxu0 0.0
      %4074 = vmatprep.subr.mxu0 0.0
      %4075 = vmatpush1.msra.mxu0 0.0
      %4076 = vmatprep.subr.mxu0 0.0
      %4077 = vmatpush1.msra.mxu0 0.0
      %4078 = vmatprep.subr.mxu0 0.0
      %4079 = vmatpush1.msra.mxu0 0.0
      %4080 = vmatprep.subr.mxu0 0.0
      %4081 = vmatpush1.msra.mxu0 0.0
      %4082 = vmatprep.subr.mxu0 0.0
      %4083 = vmatpush1.msra.mxu0 0.0
      %4084 = vmatprep.subr.mxu0 0.0
      %4085 = vmatpush1.msra.mxu0 0.0
      %4086 = vmatprep.subr.mxu0 0.0
      %4087 = vmatpush1.msra.mxu0 0.0
      %4088 = vmatprep.subr.mxu0 0.0
      %4089 = vmatpush1.msra.mxu0 0.0
      %4090 = vmatprep.subr.mxu0 0.0
      %4091 = vmatpush1.msra.mxu0 0.0
      %4092 = vmatprep.subr.mxu0 0.0
      %4093 = vmatpush1.msra.mxu0 0.0
      %4094 = vmatprep.subr.mxu0 0.0
      %4095 = vmatpush1.msra.mxu0 0.0
      %4096 = vmatprep.subr.mxu0 0.0
      %4097 = vmatpush1.msra.mxu0 0.0
      %4098 = vmatprep.subr.mxu0 0.0
      %4099 = vmatpush1.msra.mxu0 0.0
      %4100 = vmatprep.subr.mxu0 0.0
      %4101 = vmatpush1.msra.mxu0 0.0
      %4102 = vmatprep.subr.mxu0 0.0
      %4103 = vmatpush1.msra.mxu0 0.0
      %4104 = vmatprep.subr.mxu0 0.0
      %4105 = vmatpush1.msra.mxu0 0.0
      %4106 = vmatprep.subr.mxu0 0.0
      %4107 = vmatpush1.msra.mxu0 0.0
      %4108 = vmatprep.subr.mxu0 0.0
      %4109 = vmatpush1.msra.mxu0 0.0
      %4110 = vmatprep.subr.mxu0 0.0
      %4111 = vmatpush1.msra.mxu0 0.0
      %4112 = vmatprep.subr.mxu0 0.0
      %4113 = vmatpush1.msra.mxu0 0.0
      %4114 = vmatprep.subr.mxu0 0.0
      %4115 = vmatpush1.msra.mxu0 0.0
      %4116 = vmatprep.subr.mxu0 0.0
      %4117 = vmatpush1.msra.mxu0 0.0
      %4118 = vmatprep.subr.mxu0 0.0
      %4119 = vmatpush1.msra.mxu0 0.0
      %4120 = vmatprep.subr.mxu0 0.0
      %4121 = vmatpush1.msra.mxu0 0.0
      %4122 = vmatprep.subr.mxu0 0.0
      %4123 = vmatpush1.msra.mxu0 0.0
      %4124 = vmatprep.subr.mxu0 0.0
      %4125 = vmatpush1.msra.mxu0 0.0
      %4126 = vmatprep.subr.mxu0 0.0
      %4127 = vmatpush1.msra.mxu0 0.0
      %4128 = vmatprep.subr.mxu0 0.0
      %4129 = vmatpush1.msra.mxu0 0.0
      %4130 = vmatprep.subr.mxu0 0.0
      %4131 = vmatpush1.msra.mxu0 0.0
      %4132 = vmatprep.mubr.f32.mxu0 0.0
      %4133 = vmatmul.mubr.f32.gmra.mrb[0].mxu0 %v3969
      %v4134 = vpop.f32.mrb[0].mxu0
      %v4135 = vadd.f32 %v3965, %v4134
      %v4136 = vpop.f32.mrb[0].mxu0
      %4137 = vmatprep.mubr.f32.mxu0 0.0
      %4138 = vmatmul.mubr.f32.gmra.mrb[0].mxu0 %v3972
      %v4139 = vpop.f32.mrb[0].mxu0
      %v4140 = vadd.f32 %v3965, %v4139
      %v4141 = vpop.f32.mrb[0].mxu0
      %4142 = vmatprep.mubr.f32.mxu0 0.0
      %4143 = vmatmul.mubr.f32.gmra.mrb[0].mxu0 %v3975
      %v4144 = vpop.f32.mrb[0].mxu0
      %v4145 = vadd.f32 %v3965, %v4144
      %v4146 = vpop.f32.mrb[0].mxu0
      %4147 = vmatprep.mubr.f32.mxu0 0.0
      %4148 = vmatmul.mubr.f32.gmra.mrb[0].mxu0 %v3978
      %v4149 = vpop.f32.mrb[0].mxu0
      %v4150 = vadd.f32 %v3965, %v4149
      %v4151 = vpop.f32.mrb[0].mxu0
      %4152 = vmatprep.mubr.f32.mxu0 0.0
      %4153 = vmatmul.mubr.f32.gmra.mrb[0].mxu0 %v3981
      %v4154 = vpop.f32.mrb[0].mxu0
      %v4155 = vadd.f32 %v3965, %v4154
      %v4156 = vpop.f32.mrb[0].mxu0
      %4157 = vmatprep.mubr.f32.mxu0 0.0
      %4158 = vmatmul.mubr.f32.gmra.mrb[0].mxu0 %v3984
      %v4159 = vpop.f32.mrb[0].mxu0
      %v4160 = vadd.f32 %v3965, %v4159
      %v4161 = vpop.f32.mrb[0].mxu0
      %4162 = vmatprep.mubr.f32.mxu0 0.0
      %4163 = vmatmul.mubr.f32.gmra.mrb[0].mxu0 %v3987
      %v4164 = vpop.f32.mrb[0].mxu0
      %v4165 = vadd.f32 %v3965, %v4164
      %v4166 = vpop.f32.mrb[0].mxu0
      %4167 = vmatprep.mubr.f32.mxu0 0.0
      %4168 = vmatmul.mubr.f32.gmra.mrb[0].mxu0 %v3990
      %v4169 = vpop.f32.mrb[0].mxu0
      %v4170 = vadd.f32 %v3965, %v4169
      %v4171 = vpop.f32.mrb[0].mxu0
      %4172 = vmatprep.mubr.f32.mxu0 0.0
      %4173 = vmatmul.mubr.f32.gmra.mrb[0].mxu0 %v3993
      %v4174 = vpop.f32.mrb[0].mxu0
      %v4175 = vadd.f32 %v3965, %v4174
      %v4176 = vpop.f32.mrb[0].mxu0
      %4177 = vmatprep.mubr.f32.mxu0 0.0
      %4178 = vmatmul.mubr.f32.gmra.mrb[0].mxu0 %v3996
      %v4179 = vpop.f32.mrb[0].mxu0
      %v4180 = vadd.f32 %v3965, %v4179
      %v4181 = vpop.f32.mrb[0].mxu0
      %4182 = vmatprep.mubr.f32.mxu0 0.0
      %4183 = vmatmul.mubr.f32.gmra.mrb[0].mxu0 %v3999
      %v4184 = vpop.f32.mrb[0].mxu0
      %v4185 = vadd.f32 %v3965, %v4184
      %v4186 = vpop.f32.mrb[0].mxu0
      %4187 = vmatprep.mubr.f32.mxu0 0.0
      %4188 = vmatmul.mubr.f32.gmra.mrb[0].mxu0 %v4002
      %v4189 = vpop.f32.mrb[0].mxu0
      %v4190 = vadd.f32 %v3965, %v4189
      %v4191 = vpop.f32.mrb[0].mxu0
      %4192 = vmatprep.mubr.f32.mxu0 0.0
      %4193 = vmatmul.mubr.f32.gmra.mrb[0].mxu0 %v4005
      %v4194 = vpop.f32.mrb[0].mxu0
      %v4195 = vadd.f32 %v3965, %v4194
      %v4196 = vpop.f32.mrb[0].mxu0
      %4197 = vmatprep.mubr.f32.mxu0 0.0
      %4198 = vmatmul.mubr.f32.gmra.mrb[0].mxu0 %v4008
      %v4199 = vpop.f32.mrb[0].mxu0
      %v4200 = vadd.f32 %v3965, %v4199
      %v4201 = vpop.f32.mrb[0].mxu0
      %4202 = vmatprep.mubr.f32.mxu0 0.0
      %4203 = vmatmul.mubr.f32.gmra.mrb[0].mxu0 %v4011
      %v4204 = vpop.f32.mrb[0].mxu0
      %v4205 = vadd.f32 %v3965, %v4204
      %v4206 = vpop.f32.mrb[0].mxu0
      %4207 = vmatprep.mubr.f32.mxu0 0.0
      %4208 = vmatmul.mubr.f32.gmra.mrb[0].mxu0 %v4014
      %v4209 = vpop.f32.mrb[0].mxu0
      %v4210 = vadd.f32 %v3965, %v4209
      %v4211 = vpop.f32.mrb[0].mxu0
      %4212 = vmatprep.mubr.f32.mxu0 0.0
      %4213 = vmatmul.mubr.f32.gmra.mrb[0].mxu0 %v4017
      %v4214 = vpop.f32.mrb[0].mxu0
      %v4215 = vadd.f32 %v3965, %v4214
      %v4216 = vpop.f32.mrb[0].mxu0
      %4217 = vmatprep.mubr.f32.mxu0 0.0
      %4218 = vmatmul.mubr.f32.gmra.mrb[0].mxu0 %v4020
      %v4219 = vpop.f32.mrb[0].mxu0
      %v4220 = vadd.f32 %v3965, %v4219
      %v4221 = vpop.f32.mrb[0].mxu0
      %4222 = vmatprep.mubr.f32.mxu0 0.0
      %4223 = vmatmul.mubr.f32.gmra.mrb[0].mxu0 %v4023
      %v4224 = vpop.f32.mrb[0].mxu0
      %v4225 = vadd.f32 %v3965, %v4224
      %v4226 = vpop.f32.mrb[0].mxu0
      %4227 = vmatprep.mubr.f32.mxu0 0.0
      %4228 = vmatmul.mubr.f32.gmra.mrb[0].mxu0 %v4026
      %v4229 = vpop.f32.mrb[0].mxu0
      %v4230 = vadd.f32 %v3965, %v4229
      %v4231 = vpop.f32.mrb[0].mxu0
      %4232 = vmatprep.mubr.f32.mxu0 0.0
      %4233 = vmatmul.mubr.f32.gmra.mrb[0].mxu0 %v4029
      %v4234 = vpop.f32.mrb[0].mxu0
      %v4235 = vadd.f32 %v3965, %v4234
      %v4236 = vpop.f32.mrb[0].mxu0
      %4237 = vmatprep.mubr.f32.mxu0 0.0
      %4238 = vmatmul.mubr.f32.gmra.mrb[0].mxu0 %v4032
      %v4239 = vpop.f32.mrb[0].mxu0
      %v4240 = vadd.f32 %v3965, %v4239
      %v4241 = vpop.f32.mrb[0].mxu0
      %4242 = vmatprep.mubr.f32.mxu0 0.0
      %4243 = vmatmul.mubr.f32.gmra.mrb[0].mxu0 %v4035
      %v4244 = vpop.f32.mrb[0].mxu0
      %v4245 = vadd.f32 %v3965, %v4244
      %v4246 = vpop.f32.mrb[0].mxu0
      %4247 = vmatprep.mubr.f32.mxu0 0.0
      %4248 = vmatmul.mubr.f32.gmra.mrb[0].mxu0 %v4038
      %v4249 = vpop.f32.mrb[0].mxu0
      %v4250 = vadd.f32 %v3965, %v4249
      %v4251 = vpop.f32.mrb[0].mxu0
      %4252 = vmatprep.mubr.f32.mxu0 0.0
      %4253 = vmatmul.mubr.f32.gmra.mrb[0].mxu0 %v4041
      %v4254 = vpop.f32.mrb[0].mxu0
      %v4255 = vadd.f32 %v3965, %v4254
      %v4256 = vpop.f32.mrb[0].mxu0
      %4257 = vmatprep.mubr.f32.mxu0 0.0
      %4258 = vmatmul.mubr.f32.gmra.mrb[0].mxu0 %v4044
      %v4259 = vpop.f32.mrb[0].mxu0
      %v4260 = vadd.f32 %v3965, %v4259
      %v4261 = vpop.f32.mrb[0].mxu0
      %4262 = vmatprep.mubr.f32.mxu0 0.0
      %4263 = vmatmul.mubr.f32.gmra.mrb[0].mxu0 %v4047
      %v4264 = vpop.f32.mrb[0].mxu0
      %v4265 = vadd.f32 %v3965, %v4264
      %v4266 = vpop.f32.mrb[0].mxu0
      %4267 = vmatprep.mubr.f32.mxu0 0.0
      %4268 = vmatmul.mubr.f32.gmra.mrb[0].mxu0 %v4050
      %v4269 = vpop.f32.mrb[0].mxu0
      %v4270 = vadd.f32 %v3965, %v4269
      %v4271 = vpop.f32.mrb[0].mxu0
      %4272 = vmatprep.mubr.f32.mxu0 0.0
      %4273 = vmatmul.mubr.f32.gmra.mrb[0].mxu0 %v4053
      %v4274 = vpop.f32.mrb[0].mxu0
      %v4275 = vadd.f32 %v3965, %v4274
      %v4276 = vpop.f32.mrb[0].mxu0
      %4277 = vmatprep.mubr.f32.mxu0 0.0
      %4278 = vmatmul.mubr.f32.gmra.mrb[0].mxu0 %v4056
      %v4279 = vpop.f32.mrb[0].mxu0
      %v4280 = vadd.f32 %v3965, %v4279
      %v4281 = vpop.f32.mrb[0].mxu0
      %4282 = vmatprep.mubr.f32.mxu0 0.0
      %4283 = vmatmul.mubr.f32.gmra.mrb[0].mxu0 %v4059
      %v4284 = vpop.f32.mrb[0].mxu0
      %v4285 = vadd.f32 %v3965, %v4284
      %v4286 = vpop.f32.mrb[0].mxu0
      %4287 = vmatprep.mubr.f32.mxu0 0.0
      %4288 = vmatmul.mubr.f32.gmra.mrb[0].mxu0 %v4062
      %v4289 = vpop.f32.mrb[0].mxu0
      %v4290 = vadd.f32 %v3965, %v4289
      %v4291 = vpop.f32.mrb[0].mxu0
      %4292 = vdwg.mxu0
      %vm4293 = vcmask 64512
      %4294 = vst.msk [vmem:[%s716] sm:$0xff] %vm4293, %v4135
      %4295 = vst.msk [vmem:[%s716 + $0x8] sm:$0xff] %vm4293, %v4140
      %4296 = vst.msk [vmem:[%s716 + $0x10] sm:$0xff] %vm4293, %v4145
      %4297 = vst.msk [vmem:[%s716 + $0x18] sm:$0xff] %vm4293, %v4150
      %4298 = vst.msk [vmem:[%s716 + $0x20] sm:$0xff] %vm4293, %v4155
      %4299 = vst.msk [vmem:[%s716 + $0x28] sm:$0xff] %vm4293, %v4160
      %4300 = vst.msk [vmem:[%s716 + $0x30] sm:$0xff] %vm4293, %v4165
      %4301 = vst.msk [vmem:[%s716 + $0x38] sm:$0xff] %vm4293, %v4170
      %4302 = vst.msk [vmem:[%s716 + $0x40] sm:$0xff] %vm4293, %v4175
      %4303 = vst.msk [vmem:[%s716 + $0x48] sm:$0xff] %vm4293, %v4180
      %4304 = vst.msk [vmem:[%s716 + $0x50] sm:$0xff] %vm4293, %v4185
      %4305 = vst.msk [vmem:[%s716 + $0x58] sm:$0xff] %vm4293, %v4190
      %4306 = vst.msk [vmem:[%s716 + $0x60] sm:$0xff] %vm4293, %v4195
      %4307 = vst.msk [vmem:[%s716 + $0x68] sm:$0xff] %vm4293, %v4200
      %4308 = vst.msk [vmem:[%s716 + $0x70] sm:$0xff] %vm4293, %v4205
      %4309 = vst.msk [vmem:[%s716 + $0x78] sm:$0xff] %vm4293, %v4210
      %4310 = vst.msk [vmem:[%s716 + $0x80] sm:$0xff] %vm4293, %v4215
      %4311 = vst.msk [vmem:[%s716 + $0x88] sm:$0xff] %vm4293, %v4220
      %4312 = vst.msk [vmem:[%s716 + $0x90] sm:$0xff] %vm4293, %v4225
      %4313 = vst.msk [vmem:[%s716 + $0x98] sm:$0xff] %vm4293, %v4230
      %4314 = vst.msk [vmem:[%s716 + $0xa0] sm:$0xff] %vm4293, %v4235
      %4315 = vst.msk [vmem:[%s716 + $0xa8] sm:$0xff] %vm4293, %v4240
      %4316 = vst.msk [vmem:[%s716 + $0xb0] sm:$0xff] %vm4293, %v4245
      %4317 = vst.msk [vmem:[%s716 + $0xb8] sm:$0xff] %vm4293, %v4250
      %4318 = vst.msk [vmem:[%s716 + $0xc0] sm:$0xff] %vm4293, %v4255
      %4319 = vst.msk [vmem:[%s716 + $0xc8] sm:$0xff] %vm4293, %v4260
      %4320 = vst.msk [vmem:[%s716 + $0xd0] sm:$0xff] %vm4293, %v4265
      %4321 = vst.msk [vmem:[%s716 + $0xd8] sm:$0xff] %vm4293, %v4270
      %4322 = vst.msk [vmem:[%s716 + $0xe0] sm:$0xff] %vm4293, %v4275
      %4323 = vst.msk [vmem:[%s716 + $0xe8] sm:$0xff] %vm4293, %v4280
      %4324 = vst.msk [vmem:[%s716 + $0xf0] sm:$0xff] %vm4293, %v4285
      %4325 = vst.msk [vmem:[%s716 + $0xf8] sm:$0xff] %vm4293, %v4290
      %s4326 = smul.u32 16, %s27
      %p4327 = scmp.lt.s32.totalorder %s26, 1
      %s4328 = scalar_select %p4327, %s26, 1
      %p4329 = scmp.lt.s32.totalorder %s4326, 15
      %s4330 = scalar_select %p4329, %s4326, 15
      %s4331 = smul.addr %s4330, 2
      %s4332 = smul.addr %s4328, 32
      %s4333 = sadd.s32 %s4331, %s4332
      %s4334 = smul.addr %s4333, 8
      %s4335 = scalar_lea.vmem %s11, %s4334
      // Predicated region
      $region65: #{psp_head_forward.1} parent=63 // pred_check
        %p4336 = pneg %p359
      $region66: #{psp_head_forward.1} parent=63 // pred_check_branch
        %4338 = sbr.rel (%p4336) target = $region68
      $region67: #{psp_head_forward.1} parent=63 // pred_region
        %s4339 = smul.u32 16, %s27
      $region68: #{psp_head_forward.1} parent=63 // pred_fallthru
        _
    $region64: #{psp_head_forward.1} parent=5 // pred_fallthru
      _
    %p4340 = scmp.le.s32.totalorder 2, %s17
    // Predicated region
    $region69: #{psp_head_forward.1} parent=5 // pred_check
      %p4341 = pneg %p4340
    $region70: #{psp_head_forward.1} parent=5 // pred_check_branch
      %4343 = sbr.rel (%p4341) target = $region72
    $region71: #{psp_head_forward.1} parent=5 // pred_region
      %s4344 = ssub.s32 %s17, 2
      // Predicated region
      $region73: #{psp_head_forward.1} parent=71 // pred_check
        %p4345 = pneg %p365
      $region74: #{psp_head_forward.1} parent=71 // pred_check_branch
        %4347 = sbr.rel (%p4345) target = $region76
      $region75: #{psp_head_forward.1} parent=71 // pred_region
        %s4348 = smul.u32 16, %s29
        %p4349 = scmp.lt.s32.totalorder %s28, 1
        %s4350 = scalar_select %p4349, %s28, 1
        %p4351 = scmp.lt.s32.totalorder %s4348, 15
        %s4352 = scalar_select %p4351, %s4348, 15
        %s4353 = smul.addr %s4352, 2
        %s4354 = smul.addr %s4350, 32
        %s4355 = sadd.s32 %s4353, %s4354
        %s4356 = smul.addr %s4355, 8
        %s4357 = scalar_lea.vmem %s11, %s4356
      $region76: #{psp_head_forward.1} parent=71 // pred_fallthru
        _
    $region72: #{psp_head_forward.1} parent=5 // pred_fallthru
      _
  $region6: #{psp_head_forward.1} parent=0 // loop_footer
    %s21 = sadd.s32 1, %s17
  $region7: #{psp_head_forward.1} parent=0 // loop_footer_branch
    %16 = sbr.rel target = $region3
  $region8: #{psp_head_forward.1} parent=0 // loop_exit
    _

</llo_original>
